<compile_context>
chip_gen: v5e
topology: v5e:2x2
jax: 0.10.0
libtpu: 0.0.40
codegen_flags: <defaults>
</compile_context>

<pallas_src>
import jax
import jax.numpy as jnp
from jax.experimental import pallas as pl
from jax.experimental.pallas import tpu as pltpu

HIDDEN = 128
NUM_LAYERS = 3
HEAD_DIM = 16


# ------------------------------ fused kernel ---------------------------------
def _fused_lstm_kernel(x_ref,
                       wih0_ref, whh0_ref, b0_ref,
                       w1_ref, b1_ref,
                       w2_ref, b2_ref,
                       hw_ref, hb_ref,
                       out_ref,
                       gproj_scr):
    """x_ref: (T*Bp, D) bf16 time-major-flattened input; out_ref: (Bp, 1) f32."""
    Bp = out_ref.shape[0]
    H = HIDDEN
    T = gproj_scr.shape[0] // Bp
    mm = whh0_ref.dtype                         # bf16 MXU operand dtype

    # Layer-0 input projection hoisted over the WHOLE sequence: one big
    # (T*Bp, D) x (D, 4H) matmul; bias broadcast folded in once.
    gproj_scr[...] = (
        jnp.dot(x_ref[...], wih0_ref[...], preferred_element_type=jnp.float32)
        + b0_ref[...])

    # Weights loaded and biases broadcast once, outside the unrolled loop
    # (JAX does not CSE broadcast_in_dim).
    whh0 = whh0_ref[...]                        # (H, 4H)   bf16
    w1 = w1_ref[...]                            # (2H, 4H)  bf16 fused [Wih;Whh]
    w2 = w2_ref[...]                            # (2H, 4H)  bf16 fused [Wih;Whh]
    b1 = jnp.broadcast_to(b1_ref[...], (Bp, 4 * H))
    b2 = jnp.broadcast_to(b2_ref[...], (Bp, 4 * H))

    def cell(gates, c):
        # PyTorch gate order [i, f, g, o]; all elementwise math in f32.
        i_g = jax.nn.sigmoid(gates[:, 0 * H:1 * H])
        f_g = jax.nn.sigmoid(gates[:, 1 * H:2 * H])
        g_g = jnp.tanh(gates[:, 2 * H:3 * H])
        o_g = jax.nn.sigmoid(gates[:, 3 * H:4 * H])
        c_new = f_g * c + i_g * g_g
        h_new = o_g * jnp.tanh(c_new)
        return h_new, c_new

    zeros = jnp.zeros((Bp, H), jnp.float32)
    h0, c0, h1, c1, h2, c2 = zeros, zeros, zeros, zeros, zeros, zeros
    d0, d1 = zeros, zeros       # layer-0 / layer-1 outputs delayed one macro-step

    # Wavefront over time: at macro-step s, layer 0 runs time step s, layer 1
    # runs s-1, layer 2 runs s-2.  Within a macro-step the three chains are
    # data-independent, so the LLO scheduler can interleave their MXU pushes,
    # MRF pops and EUP sigmoid/tanh work.  Fully unrolled (small fixed T).
    # TODO(synk): hold whh0/w1/w2 resident in MXU staging registers via
    #             pltpu.matmul_push_rhs/acc_lhs/pop if the bundle dump shows
    #             Mosaic re-pushing the RHS each step.
    for s in range(T + NUM_LAYERS - 1):
        t0, t1, t2 = s, s - 1, s - 2
        nh0, nc0, nh1, nc1, nh2, nc2 = h0, c0, h1, c1, h2, c2
        nd0, nd1 = d0, d1
        if 0 <= t0 < T:
            # Only the K=128 recurrent matmul is on layer 0's serial path.
            g0 = gproj_scr[pl.ds(t0 * Bp, Bp), :] + jnp.dot(
                h0.astype(mm), whh0, preferred_element_type=jnp.float32)
            nh0, nc0 = cell(g0, c0)
            nd0 = nh0
        if 0 <= t1 < T:
            # Fused K=256 input+recurrent projection: [x_below, h_prev] @ W.
            xin = jnp.concatenate([d0, h1], axis=1).astype(mm)
            g1 = jnp.dot(xin, w1, preferred_element_type=jnp.float32) + b1
            nh1, nc1 = cell(g1, c1)
            nd1 = nh1
        if 0 <= t2 < T:
            xin = jnp.concatenate([d1, h2], axis=1).astype(mm)
            g2 = jnp.dot(xin, w2, preferred_element_type=jnp.float32) + b2
            nh2, nc2 = cell(g2, c2)
        h0, c0, h1, c1, h2, c2 = nh0, nc0, nh1, nc1, nh2, nc2
        d0, d1 = nd0, nd1

    # Folded head: Linear(128,16) -> Linear(16,1) == single (128, 1) matvec
    # (exact: no nonlinearity between the two Linears).
    y = jnp.dot(h2, hw_ref[...], preferred_element_type=jnp.float32) + hb_ref[...]
    out_ref[...] = y.astype(out_ref.dtype)


def _vmem_limit_bytes(T, Bp, D):
    """Explicit scoped-VMEM budget sized from the actual resident footprint."""
    f32, bf16 = 4, 2
    h4 = 4 * HIDDEN
    b = T * Bp * D * bf16                         # input sequence
    b += T * Bp * h4 * f32                        # layer-0 gproj scratch
    b += D * h4 * bf16 + HIDDEN * h4 * bf16       # layer-0 weights
    b += 2 * (2 * HIDDEN) * h4 * bf16             # fused layer-1/2 weights
    b += 3 * h4 * f32                             # biases
    b += (HIDDEN + 1) * f32 + Bp * f32            # folded head + output
    # 2x for I/O buffering + headroom for Mosaic internal scratch; never
    # request less than the platform default and cap below v7x physical VMEM.
    return int(min(max(2 * b + (8 << 20), 32 << 20), 64 << 20))


def _fused_lstm_call(x_flat, params, T, Bp):
    """x_flat: (T*Bp, D) bf16.  Returns (Bp, 1) f32 predictions."""
    lp0, lp1, lp2 = params["lstm"]
    D = x_flat.shape[1]
    return pl.pallas_call(
        _fused_lstm_kernel,
        out_shape=jax.ShapeDtypeStruct((Bp, 1), jnp.float32),
        scratch_shapes=[
            pltpu.VMEM((T * Bp, 4 * HIDDEN), jnp.float32),   # layer-0 gproj
        ],
        compiler_params=pltpu.CompilerParams(
            vmem_limit_bytes=_vmem_limit_bytes(T, Bp, D)),
    )(x_flat,
      lp0["w_ih_t"], lp0["w_hh_t"], lp0["b"],
      lp1["w_fused"], lp1["b"],
      lp2["w_fused"], lp2["b"],
      params["head_w"], params["head_b"])


# ------------------------------ parameter init --------------------------------
def init_params(key, dimension):
    """Uniform(-1/sqrt(fan), 1/sqrt(fan)) init matching PyTorch shapes.

    LSTM weight matrices are stored pre-transposed in bf16 (MXU operands);
    for layers 1-2 the input/recurrent matrices are packed into one (2H, 4H)
    matrix.  The two head Linears are folded into a single (128, 1) weight.
    """
    params = {"lstm": []}
    k_lstm = 1.0 / (HIDDEN ** 0.5)

    def unif(key, shape, bound):
        return jax.random.uniform(key, shape, jnp.float32, -bound, bound)

    for layer in range(NUM_LAYERS):
        d_in = dimension if layer == 0 else HIDDEN
        key, k1, k2, k3, k4 = jax.random.split(key, 5)
        w_ih = unif(k1, (4 * HIDDEN, d_in), k_lstm)     # PyTorch weight_ih_l{l}
        w_hh = unif(k2, (4 * HIDDEN, HIDDEN), k_lstm)   # PyTorch weight_hh_l{l}
        b_ih = unif(k3, (4 * HIDDEN,), k_lstm)
        b_hh = unif(k4, (4 * HIDDEN,), k_lstm)
        b = (b_ih + b_hh).reshape(1, 4 * HIDDEN)        # (1, 4H) f32
        if layer == 0:
            params["lstm"].append({
                "w_ih_t": jnp.transpose(w_ih).astype(jnp.bfloat16),   # (D, 4H)
                "w_hh_t": jnp.transpose(w_hh).astype(jnp.bfloat16),   # (H, 4H)
                "b": b,
            })
        else:
            # Fused [W_ih ; W_hh] so per-step gates are one K=256 matmul on
            # the concatenated [x_below, h_prev] tile.
            w_cat = jnp.concatenate([w_ih, w_hh], axis=1)             # (4H, 2H)
            params["lstm"].append({
                "w_fused": jnp.transpose(w_cat).astype(jnp.bfloat16),  # (2H, 4H)
                "b": b,
            })

    key, k1, k2, k3, k4 = jax.random.split(key, 5)
    k_l1 = 1.0 / (HIDDEN ** 0.5)
    k_l2 = 1.0 / (HEAD_DIM ** 0.5)
    w1 = unif(k1, (HEAD_DIM, HIDDEN), k_l1)     # PyTorch linear1.weight (16,128)
    b1 = unif(k2, (HEAD_DIM,), k_l1)
    w2 = unif(k3, (1, HEAD_DIM), k_l2)          # PyTorch linear2.weight (1,16)
    b2 = unif(k4, (1,), k_l2)
    # Exact offline fold of the two Linears (no activation between them):
    #   y = (h @ W1^T + b1) @ W2^T + b2 = h @ (W1^T @ W2^T) + (b1 @ W2^T + b2)
    w_fold = jnp.transpose(w1) @ jnp.transpose(w2)          # (128, 1)
    b_fold = (b1 @ jnp.transpose(w2) + b2).reshape(1, 1)    # (1, 1)
    params["head_w"] = w_fold.astype(jnp.float32)
    params["head_b"] = b_fold.astype(jnp.float32)
    return params


# -------------------------------- forward pass ---------------------------------
@jax.jit
def lstm_model_forward(x_bsd, params):
    """x_bsd: (batch, seq, dim) float32  ->  (batch, 1) float32."""
    B, T, D = x_bsd.shape
    Bp = max(8, ((B + 7) // 8) * 8)                 # pad batch to full sublanes
    x_tbd = jnp.transpose(x_bsd, (1, 0, 2))         # (T, B, D) time-major
    x_tbd = jnp.pad(x_tbd, ((0, 0), (0, Bp - B), (0, 0)))
    x_flat = x_tbd.reshape(T * Bp, D).astype(jnp.bfloat16)   # MXU operand dtype
    out_p = _fused_lstm_call(x_flat, params, T, Bp)  # (Bp, 1)
    return out_p[:B]


if __name__ == "__main__":
    batch, seq, dimension = 4, 8, 16

    key = jax.random.PRNGKey(0)
    key, pkey, xkey = jax.random.split(key, 3)
    params = init_params(pkey, dimension)
    x = jax.random.normal(xkey, (batch, seq, dimension), jnp.float32)

    out = lstm_model_forward(x, params)
    jax.block_until_ready(out)
    assert out.shape == (batch, 1)
    assert bool(jnp.all(jnp.isfinite(out)))
    print("KERNEL_OK")
</pallas_src>

<mosaic_0001>
module attributes {stable_mosaic.version = 11 : i64} {
  func.func @_fused_lstm_kernel(%arg0: memref<64x16xbf16, #tpu.memory_space<vmem>>, %arg1: memref<16x512xbf16, #tpu.memory_space<vmem>>, %arg2: memref<128x512xbf16, #tpu.memory_space<vmem>>, %arg3: memref<1x512xf32, #tpu.memory_space<vmem>>, %arg4: memref<256x512xbf16, #tpu.memory_space<vmem>>, %arg5: memref<1x512xf32, #tpu.memory_space<vmem>>, %arg6: memref<256x512xbf16, #tpu.memory_space<vmem>>, %arg7: memref<1x512xf32, #tpu.memory_space<vmem>>, %arg8: memref<128x1xf32, #tpu.memory_space<vmem>>, %arg9: memref<1x1xf32, #tpu.memory_space<vmem>>, %arg10: memref<8x1xf32, #tpu.memory_space<vmem>>, %arg11: memref<64x512xf32, #tpu.memory_space<vmem>>) attributes {dimension_semantics = [], scalar_prefetch = 0 : i64, scratch_operands = 1 : i64, tpu.core_type = #tpu.core_type<tc>} {
    %c0 = arith.constant 0 : index
    %c0_0 = arith.constant 0 : index
    %0 = vector.load %arg0[%c0, %c0_0] : memref<64x16xbf16, #tpu.memory_space<vmem>>, vector<64x16xbf16>
    %c0_1 = arith.constant 0 : index
    %c0_2 = arith.constant 0 : index
    %1 = vector.load %arg1[%c0_1, %c0_2] : memref<16x512xbf16, #tpu.memory_space<vmem>>, vector<16x512xbf16>
    %cst = arith.constant dense<0.000000e+00> : vector<64x512xf32>
    %2 = tpu.matmul %0, %1, %cst {dimension_numbers = #tpu.dot_dimension_numbers<[1], [0], [0], [1], [0, 0, 1, 1], [], []>} : vector<64x16xbf16>, vector<16x512xbf16>, vector<64x512xf32> -> vector<64x512xf32>
    %c0_3 = arith.constant 0 : index
    %c0_4 = arith.constant 0 : index
    %3 = vector.load %arg3[%c0_3, %c0_4] : memref<1x512xf32, #tpu.memory_space<vmem>>, vector<1x512xf32>
    %4 = vector.broadcast %3 : vector<1x512xf32> to vector<64x512xf32>
    %5 = arith.addf %2, %4 : vector<64x512xf32>
    %c0_5 = arith.constant 0 : index
    %c0_6 = arith.constant 0 : index
    %6 = vector.load %arg11[%c0_5, %c0_6] : memref<64x512xf32, #tpu.memory_space<vmem>>, vector<64x512xf32>
    tpu.vector_store %arg11[%c0_5, %c0_6], %5 {strides = array<i32>} : memref<64x512xf32, #tpu.memory_space<vmem>>, vector<64x512xf32>,
    %c0_7 = arith.constant 0 : index
    %c0_8 = arith.constant 0 : index
    %7 = vector.load %arg2[%c0_7, %c0_8] : memref<128x512xbf16, #tpu.memory_space<vmem>>, vector<128x512xbf16>
    %c0_9 = arith.constant 0 : index
    %c0_10 = arith.constant 0 : index
    %8 = vector.load %arg4[%c0_9, %c0_10] : memref<256x512xbf16, #tpu.memory_space<vmem>>, vector<256x512xbf16>
    %c0_11 = arith.constant 0 : index
    %c0_12 = arith.constant 0 : index
    %9 = vector.load %arg6[%c0_11, %c0_12] : memref<256x512xbf16, #tpu.memory_space<vmem>>, vector<256x512xbf16>
    %c0_13 = arith.constant 0 : index
    %c0_14 = arith.constant 0 : index
    %10 = vector.load %arg5[%c0_13, %c0_14] : memref<1x512xf32, #tpu.memory_space<vmem>>, vector<1x512xf32>
    %11 = vector.shape_cast %10 : vector<1x512xf32> to vector<1x512xf32>
    %12 = vector.broadcast %11 : vector<1x512xf32> to vector<8x512xf32>
    %c0_15 = arith.constant 0 : index
    %c0_16 = arith.constant 0 : index
    %13 = vector.load %arg7[%c0_15, %c0_16] : memref<1x512xf32, #tpu.memory_space<vmem>>, vector<1x512xf32>
    %14 = vector.shape_cast %13 : vector<1x512xf32> to vector<1x512xf32>
    %15 = vector.broadcast %14 : vector<1x512xf32> to vector<8x512xf32>
    %cst_17 = arith.constant 0.000000e+00 : f32
    %16 = vector.broadcast %cst_17 : f32 to vector<8x128xf32>
    %c0_18 = arith.constant 0 : index
    %c0_19 = arith.constant 0 : index
    %17 = vector.load %arg11[%c0_18, %c0_19] : memref<64x512xf32, #tpu.memory_space<vmem>>, vector<8x512xf32>
    %18 = arith.truncf %16 : vector<8x128xf32> to vector<8x128xbf16>
    %cst_20 = arith.constant dense<0.000000e+00> : vector<8x512xf32>
    %19 = tpu.matmul %18, %7, %cst_20 {dimension_numbers = #tpu.dot_dimension_numbers<[1], [0], [0], [1], [0, 0, 1, 1], [], []>} : vector<8x128xbf16>, vector<128x512xbf16>, vector<8x512xf32> -> vector<8x512xf32>
    %20 = arith.addf %17, %19 : vector<8x512xf32>
    %21 = vector.extract_strided_slice %20 {offsets = [0, 0], sizes = [8, 128], strides = [1, 1]} : vector<8x512xf32> to vector<8x128xf32>
    %22 = arith.negf %21 : vector<8x128xf32>
    %23 = math.exp %22 : vector<8x128xf32>
    %cst_21 = arith.constant 1.000000e+00 : f32
    %24 = vector.broadcast %cst_21 : f32 to vector<8x128xf32>
    %25 = arith.addf %24, %23 : vector<8x128xf32>
    %26 = arith.divf %24, %25 : vector<8x128xf32>
    %27 = vector.extract_strided_slice %20 {offsets = [0, 128], sizes = [8, 128], strides = [1, 1]} : vector<8x512xf32> to vector<8x128xf32>
    %28 = arith.negf %27 : vector<8x128xf32>
    %29 = math.exp %28 : vector<8x128xf32>
    %cst_22 = arith.constant 1.000000e+00 : f32
    %30 = vector.broadcast %cst_22 : f32 to vector<8x128xf32>
    %31 = arith.addf %30, %29 : vector<8x128xf32>
    %32 = arith.divf %30, %31 : vector<8x128xf32>
    %33 = vector.extract_strided_slice %20 {offsets = [0, 256], sizes = [8, 128], strides = [1, 1]} : vector<8x512xf32> to vector<8x128xf32>
    %34 = math.tanh %33 : vector<8x128xf32>
    %35 = vector.extract_strided_slice %20 {offsets = [0, 384], sizes = [8, 128], strides = [1, 1]} : vector<8x512xf32> to vector<8x128xf32>
    %36 = arith.negf %35 : vector<8x128xf32>
    %37 = math.exp %36 : vector<8x128xf32>
    %cst_23 = arith.constant 1.000000e+00 : f32
    %38 = vector.broadcast %cst_23 : f32 to vector<8x128xf32>
    %39 = arith.addf %38, %37 : vector<8x128xf32>
    %40 = arith.divf %38, %39 : vector<8x128xf32>
    %41 = arith.mulf %32, %16 : vector<8x128xf32>
    %42 = arith.mulf %26, %34 : vector<8x128xf32>
    %43 = arith.addf %41, %42 : vector<8x128xf32>
    %44 = math.tanh %43 : vector<8x128xf32>
    %45 = arith.mulf %40, %44 : vector<8x128xf32>
    %c8 = arith.constant 8 : index
    %c0_24 = arith.constant 0 : index
    %46 = vector.load %arg11[%c8, %c0_24] : memref<64x512xf32, #tpu.memory_space<vmem>>, vector<8x512xf32>
    %47 = arith.truncf %45 : vector<8x128xf32> to vector<8x128xbf16>
    %cst_25 = arith.constant dense<0.000000e+00> : vector<8x512xf32>
    %48 = tpu.matmul %47, %7, %cst_25 {dimension_numbers = #tpu.dot_dimension_numbers<[1], [0], [0], [1], [0, 0, 1, 1], [], []>} : vector<8x128xbf16>, vector<128x512xbf16>, vector<8x512xf32> -> vector<8x512xf32>
    %49 = arith.addf %46, %48 : vector<8x512xf32>
    %50 = vector.extract_strided_slice %49 {offsets = [0, 0], sizes = [8, 128], strides = [1, 1]} : vector<8x512xf32> to vector<8x128xf32>
    %51 = arith.negf %50 : vector<8x128xf32>
    %52 = math.exp %51 : vector<8x128xf32>
    %cst_26 = arith.constant 1.000000e+00 : f32
    %53 = vector.broadcast %cst_26 : f32 to vector<8x128xf32>
    %54 = arith.addf %53, %52 : vector<8x128xf32>
    %55 = arith.divf %53, %54 : vector<8x128xf32>
    %56 = vector.extract_strided_slice %49 {offsets = [0, 128], sizes = [8, 128], strides = [1, 1]} : vector<8x512xf32> to vector<8x128xf32>
    %57 = arith.negf %56 : vector<8x128xf32>
    %58 = math.exp %57 : vector<8x128xf32>
    %cst_27 = arith.constant 1.000000e+00 : f32
    %59 = vector.broadcast %cst_27 : f32 to vector<8x128xf32>
    %60 = arith.addf %59, %58 : vector<8x128xf32>
    %61 = arith.divf %59, %60 : vector<8x128xf32>
    %62 = vector.extract_strided_slice %49 {offsets = [0, 256], sizes = [8, 128], strides = [1, 1]} : vector<8x512xf32> to vector<8x128xf32>
    %63 = math.tanh %62 : vector<8x128xf32>
    %64 = vector.extract_strided_slice %49 {offsets = [0, 384], sizes = [8, 128], strides = [1, 1]} : vector<8x512xf32> to vector<8x128xf32>
    %65 = arith.negf %64 : vector<8x128xf32>
    %66 = math.exp %65 : vector<8x128xf32>
    %cst_28 = arith.constant 1.000000e+00 : f32
    %67 = vector.broadcast %cst_28 : f32 to vector<8x128xf32>
    %68 = arith.addf %67, %66 : vector<8x128xf32>
    %69 = arith.divf %67, %68 : vector<8x128xf32>
    %70 = arith.mulf %61, %43 : vector<8x128xf32>
    %71 = arith.mulf %55, %63 : vector<8x128xf32>
    %72 = arith.addf %70, %71 : vector<8x128xf32>
    %73 = math.tanh %72 : vector<8x128xf32>
    %74 = arith.mulf %69, %73 : vector<8x128xf32>
    %75 = tpu.concatenate %45, %16 in 1 : vector<8x128xf32>, vector<8x128xf32> -> vector<8x256xf32>
    %76 = arith.truncf %75 : vector<8x256xf32> to vector<8x256xbf16>
    %cst_29 = arith.constant dense<0.000000e+00> : vector<8x512xf32>
    %77 = tpu.matmul %76, %8, %cst_29 {dimension_numbers = #tpu.dot_dimension_numbers<[1], [0], [0], [1], [0, 0, 1, 1], [], []>} : vector<8x256xbf16>, vector<256x512xbf16>, vector<8x512xf32> -> vector<8x512xf32>
    %78 = arith.addf %77, %12 : vector<8x512xf32>
    %79 = vector.extract_strided_slice %78 {offsets = [0, 0], sizes = [8, 128], strides = [1, 1]} : vector<8x512xf32> to vector<8x128xf32>
    %80 = arith.negf %79 : vector<8x128xf32>
    %81 = math.exp %80 : vector<8x128xf32>
    %cst_30 = arith.constant 1.000000e+00 : f32
    %82 = vector.broadcast %cst_30 : f32 to vector<8x128xf32>
    %83 = arith.addf %82, %81 : vector<8x128xf32>
    %84 = arith.divf %82, %83 : vector<8x128xf32>
    %85 = vector.extract_strided_slice %78 {offsets = [0, 128], sizes = [8, 128], strides = [1, 1]} : vector<8x512xf32> to vector<8x128xf32>
    %86 = arith.negf %85 : vector<8x128xf32>
    %87 = math.exp %86 : vector<8x128xf32>
    %cst_31 = arith.constant 1.000000e+00 : f32
    %88 = vector.broadcast %cst_31 : f32 to vector<8x128xf32>
    %89 = arith.addf %88, %87 : vector<8x128xf32>
    %90 = arith.divf %88, %89 : vector<8x128xf32>
    %91 = vector.extract_strided_slice %78 {offsets = [0, 256], sizes = [8, 128], strides = [1, 1]} : vector<8x512xf32> to vector<8x128xf32>
    %92 = math.tanh %91 : vector<8x128xf32>
    %93 = vector.extract_strided_slice %78 {offsets = [0, 384], sizes = [8, 128], strides = [1, 1]} : vector<8x512xf32> to vector<8x128xf32>
    %94 = arith.negf %93 : vector<8x128xf32>
    %95 = math.exp %94 : vector<8x128xf32>
    %cst_32 = arith.constant 1.000000e+00 : f32
    %96 = vector.broadcast %cst_32 : f32 to vector<8x128xf32>
    %97 = arith.addf %96, %95 : vector<8x128xf32>
    %98 = arith.divf %96, %97 : vector<8x128xf32>
    %99 = arith.mulf %90, %16 : vector<8x128xf32>
    %100 = arith.mulf %84, %92 : vector<8x128xf32>
    %101 = arith.addf %99, %100 : vector<8x128xf32>
    %102 = math.tanh %101 : vector<8x128xf32>
    %103 = arith.mulf %98, %102 : vector<8x128xf32>
    %c16 = arith.constant 16 : index
    %c0_33 = arith.constant 0 : index
    %104 = vector.load %arg11[%c16, %c0_33] : memref<64x512xf32, #tpu.memory_space<vmem>>, vector<8x512xf32>
    %105 = arith.truncf %74 : vector<8x128xf32> to vector<8x128xbf16>
    %cst_34 = arith.constant dense<0.000000e+00> : vector<8x512xf32>
    %106 = tpu.matmul %105, %7, %cst_34 {dimension_numbers = #tpu.dot_dimension_numbers<[1], [0], [0], [1], [0, 0, 1, 1], [], []>} : vector<8x128xbf16>, vector<128x512xbf16>, vector<8x512xf32> -> vector<8x512xf32>
    %107 = arith.addf %104, %106 : vector<8x512xf32>
    %108 = vector.extract_strided_slice %107 {offsets = [0, 0], sizes = [8, 128], strides = [1, 1]} : vector<8x512xf32> to vector<8x128xf32>
    %109 = arith.negf %108 : vector<8x128xf32>
    %110 = math.exp %109 : vector<8x128xf32>
    %cst_35 = arith.constant 1.000000e+00 : f32
    %111 = vector.broadcast %cst_35 : f32 to vector<8x128xf32>
    %112 = arith.addf %111, %110 : vector<8x128xf32>
    %113 = arith.divf %111, %112 : vector<8x128xf32>
    %114 = vector.extract_strided_slice %107 {offsets = [0, 128], sizes = [8, 128], strides = [1, 1]} : vector<8x512xf32> to vector<8x128xf32>
    %115 = arith.negf %114 : vector<8x128xf32>
    %116 = math.exp %115 : vector<8x128xf32>
    %cst_36 = arith.constant 1.000000e+00 : f32
    %117 = vector.broadcast %cst_36 : f32 to vector<8x128xf32>
    %118 = arith.addf %117, %116 : vector<8x128xf32>
    %119 = arith.divf %117, %118 : vector<8x128xf32>
    %120 = vector.extract_strided_slice %107 {offsets = [0, 256], sizes = [8, 128], strides = [1, 1]} : vector<8x512xf32> to vector<8x128xf32>
    %121 = math.tanh %120 : vector<8x128xf32>
    %122 = vector.extract_strided_slice %107 {offsets = [0, 384], sizes = [8, 128], strides = [1, 1]} : vector<8x512xf32> to vector<8x128xf32>
    %123 = arith.negf %122 : vector<8x128xf32>
    %124 = math.exp %123 : vector<8x128xf32>
    %cst_37 = arith.constant 1.000000e+00 : f32
    %125 = vector.broadcast %cst_37 : f32 to vector<8x128xf32>
    %126 = arith.addf %125, %124 : vector<8x128xf32>
    %127 = arith.divf %125, %126 : vector<8x128xf32>
    %128 = arith.mulf %119, %72 : vector<8x128xf32>
    %129 = arith.mulf %113, %121 : vector<8x128xf32>
    %130 = arith.addf %128, %129 : vector<8x128xf32>
    %131 = math.tanh %130 : vector<8x128xf32>
    %132 = arith.mulf %127, %131 : vector<8x128xf32>
    %133 = tpu.concatenate %74, %103 in 1 : vector<8x128xf32>, vector<8x128xf32> -> vector<8x256xf32>
    %134 = arith.truncf %133 : vector<8x256xf32> to vector<8x256xbf16>
    %cst_38 = arith.constant dense<0.000000e+00> : vector<8x512xf32>
    %135 = tpu.matmul %134, %8, %cst_38 {dimension_numbers = #tpu.dot_dimension_numbers<[1], [0], [0], [1], [0, 0, 1, 1], [], []>} : vector<8x256xbf16>, vector<256x512xbf16>, vector<8x512xf32> -> vector<8x512xf32>
    %136 = arith.addf %135, %12 : vector<8x512xf32>
    %137 = vector.extract_strided_slice %136 {offsets = [0, 0], sizes = [8, 128], strides = [1, 1]} : vector<8x512xf32> to vector<8x128xf32>
    %138 = arith.negf %137 : vector<8x128xf32>
    %139 = math.exp %138 : vector<8x128xf32>
    %cst_39 = arith.constant 1.000000e+00 : f32
    %140 = vector.broadcast %cst_39 : f32 to vector<8x128xf32>
    %141 = arith.addf %140, %139 : vector<8x128xf32>
    %142 = arith.divf %140, %141 : vector<8x128xf32>
    %143 = vector.extract_strided_slice %136 {offsets = [0, 128], sizes = [8, 128], strides = [1, 1]} : vector<8x512xf32> to vector<8x128xf32>
    %144 = arith.negf %143 : vector<8x128xf32>
    %145 = math.exp %144 : vector<8x128xf32>
    %cst_40 = arith.constant 1.000000e+00 : f32
    %146 = vector.broadcast %cst_40 : f32 to vector<8x128xf32>
    %147 = arith.addf %146, %145 : vector<8x128xf32>
    %148 = arith.divf %146, %147 : vector<8x128xf32>
    %149 = vector.extract_strided_slice %136 {offsets = [0, 256], sizes = [8, 128], strides = [1, 1]} : vector<8x512xf32> to vector<8x128xf32>
    %150 = math.tanh %149 : vector<8x128xf32>
    %151 = vector.extract_strided_slice %136 {offsets = [0, 384], sizes = [8, 128], strides = [1, 1]} : vector<8x512xf32> to vector<8x128xf32>
    %152 = arith.negf %151 : vector<8x128xf32>
    %153 = math.exp %152 : vector<8x128xf32>
    %cst_41 = arith.constant 1.000000e+00 : f32
    %154 = vector.broadcast %cst_41 : f32 to vector<8x128xf32>
    %155 = arith.addf %154, %153 : vector<8x128xf32>
    %156 = arith.divf %154, %155 : vector<8x128xf32>
    %157 = arith.mulf %148, %101 : vector<8x128xf32>
    %158 = arith.mulf %142, %150 : vector<8x128xf32>
    %159 = arith.addf %157, %158 : vector<8x128xf32>
    %160 = math.tanh %159 : vector<8x128xf32>
    %161 = arith.mulf %156, %160 : vector<8x128xf32>
    %162 = tpu.concatenate %103, %16 in 1 : vector<8x128xf32>, vector<8x128xf32> -> vector<8x256xf32>
    %163 = arith.truncf %162 : vector<8x256xf32> to vector<8x256xbf16>
    %cst_42 = arith.constant dense<0.000000e+00> : vector<8x512xf32>
    %164 = tpu.matmul %163, %9, %cst_42 {dimension_numbers = #tpu.dot_dimension_numbers<[1], [0], [0], [1], [0, 0, 1, 1], [], []>} : vector<8x256xbf16>, vector<256x512xbf16>, vector<8x512xf32> -> vector<8x512xf32>
    %165 = arith.addf %164, %15 : vector<8x512xf32>
    %166 = vector.extract_strided_slice %165 {offsets = [0, 0], sizes = [8, 128], strides = [1, 1]} : vector<8x512xf32> to vector<8x128xf32>
    %167 = arith.negf %166 : vector<8x128xf32>
    %168 = math.exp %167 : vector<8x128xf32>
    %cst_43 = arith.constant 1.000000e+00 : f32
    %169 = vector.broadcast %cst_43 : f32 to vector<8x128xf32>
    %170 = arith.addf %169, %168 : vector<8x128xf32>
    %171 = arith.divf %169, %170 : vector<8x128xf32>
    %172 = vector.extract_strided_slice %165 {offsets = [0, 128], sizes = [8, 128], strides = [1, 1]} : vector<8x512xf32> to vector<8x128xf32>
    %173 = arith.negf %172 : vector<8x128xf32>
    %174 = math.exp %173 : vector<8x128xf32>
    %cst_44 = arith.constant 1.000000e+00 : f32
    %175 = vector.broadcast %cst_44 : f32 to vector<8x128xf32>
    %176 = arith.addf %175, %174 : vector<8x128xf32>
    %177 = arith.divf %175, %176 : vector<8x128xf32>
    %178 = vector.extract_strided_slice %165 {offsets = [0, 256], sizes = [8, 128], strides = [1, 1]} : vector<8x512xf32> to vector<8x128xf32>
    %179 = math.tanh %178 : vector<8x128xf32>
    %180 = vector.extract_strided_slice %165 {offsets = [0, 384], sizes = [8, 128], strides = [1, 1]} : vector<8x512xf32> to vector<8x128xf32>
    %181 = arith.negf %180 : vector<8x128xf32>
    %182 = math.exp %181 : vector<8x128xf32>
    %cst_45 = arith.constant 1.000000e+00 : f32
    %183 = vector.broadcast %cst_45 : f32 to vector<8x128xf32>
    %184 = arith.addf %183, %182 : vector<8x128xf32>
    %185 = arith.divf %183, %184 : vector<8x128xf32>
    %186 = arith.mulf %177, %16 : vector<8x128xf32>
    %187 = arith.mulf %171, %179 : vector<8x128xf32>
    %188 = arith.addf %186, %187 : vector<8x128xf32>
    %189 = math.tanh %188 : vector<8x128xf32>
    %190 = arith.mulf %185, %189 : vector<8x128xf32>
    %c24 = arith.constant 24 : index
    %c0_46 = arith.constant 0 : index
    %191 = vector.load %arg11[%c24, %c0_46] : memref<64x512xf32, #tpu.memory_space<vmem>>, vector<8x512xf32>
    %192 = arith.truncf %132 : vector<8x128xf32> to vector<8x128xbf16>
    %cst_47 = arith.constant dense<0.000000e+00> : vector<8x512xf32>
    %193 = tpu.matmul %192, %7, %cst_47 {dimension_numbers = #tpu.dot_dimension_numbers<[1], [0], [0], [1], [0, 0, 1, 1], [], []>} : vector<8x128xbf16>, vector<128x512xbf16>, vector<8x512xf32> -> vector<8x512xf32>
    %194 = arith.addf %191, %193 : vector<8x512xf32>
    %195 = vector.extract_strided_slice %194 {offsets = [0, 0], sizes = [8, 128], strides = [1, 1]} : vector<8x512xf32> to vector<8x128xf32>
    %196 = arith.negf %195 : vector<8x128xf32>
    %197 = math.exp %196 : vector<8x128xf32>
    %cst_48 = arith.constant 1.000000e+00 : f32
    %198 = vector.broadcast %cst_48 : f32 to vector<8x128xf32>
    %199 = arith.addf %198, %197 : vector<8x128xf32>
    %200 = arith.divf %198, %199 : vector<8x128xf32>
    %201 = vector.extract_strided_slice %194 {offsets = [0, 128], sizes = [8, 128], strides = [1, 1]} : vector<8x512xf32> to vector<8x128xf32>
    %202 = arith.negf %201 : vector<8x128xf32>
    %203 = math.exp %202 : vector<8x128xf32>
    %cst_49 = arith.constant 1.000000e+00 : f32
    %204 = vector.broadcast %cst_49 : f32 to vector<8x128xf32>
    %205 = arith.addf %204, %203 : vector<8x128xf32>
    %206 = arith.divf %204, %205 : vector<8x128xf32>
    %207 = vector.extract_strided_slice %194 {offsets = [0, 256], sizes = [8, 128], strides = [1, 1]} : vector<8x512xf32> to vector<8x128xf32>
    %208 = math.tanh %207 : vector<8x128xf32>
    %209 = vector.extract_strided_slice %194 {offsets = [0, 384], sizes = [8, 128], strides = [1, 1]} : vector<8x512xf32> to vector<8x128xf32>
    %210 = arith.negf %209 : vector<8x128xf32>
    %211 = math.exp %210 : vector<8x128xf32>
    %cst_50 = arith.constant 1.000000e+00 : f32
    %212 = vector.broadcast %cst_50 : f32 to vector<8x128xf32>
    %213 = arith.addf %212, %211 : vector<8x128xf32>
    %214 = arith.divf %212, %213 : vector<8x128xf32>
    %215 = arith.mulf %206, %130 : vector<8x128xf32>
    %216 = arith.mulf %200, %208 : vector<8x128xf32>
    %217 = arith.addf %215, %216 : vector<8x128xf32>
    %218 = math.tanh %217 : vector<8x128xf32>
    %219 = arith.mulf %214, %218 : vector<8x128xf32>
    %220 = tpu.concatenate %132, %161 in 1 : vector<8x128xf32>, vector<8x128xf32> -> vector<8x256xf32>
    %221 = arith.truncf %220 : vector<8x256xf32> to vector<8x256xbf16>
    %cst_51 = arith.constant dense<0.000000e+00> : vector<8x512xf32>
    %222 = tpu.matmul %221, %8, %cst_51 {dimension_numbers = #tpu.dot_dimension_numbers<[1], [0], [0], [1], [0, 0, 1, 1], [], []>} : vector<8x256xbf16>, vector<256x512xbf16>, vector<8x512xf32> -> vector<8x512xf32>
    %223 = arith.addf %222, %12 : vector<8x512xf32>
    %224 = vector.extract_strided_slice %223 {offsets = [0, 0], sizes = [8, 128], strides = [1, 1]} : vector<8x512xf32> to vector<8x128xf32>
    %225 = arith.negf %224 : vector<8x128xf32>
    %226 = math.exp %225 : vector<8x128xf32>
    %cst_52 = arith.constant 1.000000e+00 : f32
    %227 = vector.broadcast %cst_52 : f32 to vector<8x128xf32>
    %228 = arith.addf %227, %226 : vector<8x128xf32>
    %229 = arith.divf %227, %228 : vector<8x128xf32>
    %230 = vector.extract_strided_slice %223 {offsets = [0, 128], sizes = [8, 128], strides = [1, 1]} : vector<8x512xf32> to vector<8x128xf32>
    %231 = arith.negf %230 : vector<8x128xf32>
    %232 = math.exp %231 : vector<8x128xf32>
    %cst_53 = arith.constant 1.000000e+00 : f32
    %233 = vector.broadcast %cst_53 : f32 to vector<8x128xf32>
    %234 = arith.addf %233, %232 : vector<8x128xf32>
    %235 = arith.divf %233, %234 : vector<8x128xf32>
    %236 = vector.extract_strided_slice %223 {offsets = [0, 256], sizes = [8, 128], strides = [1, 1]} : vector<8x512xf32> to vector<8x128xf32>
    %237 = math.tanh %236 : vector<8x128xf32>
    %238 = vector.extract_strided_slice %223 {offsets = [0, 384], sizes = [8, 128], strides = [1, 1]} : vector<8x512xf32> to vector<8x128xf32>
    %239 = arith.negf %238 : vector<8x128xf32>
    %240 = math.exp %239 : vector<8x128xf32>
    %cst_54 = arith.constant 1.000000e+00 : f32
    %241 = vector.broadcast %cst_54 : f32 to vector<8x128xf32>
    %242 = arith.addf %241, %240 : vector<8x128xf32>
    %243 = arith.divf %241, %242 : vector<8x128xf32>
    %244 = arith.mulf %235, %159 : vector<8x128xf32>
    %245 = arith.mulf %229, %237 : vector<8x128xf32>
    %246 = arith.addf %244, %245 : vector<8x128xf32>
    %247 = math.tanh %246 : vector<8x128xf32>
    %248 = arith.mulf %243, %247 : vector<8x128xf32>
    %249 = tpu.concatenate %161, %190 in 1 : vector<8x128xf32>, vector<8x128xf32> -> vector<8x256xf32>
    %250 = arith.truncf %249 : vector<8x256xf32> to vector<8x256xbf16>
    %cst_55 = arith.constant dense<0.000000e+00> : vector<8x512xf32>
    %251 = tpu.matmul %250, %9, %cst_55 {dimension_numbers = #tpu.dot_dimension_numbers<[1], [0], [0], [1], [0, 0, 1, 1], [], []>} : vector<8x256xbf16>, vector<256x512xbf16>, vector<8x512xf32> -> vector<8x512xf32>
    %252 = arith.addf %251, %15 : vector<8x512xf32>
    %253 = vector.extract_strided_slice %252 {offsets = [0, 0], sizes = [8, 128], strides = [1, 1]} : vector<8x512xf32> to vector<8x128xf32>
    %254 = arith.negf %253 : vector<8x128xf32>
    %255 = math.exp %254 : vector<8x128xf32>
    %cst_56 = arith.constant 1.000000e+00 : f32
    %256 = vector.broadcast %cst_56 : f32 to vector<8x128xf32>
    %257 = arith.addf %256, %255 : vector<8x128xf32>
    %258 = arith.divf %256, %257 : vector<8x128xf32>
    %259 = vector.extract_strided_slice %252 {offsets = [0, 128], sizes = [8, 128], strides = [1, 1]} : vector<8x512xf32> to vector<8x128xf32>
    %260 = arith.negf %259 : vector<8x128xf32>
    %261 = math.exp %260 : vector<8x128xf32>
    %cst_57 = arith.constant 1.000000e+00 : f32
    %262 = vector.broadcast %cst_57 : f32 to vector<8x128xf32>
    %263 = arith.addf %262, %261 : vector<8x128xf32>
    %264 = arith.divf %262, %263 : vector<8x128xf32>
    %265 = vector.extract_strided_slice %252 {offsets = [0, 256], sizes = [8, 128], strides = [1, 1]} : vector<8x512xf32> to vector<8x128xf32>
    %266 = math.tanh %265 : vector<8x128xf32>
    %267 = vector.extract_strided_slice %252 {offsets = [0, 384], sizes = [8, 128], strides = [1, 1]} : vector<8x512xf32> to vector<8x128xf32>
    %268 = arith.negf %267 : vector<8x128xf32>
    %269 = math.exp %268 : vector<8x128xf32>
    %cst_58 = arith.constant 1.000000e+00 : f32
    %270 = vector.broadcast %cst_58 : f32 to vector<8x128xf32>
    %271 = arith.addf %270, %269 : vector<8x128xf32>
    %272 = arith.divf %270, %271 : vector<8x128xf32>
    %273 = arith.mulf %264, %188 : vector<8x128xf32>
    %274 = arith.mulf %258, %266 : vector<8x128xf32>
    %275 = arith.addf %273, %274 : vector<8x128xf32>
    %276 = math.tanh %275 : vector<8x128xf32>
    %277 = arith.mulf %272, %276 : vector<8x128xf32>
    %c32 = arith.constant 32 : index
    %c0_59 = arith.constant 0 : index
    %278 = vector.load %arg11[%c32, %c0_59] : memref<64x512xf32, #tpu.memory_space<vmem>>, vector<8x512xf32>
    %279 = arith.truncf %219 : vector<8x128xf32> to vector<8x128xbf16>
    %cst_60 = arith.constant dense<0.000000e+00> : vector<8x512xf32>
    %280 = tpu.matmul %279, %7, %cst_60 {dimension_numbers = #tpu.dot_dimension_numbers<[1], [0], [0], [1], [0, 0, 1, 1], [], []>} : vector<8x128xbf16>, vector<128x512xbf16>, vector<8x512xf32> -> vector<8x512xf32>
    %281 = arith.addf %278, %280 : vector<8x512xf32>
    %282 = vector.extract_strided_slice %281 {offsets = [0, 0], sizes = [8, 128], strides = [1, 1]} : vector<8x512xf32> to vector<8x128xf32>
    %283 = arith.negf %282 : vector<8x128xf32>
    %284 = math.exp %283 : vector<8x128xf32>
    %cst_61 = arith.constant 1.000000e+00 : f32
    %285 = vector.broadcast %cst_61 : f32 to vector<8x128xf32>
    %286 = arith.addf %285, %284 : vector<8x128xf32>
    %287 = arith.divf %285, %286 : vector<8x128xf32>
    %288 = vector.extract_strided_slice %281 {offsets = [0, 128], sizes = [8, 128], strides = [1, 1]} : vector<8x512xf32> to vector<8x128xf32>
    %289 = arith.negf %288 : vector<8x128xf32>
    %290 = math.exp %289 : vector<8x128xf32>
    %cst_62 = arith.constant 1.000000e+00 : f32
    %291 = vector.broadcast %cst_62 : f32 to vector<8x128xf32>
    %292 = arith.addf %291, %290 : vector<8x128xf32>
    %293 = arith.divf %291, %292 : vector<8x128xf32>
    %294 = vector.extract_strided_slice %281 {offsets = [0, 256], sizes = [8, 128], strides = [1, 1]} : vector<8x512xf32> to vector<8x128xf32>
    %295 = math.tanh %294 : vector<8x128xf32>
    %296 = vector.extract_strided_slice %281 {offsets = [0, 384], sizes = [8, 128], strides = [1, 1]} : vector<8x512xf32> to vector<8x128xf32>
    %297 = arith.negf %296 : vector<8x128xf32>
    %298 = math.exp %297 : vector<8x128xf32>
    %cst_63 = arith.constant 1.000000e+00 : f32
    %299 = vector.broadcast %cst_63 : f32 to vector<8x128xf32>
    %300 = arith.addf %299, %298 : vector<8x128xf32>
    %301 = arith.divf %299, %300 : vector<8x128xf32>
    %302 = arith.mulf %293, %217 : vector<8x128xf32>
    %303 = arith.mulf %287, %295 : vector<8x128xf32>
    %304 = arith.addf %302, %303 : vector<8x128xf32>
    %305 = math.tanh %304 : vector<8x128xf32>
    %306 = arith.mulf %301, %305 : vector<8x128xf32>
    %307 = tpu.concatenate %219, %248 in 1 : vector<8x128xf32>, vector<8x128xf32> -> vector<8x256xf32>
    %308 = arith.truncf %307 : vector<8x256xf32> to vector<8x256xbf16>
    %cst_64 = arith.constant dense<0.000000e+00> : vector<8x512xf32>
    %309 = tpu.matmul %308, %8, %cst_64 {dimension_numbers = #tpu.dot_dimension_numbers<[1], [0], [0], [1], [0, 0, 1, 1], [], []>} : vector<8x256xbf16>, vector<256x512xbf16>, vector<8x512xf32> -> vector<8x512xf32>
    %310 = arith.addf %309, %12 : vector<8x512xf32>
    %311 = vector.extract_strided_slice %310 {offsets = [0, 0], sizes = [8, 128], strides = [1, 1]} : vector<8x512xf32> to vector<8x128xf32>
    %312 = arith.negf %311 : vector<8x128xf32>
    %313 = math.exp %312 : vector<8x128xf32>
    %cst_65 = arith.constant 1.000000e+00 : f32
    %314 = vector.broadcast %cst_65 : f32 to vector<8x128xf32>
    %315 = arith.addf %314, %313 : vector<8x128xf32>
    %316 = arith.divf %314, %315 : vector<8x128xf32>
    %317 = vector.extract_strided_slice %310 {offsets = [0, 128], sizes = [8, 128], strides = [1, 1]} : vector<8x512xf32> to vector<8x128xf32>
    %318 = arith.negf %317 : vector<8x128xf32>
    %319 = math.exp %318 : vector<8x128xf32>
    %cst_66 = arith.constant 1.000000e+00 : f32
    %320 = vector.broadcast %cst_66 : f32 to vector<8x128xf32>
    %321 = arith.addf %320, %319 : vector<8x128xf32>
    %322 = arith.divf %320, %321 : vector<8x128xf32>
    %323 = vector.extract_strided_slice %310 {offsets = [0, 256], sizes = [8, 128], strides = [1, 1]} : vector<8x512xf32> to vector<8x128xf32>
    %324 = math.tanh %323 : vector<8x128xf32>
    %325 = vector.extract_strided_slice %310 {offsets = [0, 384], sizes = [8, 128], strides = [1, 1]} : vector<8x512xf32> to vector<8x128xf32>
    %326 = arith.negf %325 : vector<8x128xf32>
    %327 = math.exp %326 : vector<8x128xf32>
    %cst_67 = arith.constant 1.000000e+00 : f32
    %328 = vector.broadcast %cst_67 : f32 to vector<8x128xf32>
    %329 = arith.addf %328, %327 : vector<8x128xf32>
    %330 = arith.divf %328, %329 : vector<8x128xf32>
    %331 = arith.mulf %322, %246 : vector<8x128xf32>
    %332 = arith.mulf %316, %324 : vector<8x128xf32>
    %333 = arith.addf %331, %332 : vector<8x128xf32>
    %334 = math.tanh %333 : vector<8x128xf32>
    %335 = arith.mulf %330, %334 : vector<8x128xf32>
    %336 = tpu.concatenate %248, %277 in 1 : vector<8x128xf32>, vector<8x128xf32> -> vector<8x256xf32>
    %337 = arith.truncf %336 : vector<8x256xf32> to vector<8x256xbf16>
    %cst_68 = arith.constant dense<0.000000e+00> : vector<8x512xf32>
    %338 = tpu.matmul %337, %9, %cst_68 {dimension_numbers = #tpu.dot_dimension_numbers<[1], [0], [0], [1], [0, 0, 1, 1], [], []>} : vector<8x256xbf16>, vector<256x512xbf16>, vector<8x512xf32> -> vector<8x512xf32>
    %339 = arith.addf %338, %15 : vector<8x512xf32>
    %340 = vector.extract_strided_slice %339 {offsets = [0, 0], sizes = [8, 128], strides = [1, 1]} : vector<8x512xf32> to vector<8x128xf32>
    %341 = arith.negf %340 : vector<8x128xf32>
    %342 = math.exp %341 : vector<8x128xf32>
    %cst_69 = arith.constant 1.000000e+00 : f32
    %343 = vector.broadcast %cst_69 : f32 to vector<8x128xf32>
    %344 = arith.addf %343, %342 : vector<8x128xf32>
    %345 = arith.divf %343, %344 : vector<8x128xf32>
    %346 = vector.extract_strided_slice %339 {offsets = [0, 128], sizes = [8, 128], strides = [1, 1]} : vector<8x512xf32> to vector<8x128xf32>
    %347 = arith.negf %346 : vector<8x128xf32>
    %348 = math.exp %347 : vector<8x128xf32>
    %cst_70 = arith.constant 1.000000e+00 : f32
    %349 = vector.broadcast %cst_70 : f32 to vector<8x128xf32>
    %350 = arith.addf %349, %348 : vector<8x128xf32>
    %351 = arith.divf %349, %350 : vector<8x128xf32>
    %352 = vector.extract_strided_slice %339 {offsets = [0, 256], sizes = [8, 128], strides = [1, 1]} : vector<8x512xf32> to vector<8x128xf32>
    %353 = math.tanh %352 : vector<8x128xf32>
    %354 = vector.extract_strided_slice %339 {offsets = [0, 384], sizes = [8, 128], strides = [1, 1]} : vector<8x512xf32> to vector<8x128xf32>
    %355 = arith.negf %354 : vector<8x128xf32>
    %356 = math.exp %355 : vector<8x128xf32>
    %cst_71 = arith.constant 1.000000e+00 : f32
    %357 = vector.broadcast %cst_71 : f32 to vector<8x128xf32>
    %358 = arith.addf %357, %356 : vector<8x128xf32>
    %359 = arith.divf %357, %358 : vector<8x128xf32>
    %360 = arith.mulf %351, %275 : vector<8x128xf32>
    %361 = arith.mulf %345, %353 : vector<8x128xf32>
    %362 = arith.addf %360, %361 : vector<8x128xf32>
    %363 = math.tanh %362 : vector<8x128xf32>
    %364 = arith.mulf %359, %363 : vector<8x128xf32>
    %c40 = arith.constant 40 : index
    %c0_72 = arith.constant 0 : index
    %365 = vector.load %arg11[%c40, %c0_72] : memref<64x512xf32, #tpu.memory_space<vmem>>, vector<8x512xf32>
    %366 = arith.truncf %306 : vector<8x128xf32> to vector<8x128xbf16>
    %cst_73 = arith.constant dense<0.000000e+00> : vector<8x512xf32>
    %367 = tpu.matmul %366, %7, %cst_73 {dimension_numbers = #tpu.dot_dimension_numbers<[1], [0], [0], [1], [0, 0, 1, 1], [], []>} : vector<8x128xbf16>, vector<128x512xbf16>, vector<8x512xf32> -> vector<8x512xf32>
    %368 = arith.addf %365, %367 : vector<8x512xf32>
    %369 = vector.extract_strided_slice %368 {offsets = [0, 0], sizes = [8, 128], strides = [1, 1]} : vector<8x512xf32> to vector<8x128xf32>
    %370 = arith.negf %369 : vector<8x128xf32>
    %371 = math.exp %370 : vector<8x128xf32>
    %cst_74 = arith.constant 1.000000e+00 : f32
    %372 = vector.broadcast %cst_74 : f32 to vector<8x128xf32>
    %373 = arith.addf %372, %371 : vector<8x128xf32>
    %374 = arith.divf %372, %373 : vector<8x128xf32>
    %375 = vector.extract_strided_slice %368 {offsets = [0, 128], sizes = [8, 128], strides = [1, 1]} : vector<8x512xf32> to vector<8x128xf32>
    %376 = arith.negf %375 : vector<8x128xf32>
    %377 = math.exp %376 : vector<8x128xf32>
    %cst_75 = arith.constant 1.000000e+00 : f32
    %378 = vector.broadcast %cst_75 : f32 to vector<8x128xf32>
    %379 = arith.addf %378, %377 : vector<8x128xf32>
    %380 = arith.divf %378, %379 : vector<8x128xf32>
    %381 = vector.extract_strided_slice %368 {offsets = [0, 256], sizes = [8, 128], strides = [1, 1]} : vector<8x512xf32> to vector<8x128xf32>
    %382 = math.tanh %381 : vector<8x128xf32>
    %383 = vector.extract_strided_slice %368 {offsets = [0, 384], sizes = [8, 128], strides = [1, 1]} : vector<8x512xf32> to vector<8x128xf32>
    %384 = arith.negf %383 : vector<8x128xf32>
    %385 = math.exp %384 : vector<8x128xf32>
    %cst_76 = arith.constant 1.000000e+00 : f32
    %386 = vector.broadcast %cst_76 : f32 to vector<8x128xf32>
    %387 = arith.addf %386, %385 : vector<8x128xf32>
    %388 = arith.divf %386, %387 : vector<8x128xf32>
    %389 = arith.mulf %380, %304 : vector<8x128xf32>
    %390 = arith.mulf %374, %382 : vector<8x128xf32>
    %391 = arith.addf %389, %390 : vector<8x128xf32>
    %392 = math.tanh %391 : vector<8x128xf32>
    %393 = arith.mulf %388, %392 : vector<8x128xf32>
    %394 = tpu.concatenate %306, %335 in 1 : vector<8x128xf32>, vector<8x128xf32> -> vector<8x256xf32>
    %395 = arith.truncf %394 : vector<8x256xf32> to vector<8x256xbf16>
    %cst_77 = arith.constant dense<0.000000e+00> : vector<8x512xf32>
    %396 = tpu.matmul %395, %8, %cst_77 {dimension_numbers = #tpu.dot_dimension_numbers<[1], [0], [0], [1], [0, 0, 1, 1], [], []>} : vector<8x256xbf16>, vector<256x512xbf16>, vector<8x512xf32> -> vector<8x512xf32>
    %397 = arith.addf %396, %12 : vector<8x512xf32>
    %398 = vector.extract_strided_slice %397 {offsets = [0, 0], sizes = [8, 128], strides = [1, 1]} : vector<8x512xf32> to vector<8x128xf32>
    %399 = arith.negf %398 : vector<8x128xf32>
    %400 = math.exp %399 : vector<8x128xf32>
    %cst_78 = arith.constant 1.000000e+00 : f32
    %401 = vector.broadcast %cst_78 : f32 to vector<8x128xf32>
    %402 = arith.addf %401, %400 : vector<8x128xf32>
    %403 = arith.divf %401, %402 : vector<8x128xf32>
    %404 = vector.extract_strided_slice %397 {offsets = [0, 128], sizes = [8, 128], strides = [1, 1]} : vector<8x512xf32> to vector<8x128xf32>
    %405 = arith.negf %404 : vector<8x128xf32>
    %406 = math.exp %405 : vector<8x128xf32>
    %cst_79 = arith.constant 1.000000e+00 : f32
    %407 = vector.broadcast %cst_79 : f32 to vector<8x128xf32>
    %408 = arith.addf %407, %406 : vector<8x128xf32>
    %409 = arith.divf %407, %408 : vector<8x128xf32>
    %410 = vector.extract_strided_slice %397 {offsets = [0, 256], sizes = [8, 128], strides = [1, 1]} : vector<8x512xf32> to vector<8x128xf32>
    %411 = math.tanh %410 : vector<8x128xf32>
    %412 = vector.extract_strided_slice %397 {offsets = [0, 384], sizes = [8, 128], strides = [1, 1]} : vector<8x512xf32> to vector<8x128xf32>
    %413 = arith.negf %412 : vector<8x128xf32>
    %414 = math.exp %413 : vector<8x128xf32>
    %cst_80 = arith.constant 1.000000e+00 : f32
    %415 = vector.broadcast %cst_80 : f32 to vector<8x128xf32>
    %416 = arith.addf %415, %414 : vector<8x128xf32>
    %417 = arith.divf %415, %416 : vector<8x128xf32>
    %418 = arith.mulf %409, %333 : vector<8x128xf32>
    %419 = arith.mulf %403, %411 : vector<8x128xf32>
    %420 = arith.addf %418, %419 : vector<8x128xf32>
    %421 = math.tanh %420 : vector<8x128xf32>
    %422 = arith.mulf %417, %421 : vector<8x128xf32>
    %423 = tpu.concatenate %335, %364 in 1 : vector<8x128xf32>, vector<8x128xf32> -> vector<8x256xf32>
    %424 = arith.truncf %423 : vector<8x256xf32> to vector<8x256xbf16>
    %cst_81 = arith.constant dense<0.000000e+00> : vector<8x512xf32>
    %425 = tpu.matmul %424, %9, %cst_81 {dimension_numbers = #tpu.dot_dimension_numbers<[1], [0], [0], [1], [0, 0, 1, 1], [], []>} : vector<8x256xbf16>, vector<256x512xbf16>, vector<8x512xf32> -> vector<8x512xf32>
    %426 = arith.addf %425, %15 : vector<8x512xf32>
    %427 = vector.extract_strided_slice %426 {offsets = [0, 0], sizes = [8, 128], strides = [1, 1]} : vector<8x512xf32> to vector<8x128xf32>
    %428 = arith.negf %427 : vector<8x128xf32>
    %429 = math.exp %428 : vector<8x128xf32>
    %cst_82 = arith.constant 1.000000e+00 : f32
    %430 = vector.broadcast %cst_82 : f32 to vector<8x128xf32>
    %431 = arith.addf %430, %429 : vector<8x128xf32>
    %432 = arith.divf %430, %431 : vector<8x128xf32>
    %433 = vector.extract_strided_slice %426 {offsets = [0, 128], sizes = [8, 128], strides = [1, 1]} : vector<8x512xf32> to vector<8x128xf32>
    %434 = arith.negf %433 : vector<8x128xf32>
    %435 = math.exp %434 : vector<8x128xf32>
    %cst_83 = arith.constant 1.000000e+00 : f32
    %436 = vector.broadcast %cst_83 : f32 to vector<8x128xf32>
    %437 = arith.addf %436, %435 : vector<8x128xf32>
    %438 = arith.divf %436, %437 : vector<8x128xf32>
    %439 = vector.extract_strided_slice %426 {offsets = [0, 256], sizes = [8, 128], strides = [1, 1]} : vector<8x512xf32> to vector<8x128xf32>
    %440 = math.tanh %439 : vector<8x128xf32>
    %441 = vector.extract_strided_slice %426 {offsets = [0, 384], sizes = [8, 128], strides = [1, 1]} : vector<8x512xf32> to vector<8x128xf32>
    %442 = arith.negf %441 : vector<8x128xf32>
    %443 = math.exp %442 : vector<8x128xf32>
    %cst_84 = arith.constant 1.000000e+00 : f32
    %444 = vector.broadcast %cst_84 : f32 to vector<8x128xf32>
    %445 = arith.addf %444, %443 : vector<8x128xf32>
    %446 = arith.divf %444, %445 : vector<8x128xf32>
    %447 = arith.mulf %438, %362 : vector<8x128xf32>
    %448 = arith.mulf %432, %440 : vector<8x128xf32>
    %449 = arith.addf %447, %448 : vector<8x128xf32>
    %450 = math.tanh %449 : vector<8x128xf32>
    %451 = arith.mulf %446, %450 : vector<8x128xf32>
    %c48 = arith.constant 48 : index
    %c0_85 = arith.constant 0 : index
    %452 = vector.load %arg11[%c48, %c0_85] : memref<64x512xf32, #tpu.memory_space<vmem>>, vector<8x512xf32>
    %453 = arith.truncf %393 : vector<8x128xf32> to vector<8x128xbf16>
    %cst_86 = arith.constant dense<0.000000e+00> : vector<8x512xf32>
    %454 = tpu.matmul %453, %7, %cst_86 {dimension_numbers = #tpu.dot_dimension_numbers<[1], [0], [0], [1], [0, 0, 1, 1], [], []>} : vector<8x128xbf16>, vector<128x512xbf16>, vector<8x512xf32> -> vector<8x512xf32>
    %455 = arith.addf %452, %454 : vector<8x512xf32>
    %456 = vector.extract_strided_slice %455 {offsets = [0, 0], sizes = [8, 128], strides = [1, 1]} : vector<8x512xf32> to vector<8x128xf32>
    %457 = arith.negf %456 : vector<8x128xf32>
    %458 = math.exp %457 : vector<8x128xf32>
    %cst_87 = arith.constant 1.000000e+00 : f32
    %459 = vector.broadcast %cst_87 : f32 to vector<8x128xf32>
    %460 = arith.addf %459, %458 : vector<8x128xf32>
    %461 = arith.divf %459, %460 : vector<8x128xf32>
    %462 = vector.extract_strided_slice %455 {offsets = [0, 128], sizes = [8, 128], strides = [1, 1]} : vector<8x512xf32> to vector<8x128xf32>
    %463 = arith.negf %462 : vector<8x128xf32>
    %464 = math.exp %463 : vector<8x128xf32>
    %cst_88 = arith.constant 1.000000e+00 : f32
    %465 = vector.broadcast %cst_88 : f32 to vector<8x128xf32>
    %466 = arith.addf %465, %464 : vector<8x128xf32>
    %467 = arith.divf %465, %466 : vector<8x128xf32>
    %468 = vector.extract_strided_slice %455 {offsets = [0, 256], sizes = [8, 128], strides = [1, 1]} : vector<8x512xf32> to vector<8x128xf32>
    %469 = math.tanh %468 : vector<8x128xf32>
    %470 = vector.extract_strided_slice %455 {offsets = [0, 384], sizes = [8, 128], strides = [1, 1]} : vector<8x512xf32> to vector<8x128xf32>
    %471 = arith.negf %470 : vector<8x128xf32>
    %472 = math.exp %471 : vector<8x128xf32>
    %cst_89 = arith.constant 1.000000e+00 : f32
    %473 = vector.broadcast %cst_89 : f32 to vector<8x128xf32>
    %474 = arith.addf %473, %472 : vector<8x128xf32>
    %475 = arith.divf %473, %474 : vector<8x128xf32>
    %476 = arith.mulf %467, %391 : vector<8x128xf32>
    %477 = arith.mulf %461, %469 : vector<8x128xf32>
    %478 = arith.addf %476, %477 : vector<8x128xf32>
    %479 = math.tanh %478 : vector<8x128xf32>
    %480 = arith.mulf %475, %479 : vector<8x128xf32>
    %481 = tpu.concatenate %393, %422 in 1 : vector<8x128xf32>, vector<8x128xf32> -> vector<8x256xf32>
    %482 = arith.truncf %481 : vector<8x256xf32> to vector<8x256xbf16>
    %cst_90 = arith.constant dense<0.000000e+00> : vector<8x512xf32>
    %483 = tpu.matmul %482, %8, %cst_90 {dimension_numbers = #tpu.dot_dimension_numbers<[1], [0], [0], [1], [0, 0, 1, 1], [], []>} : vector<8x256xbf16>, vector<256x512xbf16>, vector<8x512xf32> -> vector<8x512xf32>
    %484 = arith.addf %483, %12 : vector<8x512xf32>
    %485 = vector.extract_strided_slice %484 {offsets = [0, 0], sizes = [8, 128], strides = [1, 1]} : vector<8x512xf32> to vector<8x128xf32>
    %486 = arith.negf %485 : vector<8x128xf32>
    %487 = math.exp %486 : vector<8x128xf32>
    %cst_91 = arith.constant 1.000000e+00 : f32
    %488 = vector.broadcast %cst_91 : f32 to vector<8x128xf32>
    %489 = arith.addf %488, %487 : vector<8x128xf32>
    %490 = arith.divf %488, %489 : vector<8x128xf32>
    %491 = vector.extract_strided_slice %484 {offsets = [0, 128], sizes = [8, 128], strides = [1, 1]} : vector<8x512xf32> to vector<8x128xf32>
    %492 = arith.negf %491 : vector<8x128xf32>
    %493 = math.exp %492 : vector<8x128xf32>
    %cst_92 = arith.constant 1.000000e+00 : f32
    %494 = vector.broadcast %cst_92 : f32 to vector<8x128xf32>
    %495 = arith.addf %494, %493 : vector<8x128xf32>
    %496 = arith.divf %494, %495 : vector<8x128xf32>
    %497 = vector.extract_strided_slice %484 {offsets = [0, 256], sizes = [8, 128], strides = [1, 1]} : vector<8x512xf32> to vector<8x128xf32>
    %498 = math.tanh %497 : vector<8x128xf32>
    %499 = vector.extract_strided_slice %484 {offsets = [0, 384], sizes = [8, 128], strides = [1, 1]} : vector<8x512xf32> to vector<8x128xf32>
    %500 = arith.negf %499 : vector<8x128xf32>
    %501 = math.exp %500 : vector<8x128xf32>
    %cst_93 = arith.constant 1.000000e+00 : f32
    %502 = vector.broadcast %cst_93 : f32 to vector<8x128xf32>
    %503 = arith.addf %502, %501 : vector<8x128xf32>
    %504 = arith.divf %502, %503 : vector<8x128xf32>
    %505 = arith.mulf %496, %420 : vector<8x128xf32>
    %506 = arith.mulf %490, %498 : vector<8x128xf32>
    %507 = arith.addf %505, %506 : vector<8x128xf32>
    %508 = math.tanh %507 : vector<8x128xf32>
    %509 = arith.mulf %504, %508 : vector<8x128xf32>
    %510 = tpu.concatenate %422, %451 in 1 : vector<8x128xf32>, vector<8x128xf32> -> vector<8x256xf32>
    %511 = arith.truncf %510 : vector<8x256xf32> to vector<8x256xbf16>
    %cst_94 = arith.constant dense<0.000000e+00> : vector<8x512xf32>
    %512 = tpu.matmul %511, %9, %cst_94 {dimension_numbers = #tpu.dot_dimension_numbers<[1], [0], [0], [1], [0, 0, 1, 1], [], []>} : vector<8x256xbf16>, vector<256x512xbf16>, vector<8x512xf32> -> vector<8x512xf32>
    %513 = arith.addf %512, %15 : vector<8x512xf32>
    %514 = vector.extract_strided_slice %513 {offsets = [0, 0], sizes = [8, 128], strides = [1, 1]} : vector<8x512xf32> to vector<8x128xf32>
    %515 = arith.negf %514 : vector<8x128xf32>
    %516 = math.exp %515 : vector<8x128xf32>
    %cst_95 = arith.constant 1.000000e+00 : f32
    %517 = vector.broadcast %cst_95 : f32 to vector<8x128xf32>
    %518 = arith.addf %517, %516 : vector<8x128xf32>
    %519 = arith.divf %517, %518 : vector<8x128xf32>
    %520 = vector.extract_strided_slice %513 {offsets = [0, 128], sizes = [8, 128], strides = [1, 1]} : vector<8x512xf32> to vector<8x128xf32>
    %521 = arith.negf %520 : vector<8x128xf32>
    %522 = math.exp %521 : vector<8x128xf32>
    %cst_96 = arith.constant 1.000000e+00 : f32
    %523 = vector.broadcast %cst_96 : f32 to vector<8x128xf32>
    %524 = arith.addf %523, %522 : vector<8x128xf32>
    %525 = arith.divf %523, %524 : vector<8x128xf32>
    %526 = vector.extract_strided_slice %513 {offsets = [0, 256], sizes = [8, 128], strides = [1, 1]} : vector<8x512xf32> to vector<8x128xf32>
    %527 = math.tanh %526 : vector<8x128xf32>
    %528 = vector.extract_strided_slice %513 {offsets = [0, 384], sizes = [8, 128], strides = [1, 1]} : vector<8x512xf32> to vector<8x128xf32>
    %529 = arith.negf %528 : vector<8x128xf32>
    %530 = math.exp %529 : vector<8x128xf32>
    %cst_97 = arith.constant 1.000000e+00 : f32
    %531 = vector.broadcast %cst_97 : f32 to vector<8x128xf32>
    %532 = arith.addf %531, %530 : vector<8x128xf32>
    %533 = arith.divf %531, %532 : vector<8x128xf32>
    %534 = arith.mulf %525, %449 : vector<8x128xf32>
    %535 = arith.mulf %519, %527 : vector<8x128xf32>
    %536 = arith.addf %534, %535 : vector<8x128xf32>
    %537 = math.tanh %536 : vector<8x128xf32>
    %538 = arith.mulf %533, %537 : vector<8x128xf32>
    %c56 = arith.constant 56 : index
    %c0_98 = arith.constant 0 : index
    %539 = vector.load %arg11[%c56, %c0_98] : memref<64x512xf32, #tpu.memory_space<vmem>>, vector<8x512xf32>
    %540 = arith.truncf %480 : vector<8x128xf32> to vector<8x128xbf16>
    %cst_99 = arith.constant dense<0.000000e+00> : vector<8x512xf32>
    %541 = tpu.matmul %540, %7, %cst_99 {dimension_numbers = #tpu.dot_dimension_numbers<[1], [0], [0], [1], [0, 0, 1, 1], [], []>} : vector<8x128xbf16>, vector<128x512xbf16>, vector<8x512xf32> -> vector<8x512xf32>
    %542 = arith.addf %539, %541 : vector<8x512xf32>
    %543 = vector.extract_strided_slice %542 {offsets = [0, 0], sizes = [8, 128], strides = [1, 1]} : vector<8x512xf32> to vector<8x128xf32>
    %544 = arith.negf %543 : vector<8x128xf32>
    %545 = math.exp %544 : vector<8x128xf32>
    %cst_100 = arith.constant 1.000000e+00 : f32
    %546 = vector.broadcast %cst_100 : f32 to vector<8x128xf32>
    %547 = arith.addf %546, %545 : vector<8x128xf32>
    %548 = arith.divf %546, %547 : vector<8x128xf32>
    %549 = vector.extract_strided_slice %542 {offsets = [0, 128], sizes = [8, 128], strides = [1, 1]} : vector<8x512xf32> to vector<8x128xf32>
    %550 = arith.negf %549 : vector<8x128xf32>
    %551 = math.exp %550 : vector<8x128xf32>
    %cst_101 = arith.constant 1.000000e+00 : f32
    %552 = vector.broadcast %cst_101 : f32 to vector<8x128xf32>
    %553 = arith.addf %552, %551 : vector<8x128xf32>
    %554 = arith.divf %552, %553 : vector<8x128xf32>
    %555 = vector.extract_strided_slice %542 {offsets = [0, 256], sizes = [8, 128], strides = [1, 1]} : vector<8x512xf32> to vector<8x128xf32>
    %556 = math.tanh %555 : vector<8x128xf32>
    %557 = vector.extract_strided_slice %542 {offsets = [0, 384], sizes = [8, 128], strides = [1, 1]} : vector<8x512xf32> to vector<8x128xf32>
    %558 = arith.negf %557 : vector<8x128xf32>
    %559 = math.exp %558 : vector<8x128xf32>
    %cst_102 = arith.constant 1.000000e+00 : f32
    %560 = vector.broadcast %cst_102 : f32 to vector<8x128xf32>
    %561 = arith.addf %560, %559 : vector<8x128xf32>
    %562 = arith.divf %560, %561 : vector<8x128xf32>
    %563 = arith.mulf %554, %478 : vector<8x128xf32>
    %564 = arith.mulf %548, %556 : vector<8x128xf32>
    %565 = arith.addf %563, %564 : vector<8x128xf32>
    %566 = math.tanh %565 : vector<8x128xf32>
    %567 = arith.mulf %562, %566 : vector<8x128xf32>
    %568 = tpu.concatenate %480, %509 in 1 : vector<8x128xf32>, vector<8x128xf32> -> vector<8x256xf32>
    %569 = arith.truncf %568 : vector<8x256xf32> to vector<8x256xbf16>
    %cst_103 = arith.constant dense<0.000000e+00> : vector<8x512xf32>
    %570 = tpu.matmul %569, %8, %cst_103 {dimension_numbers = #tpu.dot_dimension_numbers<[1], [0], [0], [1], [0, 0, 1, 1], [], []>} : vector<8x256xbf16>, vector<256x512xbf16>, vector<8x512xf32> -> vector<8x512xf32>
    %571 = arith.addf %570, %12 : vector<8x512xf32>
    %572 = vector.extract_strided_slice %571 {offsets = [0, 0], sizes = [8, 128], strides = [1, 1]} : vector<8x512xf32> to vector<8x128xf32>
    %573 = arith.negf %572 : vector<8x128xf32>
    %574 = math.exp %573 : vector<8x128xf32>
    %cst_104 = arith.constant 1.000000e+00 : f32
    %575 = vector.broadcast %cst_104 : f32 to vector<8x128xf32>
    %576 = arith.addf %575, %574 : vector<8x128xf32>
    %577 = arith.divf %575, %576 : vector<8x128xf32>
    %578 = vector.extract_strided_slice %571 {offsets = [0, 128], sizes = [8, 128], strides = [1, 1]} : vector<8x512xf32> to vector<8x128xf32>
    %579 = arith.negf %578 : vector<8x128xf32>
    %580 = math.exp %579 : vector<8x128xf32>
    %cst_105 = arith.constant 1.000000e+00 : f32
    %581 = vector.broadcast %cst_105 : f32 to vector<8x128xf32>
    %582 = arith.addf %581, %580 : vector<8x128xf32>
    %583 = arith.divf %581, %582 : vector<8x128xf32>
    %584 = vector.extract_strided_slice %571 {offsets = [0, 256], sizes = [8, 128], strides = [1, 1]} : vector<8x512xf32> to vector<8x128xf32>
    %585 = math.tanh %584 : vector<8x128xf32>
    %586 = vector.extract_strided_slice %571 {offsets = [0, 384], sizes = [8, 128], strides = [1, 1]} : vector<8x512xf32> to vector<8x128xf32>
    %587 = arith.negf %586 : vector<8x128xf32>
    %588 = math.exp %587 : vector<8x128xf32>
    %cst_106 = arith.constant 1.000000e+00 : f32
    %589 = vector.broadcast %cst_106 : f32 to vector<8x128xf32>
    %590 = arith.addf %589, %588 : vector<8x128xf32>
    %591 = arith.divf %589, %590 : vector<8x128xf32>
    %592 = arith.mulf %583, %507 : vector<8x128xf32>
    %593 = arith.mulf %577, %585 : vector<8x128xf32>
    %594 = arith.addf %592, %593 : vector<8x128xf32>
    %595 = math.tanh %594 : vector<8x128xf32>
    %596 = arith.mulf %591, %595 : vector<8x128xf32>
    %597 = tpu.concatenate %509, %538 in 1 : vector<8x128xf32>, vector<8x128xf32> -> vector<8x256xf32>
    %598 = arith.truncf %597 : vector<8x256xf32> to vector<8x256xbf16>
    %cst_107 = arith.constant dense<0.000000e+00> : vector<8x512xf32>
    %599 = tpu.matmul %598, %9, %cst_107 {dimension_numbers = #tpu.dot_dimension_numbers<[1], [0], [0], [1], [0, 0, 1, 1], [], []>} : vector<8x256xbf16>, vector<256x512xbf16>, vector<8x512xf32> -> vector<8x512xf32>
    %600 = arith.addf %599, %15 : vector<8x512xf32>
    %601 = vector.extract_strided_slice %600 {offsets = [0, 0], sizes = [8, 128], strides = [1, 1]} : vector<8x512xf32> to vector<8x128xf32>
    %602 = arith.negf %601 : vector<8x128xf32>
    %603 = math.exp %602 : vector<8x128xf32>
    %cst_108 = arith.constant 1.000000e+00 : f32
    %604 = vector.broadcast %cst_108 : f32 to vector<8x128xf32>
    %605 = arith.addf %604, %603 : vector<8x128xf32>
    %606 = arith.divf %604, %605 : vector<8x128xf32>
    %607 = vector.extract_strided_slice %600 {offsets = [0, 128], sizes = [8, 128], strides = [1, 1]} : vector<8x512xf32> to vector<8x128xf32>
    %608 = arith.negf %607 : vector<8x128xf32>
    %609 = math.exp %608 : vector<8x128xf32>
    %cst_109 = arith.constant 1.000000e+00 : f32
    %610 = vector.broadcast %cst_109 : f32 to vector<8x128xf32>
    %611 = arith.addf %610, %609 : vector<8x128xf32>
    %612 = arith.divf %610, %611 : vector<8x128xf32>
    %613 = vector.extract_strided_slice %600 {offsets = [0, 256], sizes = [8, 128], strides = [1, 1]} : vector<8x512xf32> to vector<8x128xf32>
    %614 = math.tanh %613 : vector<8x128xf32>
    %615 = vector.extract_strided_slice %600 {offsets = [0, 384], sizes = [8, 128], strides = [1, 1]} : vector<8x512xf32> to vector<8x128xf32>
    %616 = arith.negf %615 : vector<8x128xf32>
    %617 = math.exp %616 : vector<8x128xf32>
    %cst_110 = arith.constant 1.000000e+00 : f32
    %618 = vector.broadcast %cst_110 : f32 to vector<8x128xf32>
    %619 = arith.addf %618, %617 : vector<8x128xf32>
    %620 = arith.divf %618, %619 : vector<8x128xf32>
    %621 = arith.mulf %612, %536 : vector<8x128xf32>
    %622 = arith.mulf %606, %614 : vector<8x128xf32>
    %623 = arith.addf %621, %622 : vector<8x128xf32>
    %624 = math.tanh %623 : vector<8x128xf32>
    %625 = arith.mulf %620, %624 : vector<8x128xf32>
    %626 = tpu.concatenate %567, %596 in 1 : vector<8x128xf32>, vector<8x128xf32> -> vector<8x256xf32>
    %627 = arith.truncf %626 : vector<8x256xf32> to vector<8x256xbf16>
    %cst_111 = arith.constant dense<0.000000e+00> : vector<8x512xf32>
    %628 = tpu.matmul %627, %8, %cst_111 {dimension_numbers = #tpu.dot_dimension_numbers<[1], [0], [0], [1], [0, 0, 1, 1], [], []>} : vector<8x256xbf16>, vector<256x512xbf16>, vector<8x512xf32> -> vector<8x512xf32>
    %629 = arith.addf %628, %12 : vector<8x512xf32>
    %630 = vector.extract_strided_slice %629 {offsets = [0, 0], sizes = [8, 128], strides = [1, 1]} : vector<8x512xf32> to vector<8x128xf32>
    %631 = arith.negf %630 : vector<8x128xf32>
    %632 = math.exp %631 : vector<8x128xf32>
    %cst_112 = arith.constant 1.000000e+00 : f32
    %633 = vector.broadcast %cst_112 : f32 to vector<8x128xf32>
    %634 = arith.addf %633, %632 : vector<8x128xf32>
    %635 = arith.divf %633, %634 : vector<8x128xf32>
    %636 = vector.extract_strided_slice %629 {offsets = [0, 128], sizes = [8, 128], strides = [1, 1]} : vector<8x512xf32> to vector<8x128xf32>
    %637 = arith.negf %636 : vector<8x128xf32>
    %638 = math.exp %637 : vector<8x128xf32>
    %cst_113 = arith.constant 1.000000e+00 : f32
    %639 = vector.broadcast %cst_113 : f32 to vector<8x128xf32>
    %640 = arith.addf %639, %638 : vector<8x128xf32>
    %641 = arith.divf %639, %640 : vector<8x128xf32>
    %642 = vector.extract_strided_slice %629 {offsets = [0, 256], sizes = [8, 128], strides = [1, 1]} : vector<8x512xf32> to vector<8x128xf32>
    %643 = math.tanh %642 : vector<8x128xf32>
    %644 = vector.extract_strided_slice %629 {offsets = [0, 384], sizes = [8, 128], strides = [1, 1]} : vector<8x512xf32> to vector<8x128xf32>
    %645 = arith.negf %644 : vector<8x128xf32>
    %646 = math.exp %645 : vector<8x128xf32>
    %cst_114 = arith.constant 1.000000e+00 : f32
    %647 = vector.broadcast %cst_114 : f32 to vector<8x128xf32>
    %648 = arith.addf %647, %646 : vector<8x128xf32>
    %649 = arith.divf %647, %648 : vector<8x128xf32>
    %650 = arith.mulf %641, %594 : vector<8x128xf32>
    %651 = arith.mulf %635, %643 : vector<8x128xf32>
    %652 = arith.addf %650, %651 : vector<8x128xf32>
    %653 = math.tanh %652 : vector<8x128xf32>
    %654 = arith.mulf %649, %653 : vector<8x128xf32>
    %655 = tpu.concatenate %596, %625 in 1 : vector<8x128xf32>, vector<8x128xf32> -> vector<8x256xf32>
    %656 = arith.truncf %655 : vector<8x256xf32> to vector<8x256xbf16>
    %cst_115 = arith.constant dense<0.000000e+00> : vector<8x512xf32>
    %657 = tpu.matmul %656, %9, %cst_115 {dimension_numbers = #tpu.dot_dimension_numbers<[1], [0], [0], [1], [0, 0, 1, 1], [], []>} : vector<8x256xbf16>, vector<256x512xbf16>, vector<8x512xf32> -> vector<8x512xf32>
    %658 = arith.addf %657, %15 : vector<8x512xf32>
    %659 = vector.extract_strided_slice %658 {offsets = [0, 0], sizes = [8, 128], strides = [1, 1]} : vector<8x512xf32> to vector<8x128xf32>
    %660 = arith.negf %659 : vector<8x128xf32>
    %661 = math.exp %660 : vector<8x128xf32>
    %cst_116 = arith.constant 1.000000e+00 : f32
    %662 = vector.broadcast %cst_116 : f32 to vector<8x128xf32>
    %663 = arith.addf %662, %661 : vector<8x128xf32>
    %664 = arith.divf %662, %663 : vector<8x128xf32>
    %665 = vector.extract_strided_slice %658 {offsets = [0, 128], sizes = [8, 128], strides = [1, 1]} : vector<8x512xf32> to vector<8x128xf32>
    %666 = arith.negf %665 : vector<8x128xf32>
    %667 = math.exp %666 : vector<8x128xf32>
    %cst_117 = arith.constant 1.000000e+00 : f32
    %668 = vector.broadcast %cst_117 : f32 to vector<8x128xf32>
    %669 = arith.addf %668, %667 : vector<8x128xf32>
    %670 = arith.divf %668, %669 : vector<8x128xf32>
    %671 = vector.extract_strided_slice %658 {offsets = [0, 256], sizes = [8, 128], strides = [1, 1]} : vector<8x512xf32> to vector<8x128xf32>
    %672 = math.tanh %671 : vector<8x128xf32>
    %673 = vector.extract_strided_slice %658 {offsets = [0, 384], sizes = [8, 128], strides = [1, 1]} : vector<8x512xf32> to vector<8x128xf32>
    %674 = arith.negf %673 : vector<8x128xf32>
    %675 = math.exp %674 : vector<8x128xf32>
    %cst_118 = arith.constant 1.000000e+00 : f32
    %676 = vector.broadcast %cst_118 : f32 to vector<8x128xf32>
    %677 = arith.addf %676, %675 : vector<8x128xf32>
    %678 = arith.divf %676, %677 : vector<8x128xf32>
    %679 = arith.mulf %670, %623 : vector<8x128xf32>
    %680 = arith.mulf %664, %672 : vector<8x128xf32>
    %681 = arith.addf %679, %680 : vector<8x128xf32>
    %682 = math.tanh %681 : vector<8x128xf32>
    %683 = arith.mulf %678, %682 : vector<8x128xf32>
    %684 = tpu.concatenate %654, %683 in 1 : vector<8x128xf32>, vector<8x128xf32> -> vector<8x256xf32>
    %685 = arith.truncf %684 : vector<8x256xf32> to vector<8x256xbf16>
    %cst_119 = arith.constant dense<0.000000e+00> : vector<8x512xf32>
    %686 = tpu.matmul %685, %9, %cst_119 {dimension_numbers = #tpu.dot_dimension_numbers<[1], [0], [0], [1], [0, 0, 1, 1], [], []>} : vector<8x256xbf16>, vector<256x512xbf16>, vector<8x512xf32> -> vector<8x512xf32>
    %687 = arith.addf %686, %15 : vector<8x512xf32>
    %688 = vector.extract_strided_slice %687 {offsets = [0, 0], sizes = [8, 128], strides = [1, 1]} : vector<8x512xf32> to vector<8x128xf32>
    %689 = arith.negf %688 : vector<8x128xf32>
    %690 = math.exp %689 : vector<8x128xf32>
    %cst_120 = arith.constant 1.000000e+00 : f32
    %691 = vector.broadcast %cst_120 : f32 to vector<8x128xf32>
    %692 = arith.addf %691, %690 : vector<8x128xf32>
    %693 = arith.divf %691, %692 : vector<8x128xf32>
    %694 = vector.extract_strided_slice %687 {offsets = [0, 128], sizes = [8, 128], strides = [1, 1]} : vector<8x512xf32> to vector<8x128xf32>
    %695 = arith.negf %694 : vector<8x128xf32>
    %696 = math.exp %695 : vector<8x128xf32>
    %cst_121 = arith.constant 1.000000e+00 : f32
    %697 = vector.broadcast %cst_121 : f32 to vector<8x128xf32>
    %698 = arith.addf %697, %696 : vector<8x128xf32>
    %699 = arith.divf %697, %698 : vector<8x128xf32>
    %700 = vector.extract_strided_slice %687 {offsets = [0, 256], sizes = [8, 128], strides = [1, 1]} : vector<8x512xf32> to vector<8x128xf32>
    %701 = math.tanh %700 : vector<8x128xf32>
    %702 = vector.extract_strided_slice %687 {offsets = [0, 384], sizes = [8, 128], strides = [1, 1]} : vector<8x512xf32> to vector<8x128xf32>
    %703 = arith.negf %702 : vector<8x128xf32>
    %704 = math.exp %703 : vector<8x128xf32>
    %cst_122 = arith.constant 1.000000e+00 : f32
    %705 = vector.broadcast %cst_122 : f32 to vector<8x128xf32>
    %706 = arith.addf %705, %704 : vector<8x128xf32>
    %707 = arith.divf %705, %706 : vector<8x128xf32>
    %708 = arith.mulf %699, %681 : vector<8x128xf32>
    %709 = arith.mulf %693, %701 : vector<8x128xf32>
    %710 = arith.addf %708, %709 : vector<8x128xf32>
    %711 = math.tanh %710 : vector<8x128xf32>
    %712 = arith.mulf %707, %711 : vector<8x128xf32>
    %c0_123 = arith.constant 0 : index
    %c0_124 = arith.constant 0 : index
    %713 = vector.load %arg8[%c0_123, %c0_124] : memref<128x1xf32, #tpu.memory_space<vmem>>, vector<128x1xf32>
    %cst_125 = arith.constant dense<0.000000e+00> : vector<8x1xf32>
    %714 = tpu.matmul %712, %713, %cst_125 {dimension_numbers = #tpu.dot_dimension_numbers<[1], [0], [0], [1], [0, 0, 1, 1], [], []>} : vector<8x128xf32>, vector<128x1xf32>, vector<8x1xf32> -> vector<8x1xf32>
    %c0_126 = arith.constant 0 : index
    %c0_127 = arith.constant 0 : index
    %715 = vector.load %arg9[%c0_126, %c0_127] : memref<1x1xf32, #tpu.memory_space<vmem>>, vector<1x1xf32>
    %716 = vector.broadcast %715 : vector<1x1xf32> to vector<8x1xf32>
    %717 = arith.addf %714, %716 : vector<8x1xf32>
    %c0_128 = arith.constant 0 : index
    %c0_129 = arith.constant 0 : index
    %718 = vector.load %arg10[%c0_128, %c0_129] : memref<8x1xf32, #tpu.memory_space<vmem>>, vector<8x1xf32>
    tpu.vector_store %arg10[%c0_128, %c0_129], %717 {strides = array<i32>} : memref<8x1xf32, #tpu.memory_space<vmem>>, vector<8x1xf32>,
    return
  }
}

</mosaic_0001>

<llo_original>
// kernel: lstm_model_forward.1
$region0: #{lstm_model_forward.1}
  #allocation0 [shape = 'u32[]', space=smem, size = 0x4, offset = 0x4, fixed_abs, tag = 'smem constant byte address 0x4 - core index']
  #allocation1 [shape = 'u32[72,128]{1,0:T(1,128)}', space=vmem, size = 0x9000, scoped, tag = 'internal scratch']
  #allocation2 [shape = 'f32[64,512]{1,0:T(8,128)}', space=vmem, size = 0x20000, scoped, tag = 'scratch operand']
  #allocation3 [shape = 'f32[1,1]{1,0:T(1,128)S(1)}', space=vmem, size = 0x200, scoped, tag = 'scoped memory for lstm_model_forward.1']
  %s0 = inlined_call_operand.vmem [shape: bf16[64,16], index: 0, kind: input, shape index: {}]
  %s1 = inlined_call_operand.vmem [shape: bf16[16,512], index: 1, kind: input, shape index: {}]
  %s2 = inlined_call_operand.hbm [shape: bf16[128,512], index: 2, kind: input, shape index: {}]
  %s3 = inlined_call_operand.vmem [shape: f32[1,512], index: 3, kind: input, shape index: {}]
  %s4 = inlined_call_operand.hbm [shape: bf16[256,512], index: 4, kind: input, shape index: {}]
  %s5 = inlined_call_operand.vmem [shape: f32[1,512], index: 5, kind: input, shape index: {}]
  %s6 = inlined_call_operand.hbm [shape: bf16[256,512], index: 6, kind: input, shape index: {}]
  %s7 = inlined_call_operand.vmem [shape: f32[1,512], index: 7, kind: input, shape index: {}]
  %s8 = inlined_call_operand.vmem [shape: f32[128,1], index: 8, kind: input, shape index: {}]
  %s9 = inlined_call_operand.<no memory space> [shape: f32[1,1], index: 9, kind: input, shape index: {}]
  %s10 = inlined_call_operand.vmem [shape: f32[8,1], index: 10, kind: output, shape index: {}]
  %s11 = sld [smem:[#allocation0]]
  $region62: #{lstm_model_forward.1} parent=0
    _
  %s13 = ssub.s32 1, %s11
  %s14 = scalar_select 0, %s13, %s11
  %v15 = vstv %s9
  %16 = vst [vmem:[#allocation3] sm:$0x1] %v15
  $region1: #{lstm_model_forward.1} parent=0
    #allocation4 [shape = 'u8[131072]{0}', space=vmem, size = 0x20000, scoped, tag = 'input window, operand 2, single buffered']
    #allocation5 [shape = 's32[1]{0}', space=sflag, size = 0x4, scoped, tag = 'scoped memory for lstm_model_forward.1']
    #allocation6 [shape = 'u8[262144]{0}', space=vmem, size = 0x40000, scoped, tag = 'input window, operand 4, single buffered']
    #allocation7 [shape = 's32[1]{0}', space=sflag, size = 0x4, scoped, tag = 'scoped memory for lstm_model_forward.1']
    #allocation8 [shape = 'u8[262144]{0}', space=vmem, size = 0x40000, scoped, tag = 'input window, operand 6, single buffered']
    %17 = vsyncpa [#allocation5], 0
    %18 = vsyncpa [#allocation7], 0
    // Predicated region
    $region2: #{lstm_model_forward.1} parent=1 // pred_check
      _
    $region3: #{lstm_model_forward.1} parent=1 // pred_check_branch
      %20 = sbr.rel (0) target = $region5
    $region4: #{lstm_model_forward.1} parent=1 // pred_region
      _
    $region5: #{lstm_model_forward.1} parent=1 // pred_fallthru
      _
    // Predicated region
    $region6: #{lstm_model_forward.1} parent=1 // pred_check
      _
    $region7: #{lstm_model_forward.1} parent=1 // pred_check_branch
      %22 = sbr.rel (0) target = $region9
    $region8: #{lstm_model_forward.1} parent=1 // pred_region
      _
    $region9: #{lstm_model_forward.1} parent=1 // pred_fallthru
      _
    // Predicated region
    $region10: #{lstm_model_forward.1} parent=1 // pred_check
      _
    $region11: #{lstm_model_forward.1} parent=1 // pred_check_branch
      %24 = sbr.rel (0) target = $region13
    $region12: #{lstm_model_forward.1} parent=1 // pred_region
      %26 = vsyncadd [#allocation5], 0
      %s27 = sshll.u32 %s2, 4
      %s28 = int_to_ptr.hbm [resolvable:$true] %s27
      %s29 = sshll.u32 [#allocation4], 4
      %s30 = int_to_ptr.vmem [resolvable:$true] %s29
      %35 = dma.hbm_to_vmem [thread:$0]  %s28, 4096, %s30, [#allocation5], 256, 256, 16
    $region13: #{lstm_model_forward.1} parent=1 // pred_fallthru
      _
    // Predicated region
    $region14: #{lstm_model_forward.1} parent=1 // pred_check
      _
    $region15: #{lstm_model_forward.1} parent=1 // pred_check_branch
      %37 = sbr.rel (0) target = $region17
    $region16: #{lstm_model_forward.1} parent=1 // pred_region
      _
    $region17: #{lstm_model_forward.1} parent=1 // pred_fallthru
      _
    // Predicated region
    $region18: #{lstm_model_forward.1} parent=1 // pred_check
      _
    $region19: #{lstm_model_forward.1} parent=1 // pred_check_branch
      %39 = sbr.rel (0) target = $region21
    $region20: #{lstm_model_forward.1} parent=1 // pred_region
      %41 = vsyncadd [#allocation7], 0
      %s42 = sshll.u32 %s4, 4
      %s43 = int_to_ptr.hbm [resolvable:$true] %s42
      %s44 = sshll.u32 [#allocation6], 4
      %s45 = int_to_ptr.vmem [resolvable:$true] %s44
      %50 = dma.hbm_to_vmem [thread:$0]  %s43, 8192, %s45, [#allocation7], 256, 256, 16
    $region21: #{lstm_model_forward.1} parent=1 // pred_fallthru
      _
    // Predicated region
    $region22: #{lstm_model_forward.1} parent=1 // pred_check
      _
    $region23: #{lstm_model_forward.1} parent=1 // pred_check_branch
      %52 = sbr.rel (0) target = $region25
    $region24: #{lstm_model_forward.1} parent=1 // pred_region
      _
    $region25: #{lstm_model_forward.1} parent=1 // pred_fallthru
      _
    // Predicated region
    $region26: #{lstm_model_forward.1} parent=1 // pred_check
      _
    $region27: #{lstm_model_forward.1} parent=1 // pred_check_branch
      %54 = sbr.rel (0) target = $region29
    $region28: #{lstm_model_forward.1} parent=1 // pred_region
      %56 = vsyncadd [#allocation7], 0
      %s57 = sshll.u32 %s6, 4
      %s58 = int_to_ptr.hbm [resolvable:$true] %s57
      %s59 = sshll.u32 [#allocation8], 4
      %s60 = int_to_ptr.vmem [resolvable:$true] %s59
      %65 = dma.hbm_to_vmem [thread:$0]  %s58, 8192, %s60, [#allocation7], 256, 256, 16
    $region29: #{lstm_model_forward.1} parent=1 // pred_fallthru
      _
    // Predicated region
    $region30: #{lstm_model_forward.1} parent=1 // pred_check
      _
    $region31: #{lstm_model_forward.1} parent=1 // pred_check_branch
      %67 = sbr.rel (0) target = $region33
    $region32: #{lstm_model_forward.1} parent=1 // pred_region
      _
    $region33: #{lstm_model_forward.1} parent=1 // pred_fallthru
      _
    // Predicated region
    $region34: #{lstm_model_forward.1} parent=1 // pred_check
      _
    $region35: #{lstm_model_forward.1} parent=1 // pred_check_branch
      %69 = sbr.rel (0) target = $region37
    $region36: #{lstm_model_forward.1} parent=1 // pred_region
      _
    $region37: #{lstm_model_forward.1} parent=1 // pred_fallthru
      _
    // Predicated region
    $region38: #{lstm_model_forward.1} parent=1 // pred_check
      _
    $region39: #{lstm_model_forward.1} parent=1 // pred_check_branch
      %71 = sbr.rel (0) target = $region41
    $region40: #{lstm_model_forward.1} parent=1 // pred_region
      _
    $region41: #{lstm_model_forward.1} parent=1 // pred_fallthru
      _
    // Predicated region
    $region42: #{lstm_model_forward.1} parent=1 // pred_check
      _
    $region43: #{lstm_model_forward.1} parent=1 // pred_check_branch
      %73 = sbr.rel (0) target = $region45
    $region44: #{lstm_model_forward.1} parent=1 // pred_region
      %75 = dma.done [#allocation5], 4096
    $region45: #{lstm_model_forward.1} parent=1 // pred_fallthru
      _
    // Predicated region
    $region46: #{lstm_model_forward.1} parent=1 // pred_check
      _
    $region47: #{lstm_model_forward.1} parent=1 // pred_check_branch
      %77 = sbr.rel (0) target = $region49
    $region48: #{lstm_model_forward.1} parent=1 // pred_region
      %79 = dma.done [#allocation7], 8192
    $region49: #{lstm_model_forward.1} parent=1 // pred_fallthru
      _
    // Predicated region
    $region50: #{lstm_model_forward.1} parent=1 // pred_check
      _
    $region51: #{lstm_model_forward.1} parent=1 // pred_check_branch
      %81 = sbr.rel (0) target = $region53
    $region52: #{lstm_model_forward.1} parent=1 // pred_region
      %83 = dma.done [#allocation7], 8192
    $region53: #{lstm_model_forward.1} parent=1 // pred_fallthru
      _
    %v85 = vld [vmem:[%s0] sm:$0xf]
    %v86 = vld [vmem:[%s0 + $0x4] sm:$0xf]
    %v87 = vld [vmem:[%s0 + $0x8] sm:$0xf]
    %v88 = vld [vmem:[%s0 + $0xc] sm:$0xf]
    %v89 = vld [vmem:[%s0 + $0x10] sm:$0xf]
    %v90 = vld [vmem:[%s0 + $0x14] sm:$0xf]
    %v91 = vld [vmem:[%s0 + $0x18] sm:$0xf]
    %v92 = vld [vmem:[%s0 + $0x1c] sm:$0xf]
    %v93 = vld [vmem:[%s1] sm:$0xff]
    %v94 = vld [vmem:[%s1 + $0x8] sm:$0xff]
    %v95 = vld [vmem:[%s1 + $0x10] sm:$0xff]
    %v96 = vld [vmem:[%s1 + $0x18] sm:$0xff]
    %v97 = vld [vmem:[%s3] sm:$0xf]
    %v99 = vperm.slane %v97, 0
    %v100 = vperm.slane %v97, 1
    %v101 = vperm.slane %v97, 2
    %v102 = vperm.slane %v97, 3
    %v115 = vunpack.c.l.b16 %v85
    %v116 = vunpack.c.l.b16 %v86
    %v117 = vunpack.c.l.b16 %v87
    %v118 = vunpack.c.l.b16 %v88
    %v119 = vunpack.c.l.b16 %v89
    %v120 = vunpack.c.l.b16 %v90
    %v121 = vunpack.c.l.b16 %v91
    %v122 = vunpack.c.l.b16 %v92
    %v123 = vpack.c.b16 %v116, %v115
    %v124 = vpack.c.b16 %v118, %v117
    %v125 = vpack.c.b16 %v120, %v119
    %v126 = vpack.c.b16 %v122, %v121
    %v131 = vunpack.c.l.b16 %v93
    %v132 = vunpack.c.h.b16 %v93
    %v133 = vunpack.c.l.b16 %v94
    %v134 = vunpack.c.h.b16 %v94
    %v135 = vunpack.c.l.b16 %v95
    %v136 = vunpack.c.h.b16 %v95
    %v137 = vunpack.c.l.b16 %v96
    %v138 = vunpack.c.h.b16 %v96
    %v139 = vpack.c.b16 %v135, %v131
    %v140 = vpack.c.b16 %v136, %v132
    %v141 = vpack.c.b16 %v137, %v133
    %v142 = vpack.c.b16 %v138, %v134
    %vm147 = vcmask 130048
    %v149 = vsel %vm147, %v123, 0
    %v152 = vsel %vm147, %v124, 0
    %v155 = vsel %vm147, %v125, 0
    %v158 = vsel %vm147, %v126, 0
    %160 = vmatpush.bf16.msra.mxu0 0
    %161 = vmatpush.bf16.msra.mxu0 0
    %162 = vmatpush.bf16.msra.mxu0 0
    %163 = vmatpush.bf16.msra.mxu0 0
    %164 = vmatpush.bf16.msra.mxu0 0
    %165 = vmatpush.bf16.msra.mxu0 0
    %166 = vmatpush.bf16.msra.mxu0 0
    %167 = vmatpush.bf16.msra.mxu0 %v139
    %168 = vmatmul.bf16.gmra.mxu0 %v149
    %v169 = vpop.f32.mrf.mxu0
    %v170 = vadd.f32 %v99, %v169
    %v171 = vpop.f32.mrf.mxu0
    %v172 = vadd.f32 %v99, %v171
    %173 = vmatmul.bf16.gmra.mxu0 %v152
    %v174 = vpop.f32.mrf.mxu0
    %v175 = vadd.f32 %v99, %v174
    %v176 = vpop.f32.mrf.mxu0
    %v177 = vadd.f32 %v99, %v176
    %178 = vmatmul.bf16.gmra.mxu0 %v155
    %v179 = vpop.f32.mrf.mxu0
    %v180 = vadd.f32 %v99, %v179
    %v181 = vpop.f32.mrf.mxu0
    %v182 = vadd.f32 %v99, %v181
    %183 = vmatmul.bf16.gmra.mxu0 %v158
    %v184 = vpop.f32.mrf.mxu0
    %v185 = vadd.f32 %v99, %v184
    %v186 = vpop.f32.mrf.mxu0
    %v187 = vadd.f32 %v99, %v186
    %188 = vdwg.mxu0
    %189 = vmatpush.bf16.msra.mxu0 0
    %190 = vmatpush.bf16.msra.mxu0 0
    %191 = vmatpush.bf16.msra.mxu0 0
    %192 = vmatpush.bf16.msra.mxu0 0
    %193 = vmatpush.bf16.msra.mxu0 0
    %194 = vmatpush.bf16.msra.mxu0 0
    %195 = vmatpush.bf16.msra.mxu0 0
    %196 = vmatpush.bf16.msra.mxu0 %v140
    %197 = vmatmul.bf16.gmra.mxu0 %v149
    %v198 = vpop.f32.mrf.mxu0
    %v199 = vadd.f32 %v100, %v198
    %v200 = vpop.f32.mrf.mxu0
    %v201 = vadd.f32 %v100, %v200
    %202 = vmatmul.bf16.gmra.mxu0 %v152
    %v203 = vpop.f32.mrf.mxu0
    %v204 = vadd.f32 %v100, %v203
    %v205 = vpop.f32.mrf.mxu0
    %v206 = vadd.f32 %v100, %v205
    %207 = vmatmul.bf16.gmra.mxu0 %v155
    %v208 = vpop.f32.mrf.mxu0
    %v209 = vadd.f32 %v100, %v208
    %v210 = vpop.f32.mrf.mxu0
    %v211 = vadd.f32 %v100, %v210
    %212 = vmatmul.bf16.gmra.mxu0 %v158
    %v213 = vpop.f32.mrf.mxu0
    %v214 = vadd.f32 %v100, %v213
    %v215 = vpop.f32.mrf.mxu0
    %v216 = vadd.f32 %v100, %v215
    %217 = vdwg.mxu0
    %218 = vmatpush.bf16.msra.mxu0 0
    %219 = vmatpush.bf16.msra.mxu0 0
    %220 = vmatpush.bf16.msra.mxu0 0
    %221 = vmatpush.bf16.msra.mxu0 0
    %222 = vmatpush.bf16.msra.mxu0 0
    %223 = vmatpush.bf16.msra.mxu0 0
    %224 = vmatpush.bf16.msra.mxu0 0
    %225 = vmatpush.bf16.msra.mxu0 %v141
    %226 = vmatmul.bf16.gmra.mxu0 %v149
    %v227 = vpop.f32.mrf.mxu0
    %v228 = vadd.f32 %v101, %v227
    %v229 = vpop.f32.mrf.mxu0
    %v230 = vadd.f32 %v101, %v229
    %231 = vmatmul.bf16.gmra.mxu0 %v152
    %v232 = vpop.f32.mrf.mxu0
    %v233 = vadd.f32 %v101, %v232
    %v234 = vpop.f32.mrf.mxu0
    %v235 = vadd.f32 %v101, %v234
    %236 = vmatmul.bf16.gmra.mxu0 %v155
    %v237 = vpop.f32.mrf.mxu0
    %v238 = vadd.f32 %v101, %v237
    %v239 = vpop.f32.mrf.mxu0
    %v240 = vadd.f32 %v101, %v239
    %241 = vmatmul.bf16.gmra.mxu0 %v158
    %v242 = vpop.f32.mrf.mxu0
    %v243 = vadd.f32 %v101, %v242
    %v244 = vpop.f32.mrf.mxu0
    %v245 = vadd.f32 %v101, %v244
    %246 = vdwg.mxu0
    %247 = vmatpush.bf16.msra.mxu0 0
    %248 = vmatpush.bf16.msra.mxu0 0
    %249 = vmatpush.bf16.msra.mxu0 0
    %250 = vmatpush.bf16.msra.mxu0 0
    %251 = vmatpush.bf16.msra.mxu0 0
    %252 = vmatpush.bf16.msra.mxu0 0
    %253 = vmatpush.bf16.msra.mxu0 0
    %254 = vmatpush.bf16.msra.mxu0 %v142
    %255 = vmatmul.bf16.gmra.mxu0 %v149
    %v256 = vpop.f32.mrf.mxu0
    %v257 = vadd.f32 %v102, %v256
    %v258 = vpop.f32.mrf.mxu0
    %v259 = vadd.f32 %v102, %v258
    %260 = vmatmul.bf16.gmra.mxu0 %v152
    %v261 = vpop.f32.mrf.mxu0
    %v262 = vadd.f32 %v102, %v261
    %v263 = vpop.f32.mrf.mxu0
    %v264 = vadd.f32 %v102, %v263
    %265 = vmatmul.bf16.gmra.mxu0 %v155
    %v266 = vpop.f32.mrf.mxu0
    %v267 = vadd.f32 %v102, %v266
    %v268 = vpop.f32.mrf.mxu0
    %v269 = vadd.f32 %v102, %v268
    %270 = vmatmul.bf16.gmra.mxu0 %v158
    %v271 = vpop.f32.mrf.mxu0
    %v272 = vadd.f32 %v102, %v271
    %v273 = vpop.f32.mrf.mxu0
    %v274 = vadd.f32 %v102, %v273
    %275 = vdwg.mxu0
    %276 = vst [vmem:[#allocation2] sm:$0xff] %v170
    %277 = vst [vmem:[#allocation2 + $0x8] sm:$0xff] %v199
    %278 = vst [vmem:[#allocation2 + $0x10] sm:$0xff] %v228
    %279 = vst [vmem:[#allocation2 + $0x18] sm:$0xff] %v257
    %280 = vst [vmem:[#allocation2 + $0x20] sm:$0xff] %v172
    %281 = vst [vmem:[#allocation2 + $0x28] sm:$0xff] %v201
    %282 = vst [vmem:[#allocation2 + $0x30] sm:$0xff] %v230
    %283 = vst [vmem:[#allocation2 + $0x38] sm:$0xff] %v259
    %284 = vst [vmem:[#allocation2 + $0x40] sm:$0xff] %v175
    %285 = vst [vmem:[#allocation2 + $0x48] sm:$0xff] %v204
    %286 = vst [vmem:[#allocation2 + $0x50] sm:$0xff] %v233
    %287 = vst [vmem:[#allocation2 + $0x58] sm:$0xff] %v262
    %288 = vst [vmem:[#allocation2 + $0x60] sm:$0xff] %v177
    %289 = vst [vmem:[#allocation2 + $0x68] sm:$0xff] %v206
    %290 = vst [vmem:[#allocation2 + $0x70] sm:$0xff] %v235
    %291 = vst [vmem:[#allocation2 + $0x78] sm:$0xff] %v264
    %292 = vst [vmem:[#allocation2 + $0x80] sm:$0xff] %v180
    %293 = vst [vmem:[#allocation2 + $0x88] sm:$0xff] %v209
    %294 = vst [vmem:[#allocation2 + $0x90] sm:$0xff] %v238
    %295 = vst [vmem:[#allocation2 + $0x98] sm:$0xff] %v267
    %296 = vst [vmem:[#allocation2 + $0xa0] sm:$0xff] %v182
    %297 = vst [vmem:[#allocation2 + $0xa8] sm:$0xff] %v211
    %298 = vst [vmem:[#allocation2 + $0xb0] sm:$0xff] %v240
    %299 = vst [vmem:[#allocation2 + $0xb8] sm:$0xff] %v269
    %300 = vst [vmem:[#allocation2 + $0xc0] sm:$0xff] %v185
    %301 = vst [vmem:[#allocation2 + $0xc8] sm:$0xff] %v214
    %302 = vst [vmem:[#allocation2 + $0xd0] sm:$0xff] %v243
    %303 = vst [vmem:[#allocation2 + $0xd8] sm:$0xff] %v272
    %304 = vst [vmem:[#allocation2 + $0xe0] sm:$0xff] %v187
    %305 = vst [vmem:[#allocation2 + $0xe8] sm:$0xff] %v216
    %306 = vst [vmem:[#allocation2 + $0xf0] sm:$0xff] %v245
    %307 = vst [vmem:[#allocation2 + $0xf8] sm:$0xff] %v274
    %v308 = vld [vmem:[#allocation4] sm:$0xff]
    %v309 = vld [vmem:[#allocation4 + $0x8] sm:$0xff]
    %v310 = vld [vmem:[#allocation4 + $0x10] sm:$0xff]
    %v311 = vld [vmem:[#allocation4 + $0x18] sm:$0xff]
    %v312 = vld [vmem:[#allocation4 + $0x20] sm:$0xff]
    %v313 = vld [vmem:[#allocation4 + $0x28] sm:$0xff]
    %v314 = vld [vmem:[#allocation4 + $0x30] sm:$0xff]
    %v315 = vld [vmem:[#allocation4 + $0x38] sm:$0xff]
    %v316 = vld [vmem:[#allocation4 + $0x40] sm:$0xff]
    %v317 = vld [vmem:[#allocation4 + $0x48] sm:$0xff]
    %v318 = vld [vmem:[#allocation4 + $0x50] sm:$0xff]
    %v319 = vld [vmem:[#allocation4 + $0x58] sm:$0xff]
    %v320 = vld [vmem:[#allocation4 + $0x60] sm:$0xff]
    %v321 = vld [vmem:[#allocation4 + $0x68] sm:$0xff]
    %v322 = vld [vmem:[#allocation4 + $0x70] sm:$0xff]
    %v323 = vld [vmem:[#allocation4 + $0x78] sm:$0xff]
    %v324 = vld [vmem:[#allocation4 + $0x80] sm:$0xff]
    %v325 = vld [vmem:[#allocation4 + $0x88] sm:$0xff]
    %v326 = vld [vmem:[#allocation4 + $0x90] sm:$0xff]
    %v327 = vld [vmem:[#allocation4 + $0x98] sm:$0xff]
    %v328 = vld [vmem:[#allocation4 + $0xa0] sm:$0xff]
    %v329 = vld [vmem:[#allocation4 + $0xa8] sm:$0xff]
    %v330 = vld [vmem:[#allocation4 + $0xb0] sm:$0xff]
    %v331 = vld [vmem:[#allocation4 + $0xb8] sm:$0xff]
    %v332 = vld [vmem:[#allocation4 + $0xc0] sm:$0xff]
    %v333 = vld [vmem:[#allocation4 + $0xc8] sm:$0xff]
    %v334 = vld [vmem:[#allocation4 + $0xd0] sm:$0xff]
    %v335 = vld [vmem:[#allocation4 + $0xd8] sm:$0xff]
    %v336 = vld [vmem:[#allocation4 + $0xe0] sm:$0xff]
    %v337 = vld [vmem:[#allocation4 + $0xe8] sm:$0xff]
    %v338 = vld [vmem:[#allocation4 + $0xf0] sm:$0xff]
    %v339 = vld [vmem:[#allocation4 + $0xf8] sm:$0xff]
    %v340 = vld [vmem:[#allocation6] sm:$0xff]
    %v341 = vld [vmem:[#allocation6 + $0x8] sm:$0xff]
    %v342 = vld [vmem:[#allocation6 + $0x10] sm:$0xff]
    %v343 = vld [vmem:[#allocation6 + $0x18] sm:$0xff]
    %v344 = vld [vmem:[#allocation6 + $0x20] sm:$0xff]
    %v345 = vld [vmem:[#allocation6 + $0x28] sm:$0xff]
    %v346 = vld [vmem:[#allocation6 + $0x30] sm:$0xff]
    %v347 = vld [vmem:[#allocation6 + $0x38] sm:$0xff]
    %v348 = vld [vmem:[#allocation6 + $0x40] sm:$0xff]
    %v349 = vld [vmem:[#allocation6 + $0x48] sm:$0xff]
    %v350 = vld [vmem:[#allocation6 + $0x50] sm:$0xff]
    %v351 = vld [vmem:[#allocation6 + $0x58] sm:$0xff]
    %v352 = vld [vmem:[#allocation6 + $0x60] sm:$0xff]
    %v353 = vld [vmem:[#allocation6 + $0x68] sm:$0xff]
    %v354 = vld [vmem:[#allocation6 + $0x70] sm:$0xff]
    %v355 = vld [vmem:[#allocation6 + $0x78] sm:$0xff]
    %v356 = vld [vmem:[#allocation6 + $0x80] sm:$0xff]
    %v357 = vld [vmem:[#allocation6 + $0x88] sm:$0xff]
    %v358 = vld [vmem:[#allocation6 + $0x90] sm:$0xff]
    %v359 = vld [vmem:[#allocation6 + $0x98] sm:$0xff]
    %v360 = vld [vmem:[#allocation6 + $0xa0] sm:$0xff]
    %v361 = vld [vmem:[#allocation6 + $0xa8] sm:$0xff]
    %v362 = vld [vmem:[#allocation6 + $0xb0] sm:$0xff]
    %v363 = vld [vmem:[#allocation6 + $0xb8] sm:$0xff]
    %v364 = vld [vmem:[#allocation6 + $0xc0] sm:$0xff]
    %v365 = vld [vmem:[#allocation6 + $0xc8] sm:$0xff]
    %v366 = vld [vmem:[#allocation6 + $0xd0] sm:$0xff]
    %v367 = vld [vmem:[#allocation6 + $0xd8] sm:$0xff]
    %v368 = vld [vmem:[#allocation6 + $0xe0] sm:$0xff]
    %v369 = vld [vmem:[#allocation6 + $0xe8] sm:$0xff]
    %v370 = vld [vmem:[#allocation6 + $0xf0] sm:$0xff]
    %v371 = vld [vmem:[#allocation6 + $0xf8] sm:$0xff]
    %v372 = vld [vmem:[#allocation6 + $0x100] sm:$0xff]
    %v373 = vld [vmem:[#allocation6 + $0x108] sm:$0xff]
    %v374 = vld [vmem:[#allocation6 + $0x110] sm:$0xff]
    %v375 = vld [vmem:[#allocation6 + $0x118] sm:$0xff]
    %v376 = vld [vmem:[#allocation6 + $0x120] sm:$0xff]
    %v377 = vld [vmem:[#allocation6 + $0x128] sm:$0xff]
    %v378 = vld [vmem:[#allocation6 + $0x130] sm:$0xff]
    %v379 = vld [vmem:[#allocation6 + $0x138] sm:$0xff]
    %v380 = vld [vmem:[#allocation6 + $0x140] sm:$0xff]
    %v381 = vld [vmem:[#allocation6 + $0x148] sm:$0xff]
    %v382 = vld [vmem:[#allocation6 + $0x150] sm:$0xff]
    %v383 = vld [vmem:[#allocation6 + $0x158] sm:$0xff]
    %v384 = vld [vmem:[#allocation6 + $0x160] sm:$0xff]
    %v385 = vld [vmem:[#allocation6 + $0x168] sm:$0xff]
    %v386 = vld [vmem:[#allocation6 + $0x170] sm:$0xff]
    %v387 = vld [vmem:[#allocation6 + $0x178] sm:$0xff]
    %v388 = vld [vmem:[#allocation6 + $0x180] sm:$0xff]
    %v389 = vld [vmem:[#allocation6 + $0x188] sm:$0xff]
    %v390 = vld [vmem:[#allocation6 + $0x190] sm:$0xff]
    %v391 = vld [vmem:[#allocation6 + $0x198] sm:$0xff]
    %v392 = vld [vmem:[#allocation6 + $0x1a0] sm:$0xff]
    %v393 = vld [vmem:[#allocation6 + $0x1a8] sm:$0xff]
    %v394 = vld [vmem:[#allocation6 + $0x1b0] sm:$0xff]
    %v395 = vld [vmem:[#allocation6 + $0x1b8] sm:$0xff]
    %v396 = vld [vmem:[#allocation6 + $0x1c0] sm:$0xff]
    %v397 = vld [vmem:[#allocation6 + $0x1c8] sm:$0xff]
    %v398 = vld [vmem:[#allocation6 + $0x1d0] sm:$0xff]
    %v399 = vld [vmem:[#allocation6 + $0x1d8] sm:$0xff]
    %v400 = vld [vmem:[#allocation6 + $0x1e0] sm:$0xff]
    %v401 = vld [vmem:[#allocation6 + $0x1e8] sm:$0xff]
    %v402 = vld [vmem:[#allocation6 + $0x1f0] sm:$0xff]
    %v403 = vld [vmem:[#allocation6 + $0x1f8] sm:$0xff]
    %v404 = vld [vmem:[#allocation8] sm:$0xff]
    %v405 = vld [vmem:[#allocation8 + $0x8] sm:$0xff]
    %v406 = vld [vmem:[#allocation8 + $0x10] sm:$0xff]
    %v407 = vld [vmem:[#allocation8 + $0x18] sm:$0xff]
    %v408 = vld [vmem:[#allocation8 + $0x20] sm:$0xff]
    %v409 = vld [vmem:[#allocation8 + $0x28] sm:$0xff]
    %v410 = vld [vmem:[#allocation8 + $0x30] sm:$0xff]
    %v411 = vld [vmem:[#allocation8 + $0x38] sm:$0xff]
    %v412 = vld [vmem:[#allocation8 + $0x40] sm:$0xff]
    %v413 = vld [vmem:[#allocation8 + $0x48] sm:$0xff]
    %v414 = vld [vmem:[#allocation8 + $0x50] sm:$0xff]
    %v415 = vld [vmem:[#allocation8 + $0x58] sm:$0xff]
    %v416 = vld [vmem:[#allocation8 + $0x60] sm:$0xff]
    %v417 = vld [vmem:[#allocation8 + $0x68] sm:$0xff]
    %v418 = vld [vmem:[#allocation8 + $0x70] sm:$0xff]
    %v419 = vld [vmem:[#allocation8 + $0x78] sm:$0xff]
    %v420 = vld [vmem:[#allocation8 + $0x80] sm:$0xff]
    %v421 = vld [vmem:[#allocation8 + $0x88] sm:$0xff]
    %v422 = vld [vmem:[#allocation8 + $0x90] sm:$0xff]
    %v423 = vld [vmem:[#allocation8 + $0x98] sm:$0xff]
    %v424 = vld [vmem:[#allocation8 + $0xa0] sm:$0xff]
    %v425 = vld [vmem:[#allocation8 + $0xa8] sm:$0xff]
    %v426 = vld [vmem:[#allocation8 + $0xb0] sm:$0xff]
    %v427 = vld [vmem:[#allocation8 + $0xb8] sm:$0xff]
    %v428 = vld [vmem:[#allocation8 + $0xc0] sm:$0xff]
    %v429 = vld [vmem:[#allocation8 + $0xc8] sm:$0xff]
    %v430 = vld [vmem:[#allocation8 + $0xd0] sm:$0xff]
    %v431 = vld [vmem:[#allocation8 + $0xd8] sm:$0xff]
    %v432 = vld [vmem:[#allocation8 + $0xe0] sm:$0xff]
    %v433 = vld [vmem:[#allocation8 + $0xe8] sm:$0xff]
    %v434 = vld [vmem:[#allocation8 + $0xf0] sm:$0xff]
    %v435 = vld [vmem:[#allocation8 + $0xf8] sm:$0xff]
    %v436 = vld [vmem:[#allocation8 + $0x100] sm:$0xff]
    %v437 = vld [vmem:[#allocation8 + $0x108] sm:$0xff]
    %v438 = vld [vmem:[#allocation8 + $0x110] sm:$0xff]
    %v439 = vld [vmem:[#allocation8 + $0x118] sm:$0xff]
    %v440 = vld [vmem:[#allocation8 + $0x120] sm:$0xff]
    %v441 = vld [vmem:[#allocation8 + $0x128] sm:$0xff]
    %v442 = vld [vmem:[#allocation8 + $0x130] sm:$0xff]
    %v443 = vld [vmem:[#allocation8 + $0x138] sm:$0xff]
    %v444 = vld [vmem:[#allocation8 + $0x140] sm:$0xff]
    %v445 = vld [vmem:[#allocation8 + $0x148] sm:$0xff]
    %v446 = vld [vmem:[#allocation8 + $0x150] sm:$0xff]
    %v447 = vld [vmem:[#allocation8 + $0x158] sm:$0xff]
    %v448 = vld [vmem:[#allocation8 + $0x160] sm:$0xff]
    %v449 = vld [vmem:[#allocation8 + $0x168] sm:$0xff]
    %v450 = vld [vmem:[#allocation8 + $0x170] sm:$0xff]
    %v451 = vld [vmem:[#allocation8 + $0x178] sm:$0xff]
    %v452 = vld [vmem:[#allocation8 + $0x180] sm:$0xff]
    %v453 = vld [vmem:[#allocation8 + $0x188] sm:$0xff]
    %v454 = vld [vmem:[#allocation8 + $0x190] sm:$0xff]
    %v455 = vld [vmem:[#allocation8 + $0x198] sm:$0xff]
    %v456 = vld [vmem:[#allocation8 + $0x1a0] sm:$0xff]
    %v457 = vld [vmem:[#allocation8 + $0x1a8] sm:$0xff]
    %v458 = vld [vmem:[#allocation8 + $0x1b0] sm:$0xff]
    %v459 = vld [vmem:[#allocation8 + $0x1b8] sm:$0xff]
    %v460 = vld [vmem:[#allocation8 + $0x1c0] sm:$0xff]
    %v461 = vld [vmem:[#allocation8 + $0x1c8] sm:$0xff]
    %v462 = vld [vmem:[#allocation8 + $0x1d0] sm:$0xff]
    %v463 = vld [vmem:[#allocation8 + $0x1d8] sm:$0xff]
    %v464 = vld [vmem:[#allocation8 + $0x1e0] sm:$0xff]
    %v465 = vld [vmem:[#allocation8 + $0x1e8] sm:$0xff]
    %v466 = vld [vmem:[#allocation8 + $0x1f0] sm:$0xff]
    %v467 = vld [vmem:[#allocation8 + $0x1f8] sm:$0xff]
    %v468 = vld [vmem:[%s5] sm:$0xf]
    %v470 = vperm.slane %v468, 0
    %v471 = vperm.slane %v468, 1
    %v472 = vperm.slane %v468, 2
    %v473 = vperm.slane %v468, 3
    %v478 = vld [vmem:[%s7] sm:$0xf]
    %v480 = vperm.slane %v478, 0
    %v481 = vperm.slane %v478, 1
    %v482 = vperm.slane %v478, 2
    %v483 = vperm.slane %v478, 3
    %v488 = vld [vmem:[#allocation2] sm:$0xff]
    %v489 = vld [vmem:[#allocation2 + $0x8] sm:$0xff]
    %v490 = vld [vmem:[#allocation2 + $0x10] sm:$0xff]
    %v491 = vld [vmem:[#allocation2 + $0x18] sm:$0xff]
    %v524 = vunpack.c.l.b16 %v308
    %v525 = vunpack.c.h.b16 %v308
    %v526 = vunpack.c.l.b16 %v309
    %v527 = vunpack.c.h.b16 %v309
    %v528 = vunpack.c.l.b16 %v310
    %v529 = vunpack.c.h.b16 %v310
    %v530 = vunpack.c.l.b16 %v311
    %v531 = vunpack.c.h.b16 %v311
    %v532 = vunpack.c.l.b16 %v312
    %v533 = vunpack.c.h.b16 %v312
    %v534 = vunpack.c.l.b16 %v313
    %v535 = vunpack.c.h.b16 %v313
    %v536 = vunpack.c.l.b16 %v314
    %v537 = vunpack.c.h.b16 %v314
    %v538 = vunpack.c.l.b16 %v315
    %v539 = vunpack.c.h.b16 %v315
    %v540 = vunpack.c.l.b16 %v316
    %v541 = vunpack.c.h.b16 %v316
    %v542 = vunpack.c.l.b16 %v317
    %v543 = vunpack.c.h.b16 %v317
    %v544 = vunpack.c.l.b16 %v318
    %v545 = vunpack.c.h.b16 %v318
    %v546 = vunpack.c.l.b16 %v319
    %v547 = vunpack.c.h.b16 %v319
    %v548 = vunpack.c.l.b16 %v320
    %v549 = vunpack.c.h.b16 %v320
    %v550 = vunpack.c.l.b16 %v321
    %v551 = vunpack.c.h.b16 %v321
    %v552 = vunpack.c.l.b16 %v322
    %v553 = vunpack.c.h.b16 %v322
    %v554 = vunpack.c.l.b16 %v323
    %v555 = vunpack.c.h.b16 %v323
    %v556 = vunpack.c.l.b16 %v324
    %v557 = vunpack.c.h.b16 %v324
    %v558 = vunpack.c.l.b16 %v325
    %v559 = vunpack.c.h.b16 %v325
    %v560 = vunpack.c.l.b16 %v326
    %v561 = vunpack.c.h.b16 %v326
    %v562 = vunpack.c.l.b16 %v327
    %v563 = vunpack.c.h.b16 %v327
    %v564 = vunpack.c.l.b16 %v328
    %v565 = vunpack.c.h.b16 %v328
    %v566 = vunpack.c.l.b16 %v329
    %v567 = vunpack.c.h.b16 %v329
    %v568 = vunpack.c.l.b16 %v330
    %v569 = vunpack.c.h.b16 %v330
    %v570 = vunpack.c.l.b16 %v331
    %v571 = vunpack.c.h.b16 %v331
    %v572 = vunpack.c.l.b16 %v332
    %v573 = vunpack.c.h.b16 %v332
    %v574 = vunpack.c.l.b16 %v333
    %v575 = vunpack.c.h.b16 %v333
    %v576 = vunpack.c.l.b16 %v334
    %v577 = vunpack.c.h.b16 %v334
    %v578 = vunpack.c.l.b16 %v335
    %v579 = vunpack.c.h.b16 %v335
    %v580 = vunpack.c.l.b16 %v336
    %v581 = vunpack.c.h.b16 %v336
    %v582 = vunpack.c.l.b16 %v337
    %v583 = vunpack.c.h.b16 %v337
    %v584 = vunpack.c.l.b16 %v338
    %v585 = vunpack.c.h.b16 %v338
    %v586 = vunpack.c.l.b16 %v339
    %v587 = vunpack.c.h.b16 %v339
    %v588 = vpack.c.b16 %v528, %v524
    %v589 = vpack.c.b16 %v529, %v525
    %v590 = vpack.c.b16 %v530, %v526
    %v591 = vpack.c.b16 %v531, %v527
    %v592 = vpack.c.b16 %v536, %v532
    %v593 = vpack.c.b16 %v537, %v533
    %v594 = vpack.c.b16 %v538, %v534
    %v595 = vpack.c.b16 %v539, %v535
    %v596 = vpack.c.b16 %v544, %v540
    %v597 = vpack.c.b16 %v545, %v541
    %v598 = vpack.c.b16 %v546, %v542
    %v599 = vpack.c.b16 %v547, %v543
    %v600 = vpack.c.b16 %v552, %v548
    %v601 = vpack.c.b16 %v553, %v549
    %v602 = vpack.c.b16 %v554, %v550
    %v603 = vpack.c.b16 %v555, %v551
    %v604 = vpack.c.b16 %v560, %v556
    %v605 = vpack.c.b16 %v561, %v557
    %v606 = vpack.c.b16 %v562, %v558
    %v607 = vpack.c.b16 %v563, %v559
    %v608 = vpack.c.b16 %v568, %v564
    %v609 = vpack.c.b16 %v569, %v565
    %v610 = vpack.c.b16 %v570, %v566
    %v611 = vpack.c.b16 %v571, %v567
    %v612 = vpack.c.b16 %v576, %v572
    %v613 = vpack.c.b16 %v577, %v573
    %v614 = vpack.c.b16 %v578, %v574
    %v615 = vpack.c.b16 %v579, %v575
    %v616 = vpack.c.b16 %v584, %v580
    %v617 = vpack.c.b16 %v585, %v581
    %v618 = vpack.c.b16 %v586, %v582
    %v619 = vpack.c.b16 %v587, %v583
    %652 = vmatpush.bf16.msra.mxu0 %v616
    %653 = vmatpush.bf16.msra.mxu0 %v612
    %654 = vmatpush.bf16.msra.mxu0 %v608
    %655 = vmatpush.bf16.msra.mxu0 %v604
    %656 = vmatpush.bf16.msra.mxu0 %v600
    %657 = vmatpush.bf16.msra.mxu0 %v596
    %658 = vmatpush.bf16.msra.mxu0 %v592
    %659 = vmatpush.bf16.msra.mxu0 %v588
    %660 = vmatmul.bf16.gmra.mxu0 0
    %v661 = vpop.f32.mrf.mxu0
    %v662 = vadd.f32 0.0, %v661
    %v663 = vpop.f32.mrf.mxu0
    %664 = vdwg.mxu0
    %665 = vmatpush.bf16.msra.mxu0 %v617
    %666 = vmatpush.bf16.msra.mxu0 %v613
    %667 = vmatpush.bf16.msra.mxu0 %v609
    %668 = vmatpush.bf16.msra.mxu0 %v605
    %669 = vmatpush.bf16.msra.mxu0 %v601
    %670 = vmatpush.bf16.msra.mxu0 %v597
    %671 = vmatpush.bf16.msra.mxu0 %v593
    %672 = vmatpush.bf16.msra.mxu0 %v589
    %673 = vmatmul.bf16.gmra.mxu0 0
    %v674 = vpop.f32.mrf.mxu0
    %v675 = vadd.f32 0.0, %v674
    %v676 = vpop.f32.mrf.mxu0
    %677 = vdwg.mxu0
    %678 = vmatpush.bf16.msra.mxu0 %v618
    %679 = vmatpush.bf16.msra.mxu0 %v614
    %680 = vmatpush.bf16.msra.mxu0 %v610
    %681 = vmatpush.bf16.msra.mxu0 %v606
    %682 = vmatpush.bf16.msra.mxu0 %v602
    %683 = vmatpush.bf16.msra.mxu0 %v598
    %684 = vmatpush.bf16.msra.mxu0 %v594
    %685 = vmatpush.bf16.msra.mxu0 %v590
    %686 = vmatmul.bf16.gmra.mxu0 0
    %v687 = vpop.f32.mrf.mxu0
    %v688 = vadd.f32 0.0, %v687
    %v689 = vpop.f32.mrf.mxu0
    %690 = vdwg.mxu0
    %691 = vmatpush.bf16.msra.mxu0 %v619
    %692 = vmatpush.bf16.msra.mxu0 %v615
    %693 = vmatpush.bf16.msra.mxu0 %v611
    %694 = vmatpush.bf16.msra.mxu0 %v607
    %695 = vmatpush.bf16.msra.mxu0 %v603
    %696 = vmatpush.bf16.msra.mxu0 %v599
    %697 = vmatpush.bf16.msra.mxu0 %v595
    %698 = vmatpush.bf16.msra.mxu0 %v591
    %699 = vmatmul.bf16.gmra.mxu0 0
    %v700 = vpop.f32.mrf.mxu0
    %v701 = vadd.f32 0.0, %v700
    %v702 = vpop.f32.mrf.mxu0
    %703 = vdwg.mxu0
    %v704 = vadd.f32 %v488, %v662
    %v705 = vadd.f32 %v489, %v675
    %v706 = vadd.f32 %v490, %v688
    %v707 = vadd.f32 %v491, %v701
    %v708 = vxor.u32 %v704, 2147483648
    %v709 = vmul.f32 %v708, 1.442695
    %v710 = vpow.pop %v709
    %v711 = vadd.f32 %v710, 1.0
    %v712 = vrcp.pop %v711
    %v713 = vmul.f32 %v711, %v712
    %v714 = vsub.f32 1.0, %v713
    %v715 = vmul.f32 %v712, %v714
    %v716 = vadd.f32 %v712, %v715
    %vm717 = vweird.f32 %v711
    %vm718 = vweird.f32 %v712
    %vm719 = vmor %vm717, %vm718
    %v720 = vsel %vm719, %v712, %v716
    %v721 = vand.u32 2147483647, %v711
    %vm722 = vcmp.eq.f32.partialorder %v721, 8.507059e+37
    %v723 = vand.u32 %v711, 2147483648
    %v724 = vor.u32 1.1754944e-38, %v723
    %v725 = vsel %vm722, %v724, %v720
    %v726 = vmul.f32 1.0, %v725
    %v727 = vxor.u32 %v705, 2147483648
    %v728 = vmul.f32 %v727, 1.442695
    %v729 = vpow.pop %v728
    %v730 = vadd.f32 %v729, 1.0
    %v731 = vrcp.pop %v730
    %v732 = vmul.f32 %v730, %v731
    %v733 = vsub.f32 1.0, %v732
    %v734 = vmul.f32 %v731, %v733
    %v735 = vadd.f32 %v731, %v734
    %vm736 = vweird.f32 %v730
    %vm737 = vweird.f32 %v731
    %vm738 = vmor %vm736, %vm737
    %v739 = vsel %vm738, %v731, %v735
    %v740 = vand.u32 2147483647, %v730
    %vm741 = vcmp.eq.f32.partialorder %v740, 8.507059e+37
    %v742 = vand.u32 %v730, 2147483648
    %v743 = vor.u32 1.1754944e-38, %v742
    %v744 = vsel %vm741, %v743, %v739
    %v745 = vmul.f32 1.0, %v744
    %v746 = vtanh.pop %v706
    %v747 = vxor.u32 %v707, 2147483648
    %v748 = vmul.f32 %v747, 1.442695
    %v749 = vpow.pop %v748
    %v750 = vadd.f32 %v749, 1.0
    %v751 = vrcp.pop %v750
    %v752 = vmul.f32 %v750, %v751
    %v753 = vsub.f32 1.0, %v752
    %v754 = vmul.f32 %v751, %v753
    %v755 = vadd.f32 %v751, %v754
    %vm756 = vweird.f32 %v750
    %vm757 = vweird.f32 %v751
    %vm758 = vmor %vm756, %vm757
    %v759 = vsel %vm758, %v751, %v755
    %v760 = vand.u32 2147483647, %v750
    %vm761 = vcmp.eq.f32.partialorder %v760, 8.507059e+37
    %v762 = vand.u32 %v750, 2147483648
    %v763 = vor.u32 1.1754944e-38, %v762
    %v764 = vsel %vm761, %v763, %v759
    %v765 = vmul.f32 1.0, %v764
    %v766 = vmul.f32 %v745, 0.0
    %v767 = vmul.f32 %v726, %v746
    %v768 = vadd.f32 %v766, %v767
    %v769 = vtanh.pop %v768
    %v770 = vmul.f32 %v765, %v769
    %v771 = vld [vmem:[#allocation2 + $0x20] sm:$0xff]
    %v772 = vld [vmem:[#allocation2 + $0x28] sm:$0xff]
    %v773 = vld [vmem:[#allocation2 + $0x30] sm:$0xff]
    %v774 = vld [vmem:[#allocation2 + $0x38] sm:$0xff]
    %v775 = vpack.c.bf16 %v770, %v770
    %776 = vmatpush.bf16.msra.mxu0 %v616
    %777 = vmatpush.bf16.msra.mxu0 %v612
    %778 = vmatpush.bf16.msra.mxu0 %v608
    %779 = vmatpush.bf16.msra.mxu0 %v604
    %780 = vmatpush.bf16.msra.mxu0 %v600
    %781 = vmatpush.bf16.msra.mxu0 %v596
    %782 = vmatpush.bf16.msra.mxu0 %v592
    %783 = vmatpush.bf16.msra.mxu0 %v588
    %784 = vmatmul.bf16.gmra.mxu0 %v775
    %v785 = vpop.f32.mrf.mxu0
    %v786 = vadd.f32 0.0, %v785
    %v787 = vpop.f32.mrf.mxu0
    %788 = vdwg.mxu0
    %789 = vmatpush.bf16.msra.mxu0 %v617
    %790 = vmatpush.bf16.msra.mxu0 %v613
    %791 = vmatpush.bf16.msra.mxu0 %v609
    %792 = vmatpush.bf16.msra.mxu0 %v605
    %793 = vmatpush.bf16.msra.mxu0 %v601
    %794 = vmatpush.bf16.msra.mxu0 %v597
    %795 = vmatpush.bf16.msra.mxu0 %v593
    %796 = vmatpush.bf16.msra.mxu0 %v589
    %797 = vmatmul.bf16.gmra.mxu0 %v775
    %v798 = vpop.f32.mrf.mxu0
    %v799 = vadd.f32 0.0, %v798
    %v800 = vpop.f32.mrf.mxu0
    %801 = vdwg.mxu0
    %802 = vmatpush.bf16.msra.mxu0 %v618
    %803 = vmatpush.bf16.msra.mxu0 %v614
    %804 = vmatpush.bf16.msra.mxu0 %v610
    %805 = vmatpush.bf16.msra.mxu0 %v606
    %806 = vmatpush.bf16.msra.mxu0 %v602
    %807 = vmatpush.bf16.msra.mxu0 %v598
    %808 = vmatpush.bf16.msra.mxu0 %v594
    %809 = vmatpush.bf16.msra.mxu0 %v590
    %810 = vmatmul.bf16.gmra.mxu0 %v775
    %v811 = vpop.f32.mrf.mxu0
    %v812 = vadd.f32 0.0, %v811
    %v813 = vpop.f32.mrf.mxu0
    %814 = vdwg.mxu0
    %815 = vmatpush.bf16.msra.mxu0 %v619
    %816 = vmatpush.bf16.msra.mxu0 %v615
    %817 = vmatpush.bf16.msra.mxu0 %v611
    %818 = vmatpush.bf16.msra.mxu0 %v607
    %819 = vmatpush.bf16.msra.mxu0 %v603
    %820 = vmatpush.bf16.msra.mxu0 %v599
    %821 = vmatpush.bf16.msra.mxu0 %v595
    %822 = vmatpush.bf16.msra.mxu0 %v591
    %823 = vmatmul.bf16.gmra.mxu0 %v775
    %v824 = vpop.f32.mrf.mxu0
    %v825 = vadd.f32 0.0, %v824
    %v826 = vpop.f32.mrf.mxu0
    %827 = vdwg.mxu0
    %v828 = vadd.f32 %v771, %v786
    %v829 = vadd.f32 %v772, %v799
    %v830 = vadd.f32 %v773, %v812
    %v831 = vadd.f32 %v774, %v825
    %v832 = vxor.u32 %v828, 2147483648
    %v833 = vmul.f32 %v832, 1.442695
    %v834 = vpow.pop %v833
    %v835 = vadd.f32 %v834, 1.0
    %v836 = vrcp.pop %v835
    %v837 = vmul.f32 %v835, %v836
    %v838 = vsub.f32 1.0, %v837
    %v839 = vmul.f32 %v836, %v838
    %v840 = vadd.f32 %v836, %v839
    %vm841 = vweird.f32 %v835
    %vm842 = vweird.f32 %v836
    %vm843 = vmor %vm841, %vm842
    %v844 = vsel %vm843, %v836, %v840
    %v845 = vand.u32 2147483647, %v835
    %vm846 = vcmp.eq.f32.partialorder %v845, 8.507059e+37
    %v847 = vand.u32 %v835, 2147483648
    %v848 = vor.u32 1.1754944e-38, %v847
    %v849 = vsel %vm846, %v848, %v844
    %v850 = vmul.f32 1.0, %v849
    %v851 = vxor.u32 %v829, 2147483648
    %v852 = vmul.f32 %v851, 1.442695
    %v853 = vpow.pop %v852
    %v854 = vadd.f32 %v853, 1.0
    %v855 = vrcp.pop %v854
    %v856 = vmul.f32 %v854, %v855
    %v857 = vsub.f32 1.0, %v856
    %v858 = vmul.f32 %v855, %v857
    %v859 = vadd.f32 %v855, %v858
    %vm860 = vweird.f32 %v854
    %vm861 = vweird.f32 %v855
    %vm862 = vmor %vm860, %vm861
    %v863 = vsel %vm862, %v855, %v859
    %v864 = vand.u32 2147483647, %v854
    %vm865 = vcmp.eq.f32.partialorder %v864, 8.507059e+37
    %v866 = vand.u32 %v854, 2147483648
    %v867 = vor.u32 1.1754944e-38, %v866
    %v868 = vsel %vm865, %v867, %v863
    %v869 = vmul.f32 1.0, %v868
    %v870 = vtanh.pop %v830
    %v871 = vxor.u32 %v831, 2147483648
    %v872 = vmul.f32 %v871, 1.442695
    %v873 = vpow.pop %v872
    %v874 = vadd.f32 %v873, 1.0
    %v875 = vrcp.pop %v874
    %v876 = vmul.f32 %v874, %v875
    %v877 = vsub.f32 1.0, %v876
    %v878 = vmul.f32 %v875, %v877
    %v879 = vadd.f32 %v875, %v878
    %vm880 = vweird.f32 %v874
    %vm881 = vweird.f32 %v875
    %vm882 = vmor %vm880, %vm881
    %v883 = vsel %vm882, %v875, %v879
    %v884 = vand.u32 2147483647, %v874
    %vm885 = vcmp.eq.f32.partialorder %v884, 8.507059e+37
    %v886 = vand.u32 %v874, 2147483648
    %v887 = vor.u32 1.1754944e-38, %v886
    %v888 = vsel %vm885, %v887, %v883
    %v889 = vmul.f32 1.0, %v888
    %v890 = vmul.f32 %v869, %v768
    %v891 = vmul.f32 %v850, %v870
    %v892 = vadd.f32 %v890, %v891
    %v893 = vtanh.pop %v892
    %v894 = vmul.f32 %v889, %v893
    %v895 = vpack.c.bf16 0.0, 0.0
    %v960 = vunpack.c.l.b16 %v340
    %v961 = vunpack.c.h.b16 %v340
    %v962 = vunpack.c.l.b16 %v341
    %v963 = vunpack.c.h.b16 %v341
    %v964 = vunpack.c.l.b16 %v342
    %v965 = vunpack.c.h.b16 %v342
    %v966 = vunpack.c.l.b16 %v343
    %v967 = vunpack.c.h.b16 %v343
    %v968 = vunpack.c.l.b16 %v344
    %v969 = vunpack.c.h.b16 %v344
    %v970 = vunpack.c.l.b16 %v345
    %v971 = vunpack.c.h.b16 %v345
    %v972 = vunpack.c.l.b16 %v346
    %v973 = vunpack.c.h.b16 %v346
    %v974 = vunpack.c.l.b16 %v347
    %v975 = vunpack.c.h.b16 %v347
    %v976 = vunpack.c.l.b16 %v348
    %v977 = vunpack.c.h.b16 %v348
    %v978 = vunpack.c.l.b16 %v349
    %v979 = vunpack.c.h.b16 %v349
    %v980 = vunpack.c.l.b16 %v350
    %v981 = vunpack.c.h.b16 %v350
    %v982 = vunpack.c.l.b16 %v351
    %v983 = vunpack.c.h.b16 %v351
    %v984 = vunpack.c.l.b16 %v352
    %v985 = vunpack.c.h.b16 %v352
    %v986 = vunpack.c.l.b16 %v353
    %v987 = vunpack.c.h.b16 %v353
    %v988 = vunpack.c.l.b16 %v354
    %v989 = vunpack.c.h.b16 %v354
    %v990 = vunpack.c.l.b16 %v355
    %v991 = vunpack.c.h.b16 %v355
    %v992 = vunpack.c.l.b16 %v356
    %v993 = vunpack.c.h.b16 %v356
    %v994 = vunpack.c.l.b16 %v357
    %v995 = vunpack.c.h.b16 %v357
    %v996 = vunpack.c.l.b16 %v358
    %v997 = vunpack.c.h.b16 %v358
    %v998 = vunpack.c.l.b16 %v359
    %v999 = vunpack.c.h.b16 %v359
    %v1000 = vunpack.c.l.b16 %v360
    %v1001 = vunpack.c.h.b16 %v360
    %v1002 = vunpack.c.l.b16 %v361
    %v1003 = vunpack.c.h.b16 %v361
    %v1004 = vunpack.c.l.b16 %v362
    %v1005 = vunpack.c.h.b16 %v362
    %v1006 = vunpack.c.l.b16 %v363
    %v1007 = vunpack.c.h.b16 %v363
    %v1008 = vunpack.c.l.b16 %v364
    %v1009 = vunpack.c.h.b16 %v364
    %v1010 = vunpack.c.l.b16 %v365
    %v1011 = vunpack.c.h.b16 %v365
    %v1012 = vunpack.c.l.b16 %v366
    %v1013 = vunpack.c.h.b16 %v366
    %v1014 = vunpack.c.l.b16 %v367
    %v1015 = vunpack.c.h.b16 %v367
    %v1016 = vunpack.c.l.b16 %v368
    %v1017 = vunpack.c.h.b16 %v368
    %v1018 = vunpack.c.l.b16 %v369
    %v1019 = vunpack.c.h.b16 %v369
    %v1020 = vunpack.c.l.b16 %v370
    %v1021 = vunpack.c.h.b16 %v370
    %v1022 = vunpack.c.l.b16 %v371
    %v1023 = vunpack.c.h.b16 %v371
    %v1024 = vunpack.c.l.b16 %v372
    %v1025 = vunpack.c.h.b16 %v372
    %v1026 = vunpack.c.l.b16 %v373
    %v1027 = vunpack.c.h.b16 %v373
    %v1028 = vunpack.c.l.b16 %v374
    %v1029 = vunpack.c.h.b16 %v374
    %v1030 = vunpack.c.l.b16 %v375
    %v1031 = vunpack.c.h.b16 %v375
    %v1032 = vunpack.c.l.b16 %v376
    %v1033 = vunpack.c.h.b16 %v376
    %v1034 = vunpack.c.l.b16 %v377
    %v1035 = vunpack.c.h.b16 %v377
    %v1036 = vunpack.c.l.b16 %v378
    %v1037 = vunpack.c.h.b16 %v378
    %v1038 = vunpack.c.l.b16 %v379
    %v1039 = vunpack.c.h.b16 %v379
    %v1040 = vunpack.c.l.b16 %v380
    %v1041 = vunpack.c.h.b16 %v380
    %v1042 = vunpack.c.l.b16 %v381
    %v1043 = vunpack.c.h.b16 %v381
    %v1044 = vunpack.c.l.b16 %v382
    %v1045 = vunpack.c.h.b16 %v382
    %v1046 = vunpack.c.l.b16 %v383
    %v1047 = vunpack.c.h.b16 %v383
    %v1048 = vunpack.c.l.b16 %v384
    %v1049 = vunpack.c.h.b16 %v384
    %v1050 = vunpack.c.l.b16 %v385
    %v1051 = vunpack.c.h.b16 %v385
    %v1052 = vunpack.c.l.b16 %v386
    %v1053 = vunpack.c.h.b16 %v386
    %v1054 = vunpack.c.l.b16 %v387
    %v1055 = vunpack.c.h.b16 %v387
    %v1056 = vunpack.c.l.b16 %v388
    %v1057 = vunpack.c.h.b16 %v388
    %v1058 = vunpack.c.l.b16 %v389
    %v1059 = vunpack.c.h.b16 %v389
    %v1060 = vunpack.c.l.b16 %v390
    %v1061 = vunpack.c.h.b16 %v390
    %v1062 = vunpack.c.l.b16 %v391
    %v1063 = vunpack.c.h.b16 %v391
    %v1064 = vunpack.c.l.b16 %v392
    %v1065 = vunpack.c.h.b16 %v392
    %v1066 = vunpack.c.l.b16 %v393
    %v1067 = vunpack.c.h.b16 %v393
    %v1068 = vunpack.c.l.b16 %v394
    %v1069 = vunpack.c.h.b16 %v394
    %v1070 = vunpack.c.l.b16 %v395
    %v1071 = vunpack.c.h.b16 %v395
    %v1072 = vunpack.c.l.b16 %v396
    %v1073 = vunpack.c.h.b16 %v396
    %v1074 = vunpack.c.l.b16 %v397
    %v1075 = vunpack.c.h.b16 %v397
    %v1076 = vunpack.c.l.b16 %v398
    %v1077 = vunpack.c.h.b16 %v398
    %v1078 = vunpack.c.l.b16 %v399
    %v1079 = vunpack.c.h.b16 %v399
    %v1080 = vunpack.c.l.b16 %v400
    %v1081 = vunpack.c.h.b16 %v400
    %v1082 = vunpack.c.l.b16 %v401
    %v1083 = vunpack.c.h.b16 %v401
    %v1084 = vunpack.c.l.b16 %v402
    %v1085 = vunpack.c.h.b16 %v402
    %v1086 = vunpack.c.l.b16 %v403
    %v1087 = vunpack.c.h.b16 %v403
    %v1088 = vpack.c.b16 %v964, %v960
    %v1089 = vpack.c.b16 %v965, %v961
    %v1090 = vpack.c.b16 %v966, %v962
    %v1091 = vpack.c.b16 %v967, %v963
    %v1092 = vpack.c.b16 %v972, %v968
    %v1093 = vpack.c.b16 %v973, %v969
    %v1094 = vpack.c.b16 %v974, %v970
    %v1095 = vpack.c.b16 %v975, %v971
    %v1096 = vpack.c.b16 %v980, %v976
    %v1097 = vpack.c.b16 %v981, %v977
    %v1098 = vpack.c.b16 %v982, %v978
    %v1099 = vpack.c.b16 %v983, %v979
    %v1100 = vpack.c.b16 %v988, %v984
    %v1101 = vpack.c.b16 %v989, %v985
    %v1102 = vpack.c.b16 %v990, %v986
    %v1103 = vpack.c.b16 %v991, %v987
    %v1104 = vpack.c.b16 %v996, %v992
    %v1105 = vpack.c.b16 %v997, %v993
    %v1106 = vpack.c.b16 %v998, %v994
    %v1107 = vpack.c.b16 %v999, %v995
    %v1108 = vpack.c.b16 %v1004, %v1000
    %v1109 = vpack.c.b16 %v1005, %v1001
    %v1110 = vpack.c.b16 %v1006, %v1002
    %v1111 = vpack.c.b16 %v1007, %v1003
    %v1112 = vpack.c.b16 %v1012, %v1008
    %v1113 = vpack.c.b16 %v1013, %v1009
    %v1114 = vpack.c.b16 %v1014, %v1010
    %v1115 = vpack.c.b16 %v1015, %v1011
    %v1116 = vpack.c.b16 %v1020, %v1016
    %v1117 = vpack.c.b16 %v1021, %v1017
    %v1118 = vpack.c.b16 %v1022, %v1018
    %v1119 = vpack.c.b16 %v1023, %v1019
    %v1120 = vpack.c.b16 %v1028, %v1024
    %v1121 = vpack.c.b16 %v1029, %v1025
    %v1122 = vpack.c.b16 %v1030, %v1026
    %v1123 = vpack.c.b16 %v1031, %v1027
    %v1124 = vpack.c.b16 %v1036, %v1032
    %v1125 = vpack.c.b16 %v1037, %v1033
    %v1126 = vpack.c.b16 %v1038, %v1034
    %v1127 = vpack.c.b16 %v1039, %v1035
    %v1128 = vpack.c.b16 %v1044, %v1040
    %v1129 = vpack.c.b16 %v1045, %v1041
    %v1130 = vpack.c.b16 %v1046, %v1042
    %v1131 = vpack.c.b16 %v1047, %v1043
    %v1132 = vpack.c.b16 %v1052, %v1048
    %v1133 = vpack.c.b16 %v1053, %v1049
    %v1134 = vpack.c.b16 %v1054, %v1050
    %v1135 = vpack.c.b16 %v1055, %v1051
    %v1136 = vpack.c.b16 %v1060, %v1056
    %v1137 = vpack.c.b16 %v1061, %v1057
    %v1138 = vpack.c.b16 %v1062, %v1058
    %v1139 = vpack.c.b16 %v1063, %v1059
    %v1140 = vpack.c.b16 %v1068, %v1064
    %v1141 = vpack.c.b16 %v1069, %v1065
    %v1142 = vpack.c.b16 %v1070, %v1066
    %v1143 = vpack.c.b16 %v1071, %v1067
    %v1144 = vpack.c.b16 %v1076, %v1072
    %v1145 = vpack.c.b16 %v1077, %v1073
    %v1146 = vpack.c.b16 %v1078, %v1074
    %v1147 = vpack.c.b16 %v1079, %v1075
    %v1148 = vpack.c.b16 %v1084, %v1080
    %v1149 = vpack.c.b16 %v1085, %v1081
    %v1150 = vpack.c.b16 %v1086, %v1082
    %v1151 = vpack.c.b16 %v1087, %v1083
    %1216 = vmatpush.bf16.msra.mxu0 %v1116
    %1217 = vmatpush.bf16.msra.mxu0 %v1112
    %1218 = vmatpush.bf16.msra.mxu0 %v1108
    %1219 = vmatpush.bf16.msra.mxu0 %v1104
    %1220 = vmatpush.bf16.msra.mxu0 %v1100
    %1221 = vmatpush.bf16.msra.mxu0 %v1096
    %1222 = vmatpush.bf16.msra.mxu0 %v1092
    %1223 = vmatpush.bf16.msra.mxu0 %v1088
    %1224 = vmatmul.bf16.gmra.mxu0 %v775
    %v1225 = vpop.f32.mrf.mxu0
    %v1226 = vadd.f32 %v470, %v1225
    %v1227 = vpop.f32.mrf.mxu0
    %1228 = vdwg.mxu0
    %1229 = vmatpush.bf16.msra.mxu0 %v1148
    %1230 = vmatpush.bf16.msra.mxu0 %v1144
    %1231 = vmatpush.bf16.msra.mxu0 %v1140
    %1232 = vmatpush.bf16.msra.mxu0 %v1136
    %1233 = vmatpush.bf16.msra.mxu0 %v1132
    %1234 = vmatpush.bf16.msra.mxu0 %v1128
    %1235 = vmatpush.bf16.msra.mxu0 %v1124
    %1236 = vmatpush.bf16.msra.mxu0 %v1120
    %1237 = vmatmul.bf16.gmra.mxu0 %v895
    %v1238 = vpop.f32.mrf.mxu0
    %v1239 = vadd.f32 %v1226, %v1238
    %v1240 = vpop.f32.mrf.mxu0
    %1241 = vdwg.mxu0
    %1242 = vmatpush.bf16.msra.mxu0 %v1117
    %1243 = vmatpush.bf16.msra.mxu0 %v1113
    %1244 = vmatpush.bf16.msra.mxu0 %v1109
    %1245 = vmatpush.bf16.msra.mxu0 %v1105
    %1246 = vmatpush.bf16.msra.mxu0 %v1101
    %1247 = vmatpush.bf16.msra.mxu0 %v1097
    %1248 = vmatpush.bf16.msra.mxu0 %v1093
    %1249 = vmatpush.bf16.msra.mxu0 %v1089
    %1250 = vmatmul.bf16.gmra.mxu0 %v775
    %v1251 = vpop.f32.mrf.mxu0
    %v1252 = vadd.f32 %v471, %v1251
    %v1253 = vpop.f32.mrf.mxu0
    %1254 = vdwg.mxu0
    %1255 = vmatpush.bf16.msra.mxu0 %v1149
    %1256 = vmatpush.bf16.msra.mxu0 %v1145
    %1257 = vmatpush.bf16.msra.mxu0 %v1141
    %1258 = vmatpush.bf16.msra.mxu0 %v1137
    %1259 = vmatpush.bf16.msra.mxu0 %v1133
    %1260 = vmatpush.bf16.msra.mxu0 %v1129
    %1261 = vmatpush.bf16.msra.mxu0 %v1125
    %1262 = vmatpush.bf16.msra.mxu0 %v1121
    %1263 = vmatmul.bf16.gmra.mxu0 %v895
    %v1264 = vpop.f32.mrf.mxu0
    %v1265 = vadd.f32 %v1252, %v1264
    %v1266 = vpop.f32.mrf.mxu0
    %1267 = vdwg.mxu0
    %1268 = vmatpush.bf16.msra.mxu0 %v1118
    %1269 = vmatpush.bf16.msra.mxu0 %v1114
    %1270 = vmatpush.bf16.msra.mxu0 %v1110
    %1271 = vmatpush.bf16.msra.mxu0 %v1106
    %1272 = vmatpush.bf16.msra.mxu0 %v1102
    %1273 = vmatpush.bf16.msra.mxu0 %v1098
    %1274 = vmatpush.bf16.msra.mxu0 %v1094
    %1275 = vmatpush.bf16.msra.mxu0 %v1090
    %1276 = vmatmul.bf16.gmra.mxu0 %v775
    %v1277 = vpop.f32.mrf.mxu0
    %v1278 = vadd.f32 %v472, %v1277
    %v1279 = vpop.f32.mrf.mxu0
    %1280 = vdwg.mxu0
    %1281 = vmatpush.bf16.msra.mxu0 %v1150
    %1282 = vmatpush.bf16.msra.mxu0 %v1146
    %1283 = vmatpush.bf16.msra.mxu0 %v1142
    %1284 = vmatpush.bf16.msra.mxu0 %v1138
    %1285 = vmatpush.bf16.msra.mxu0 %v1134
    %1286 = vmatpush.bf16.msra.mxu0 %v1130
    %1287 = vmatpush.bf16.msra.mxu0 %v1126
    %1288 = vmatpush.bf16.msra.mxu0 %v1122
    %1289 = vmatmul.bf16.gmra.mxu0 %v895
    %v1290 = vpop.f32.mrf.mxu0
    %v1291 = vadd.f32 %v1278, %v1290
    %v1292 = vpop.f32.mrf.mxu0
    %1293 = vdwg.mxu0
    %1294 = vmatpush.bf16.msra.mxu0 %v1119
    %1295 = vmatpush.bf16.msra.mxu0 %v1115
    %1296 = vmatpush.bf16.msra.mxu0 %v1111
    %1297 = vmatpush.bf16.msra.mxu0 %v1107
    %1298 = vmatpush.bf16.msra.mxu0 %v1103
    %1299 = vmatpush.bf16.msra.mxu0 %v1099
    %1300 = vmatpush.bf16.msra.mxu0 %v1095
    %1301 = vmatpush.bf16.msra.mxu0 %v1091
    %1302 = vmatmul.bf16.gmra.mxu0 %v775
    %v1303 = vpop.f32.mrf.mxu0
    %v1304 = vadd.f32 %v473, %v1303
    %v1305 = vpop.f32.mrf.mxu0
    %1306 = vdwg.mxu0
    %1307 = vmatpush.bf16.msra.mxu0 %v1151
    %1308 = vmatpush.bf16.msra.mxu0 %v1147
    %1309 = vmatpush.bf16.msra.mxu0 %v1143
    %1310 = vmatpush.bf16.msra.mxu0 %v1139
    %1311 = vmatpush.bf16.msra.mxu0 %v1135
    %1312 = vmatpush.bf16.msra.mxu0 %v1131
    %1313 = vmatpush.bf16.msra.mxu0 %v1127
    %1314 = vmatpush.bf16.msra.mxu0 %v1123
    %1315 = vmatmul.bf16.gmra.mxu0 %v895
    %v1316 = vpop.f32.mrf.mxu0
    %v1317 = vadd.f32 %v1304, %v1316
    %v1318 = vpop.f32.mrf.mxu0
    %1319 = vdwg.mxu0
    %v1320 = vxor.u32 %v1239, 2147483648
    %v1321 = vmul.f32 %v1320, 1.442695
    %v1322 = vpow.pop %v1321
    %v1323 = vadd.f32 %v1322, 1.0
    %v1324 = vrcp.pop %v1323
    %v1325 = vmul.f32 %v1323, %v1324
    %v1326 = vsub.f32 1.0, %v1325
    %v1327 = vmul.f32 %v1324, %v1326
    %v1328 = vadd.f32 %v1324, %v1327
    %vm1329 = vweird.f32 %v1323
    %vm1330 = vweird.f32 %v1324
    %vm1331 = vmor %vm1329, %vm1330
    %v1332 = vsel %vm1331, %v1324, %v1328
    %v1333 = vand.u32 2147483647, %v1323
    %vm1334 = vcmp.eq.f32.partialorder %v1333, 8.507059e+37
    %v1335 = vand.u32 %v1323, 2147483648
    %v1336 = vor.u32 1.1754944e-38, %v1335
    %v1337 = vsel %vm1334, %v1336, %v1332
    %v1338 = vmul.f32 1.0, %v1337
    %v1339 = vxor.u32 %v1265, 2147483648
    %v1340 = vmul.f32 %v1339, 1.442695
    %v1341 = vpow.pop %v1340
    %v1342 = vadd.f32 %v1341, 1.0
    %v1343 = vrcp.pop %v1342
    %v1344 = vmul.f32 %v1342, %v1343
    %v1345 = vsub.f32 1.0, %v1344
    %v1346 = vmul.f32 %v1343, %v1345
    %v1347 = vadd.f32 %v1343, %v1346
    %vm1348 = vweird.f32 %v1342
    %vm1349 = vweird.f32 %v1343
    %vm1350 = vmor %vm1348, %vm1349
    %v1351 = vsel %vm1350, %v1343, %v1347
    %v1352 = vand.u32 2147483647, %v1342
    %vm1353 = vcmp.eq.f32.partialorder %v1352, 8.507059e+37
    %v1354 = vand.u32 %v1342, 2147483648
    %v1355 = vor.u32 1.1754944e-38, %v1354
    %v1356 = vsel %vm1353, %v1355, %v1351
    %v1357 = vmul.f32 1.0, %v1356
    %v1358 = vtanh.pop %v1291
    %v1359 = vxor.u32 %v1317, 2147483648
    %v1360 = vmul.f32 %v1359, 1.442695
    %v1361 = vpow.pop %v1360
    %v1362 = vadd.f32 %v1361, 1.0
    %v1363 = vrcp.pop %v1362
    %v1364 = vmul.f32 %v1362, %v1363
    %v1365 = vsub.f32 1.0, %v1364
    %v1366 = vmul.f32 %v1363, %v1365
    %v1367 = vadd.f32 %v1363, %v1366
    %vm1368 = vweird.f32 %v1362
    %vm1369 = vweird.f32 %v1363
    %vm1370 = vmor %vm1368, %vm1369
    %v1371 = vsel %vm1370, %v1363, %v1367
    %v1372 = vand.u32 2147483647, %v1362
    %vm1373 = vcmp.eq.f32.partialorder %v1372, 8.507059e+37
    %v1374 = vand.u32 %v1362, 2147483648
    %v1375 = vor.u32 1.1754944e-38, %v1374
    %v1376 = vsel %vm1373, %v1375, %v1371
    %v1377 = vmul.f32 1.0, %v1376
    %v1378 = vmul.f32 %v1357, 0.0
    %v1379 = vmul.f32 %v1338, %v1358
    %v1380 = vadd.f32 %v1378, %v1379
    %v1381 = vtanh.pop %v1380
    %v1382 = vmul.f32 %v1377, %v1381
    %v1383 = vld [vmem:[#allocation2 + $0x40] sm:$0xff]
    %v1384 = vld [vmem:[#allocation2 + $0x48] sm:$0xff]
    %v1385 = vld [vmem:[#allocation2 + $0x50] sm:$0xff]
    %v1386 = vld [vmem:[#allocation2 + $0x58] sm:$0xff]
    %v1387 = vpack.c.bf16 %v894, %v894
    %1388 = vmatpush.bf16.msra.mxu0 %v616
    %1389 = vmatpush.bf16.msra.mxu0 %v612
    %1390 = vmatpush.bf16.msra.mxu0 %v608
    %1391 = vmatpush.bf16.msra.mxu0 %v604
    %1392 = vmatpush.bf16.msra.mxu0 %v600
    %1393 = vmatpush.bf16.msra.mxu0 %v596
    %1394 = vmatpush.bf16.msra.mxu0 %v592
    %1395 = vmatpush.bf16.msra.mxu0 %v588
    %1396 = vmatmul.bf16.gmra.mxu0 %v1387
    %v1397 = vpop.f32.mrf.mxu0
    %v1398 = vadd.f32 0.0, %v1397
    %v1399 = vpop.f32.mrf.mxu0
    %1400 = vdwg.mxu0
    %1401 = vmatpush.bf16.msra.mxu0 %v617
    %1402 = vmatpush.bf16.msra.mxu0 %v613
    %1403 = vmatpush.bf16.msra.mxu0 %v609
    %1404 = vmatpush.bf16.msra.mxu0 %v605
    %1405 = vmatpush.bf16.msra.mxu0 %v601
    %1406 = vmatpush.bf16.msra.mxu0 %v597
    %1407 = vmatpush.bf16.msra.mxu0 %v593
    %1408 = vmatpush.bf16.msra.mxu0 %v589
    %1409 = vmatmul.bf16.gmra.mxu0 %v1387
    %v1410 = vpop.f32.mrf.mxu0
    %v1411 = vadd.f32 0.0, %v1410
    %v1412 = vpop.f32.mrf.mxu0
    %1413 = vdwg.mxu0
    %1414 = vmatpush.bf16.msra.mxu0 %v618
    %1415 = vmatpush.bf16.msra.mxu0 %v614
    %1416 = vmatpush.bf16.msra.mxu0 %v610
    %1417 = vmatpush.bf16.msra.mxu0 %v606
    %1418 = vmatpush.bf16.msra.mxu0 %v602
    %1419 = vmatpush.bf16.msra.mxu0 %v598
    %1420 = vmatpush.bf16.msra.mxu0 %v594
    %1421 = vmatpush.bf16.msra.mxu0 %v590
    %1422 = vmatmul.bf16.gmra.mxu0 %v1387
    %v1423 = vpop.f32.mrf.mxu0
    %v1424 = vadd.f32 0.0, %v1423
    %v1425 = vpop.f32.mrf.mxu0
    %1426 = vdwg.mxu0
    %1427 = vmatpush.bf16.msra.mxu0 %v619
    %1428 = vmatpush.bf16.msra.mxu0 %v615
    %1429 = vmatpush.bf16.msra.mxu0 %v611
    %1430 = vmatpush.bf16.msra.mxu0 %v607
    %1431 = vmatpush.bf16.msra.mxu0 %v603
    %1432 = vmatpush.bf16.msra.mxu0 %v599
    %1433 = vmatpush.bf16.msra.mxu0 %v595
    %1434 = vmatpush.bf16.msra.mxu0 %v591
    %1435 = vmatmul.bf16.gmra.mxu0 %v1387
    %v1436 = vpop.f32.mrf.mxu0
    %v1437 = vadd.f32 0.0, %v1436
    %v1438 = vpop.f32.mrf.mxu0
    %1439 = vdwg.mxu0
    %v1440 = vadd.f32 %v1383, %v1398
    %v1441 = vadd.f32 %v1384, %v1411
    %v1442 = vadd.f32 %v1385, %v1424
    %v1443 = vadd.f32 %v1386, %v1437
    %v1444 = vxor.u32 %v1440, 2147483648
    %v1445 = vmul.f32 %v1444, 1.442695
    %v1446 = vpow.pop %v1445
    %v1447 = vadd.f32 %v1446, 1.0
    %v1448 = vrcp.pop %v1447
    %v1449 = vmul.f32 %v1447, %v1448
    %v1450 = vsub.f32 1.0, %v1449
    %v1451 = vmul.f32 %v1448, %v1450
    %v1452 = vadd.f32 %v1448, %v1451
    %vm1453 = vweird.f32 %v1447
    %vm1454 = vweird.f32 %v1448
    %vm1455 = vmor %vm1453, %vm1454
    %v1456 = vsel %vm1455, %v1448, %v1452
    %v1457 = vand.u32 2147483647, %v1447
    %vm1458 = vcmp.eq.f32.partialorder %v1457, 8.507059e+37
    %v1459 = vand.u32 %v1447, 2147483648
    %v1460 = vor.u32 1.1754944e-38, %v1459
    %v1461 = vsel %vm1458, %v1460, %v1456
    %v1462 = vmul.f32 1.0, %v1461
    %v1463 = vxor.u32 %v1441, 2147483648
    %v1464 = vmul.f32 %v1463, 1.442695
    %v1465 = vpow.pop %v1464
    %v1466 = vadd.f32 %v1465, 1.0
    %v1467 = vrcp.pop %v1466
    %v1468 = vmul.f32 %v1466, %v1467
    %v1469 = vsub.f32 1.0, %v1468
    %v1470 = vmul.f32 %v1467, %v1469
    %v1471 = vadd.f32 %v1467, %v1470
    %vm1472 = vweird.f32 %v1466
    %vm1473 = vweird.f32 %v1467
    %vm1474 = vmor %vm1472, %vm1473
    %v1475 = vsel %vm1474, %v1467, %v1471
    %v1476 = vand.u32 2147483647, %v1466
    %vm1477 = vcmp.eq.f32.partialorder %v1476, 8.507059e+37
    %v1478 = vand.u32 %v1466, 2147483648
    %v1479 = vor.u32 1.1754944e-38, %v1478
    %v1480 = vsel %vm1477, %v1479, %v1475
    %v1481 = vmul.f32 1.0, %v1480
    %v1482 = vtanh.pop %v1442
    %v1483 = vxor.u32 %v1443, 2147483648
    %v1484 = vmul.f32 %v1483, 1.442695
    %v1485 = vpow.pop %v1484
    %v1486 = vadd.f32 %v1485, 1.0
    %v1487 = vrcp.pop %v1486
    %v1488 = vmul.f32 %v1486, %v1487
    %v1489 = vsub.f32 1.0, %v1488
    %v1490 = vmul.f32 %v1487, %v1489
    %v1491 = vadd.f32 %v1487, %v1490
    %vm1492 = vweird.f32 %v1486
    %vm1493 = vweird.f32 %v1487
    %vm1494 = vmor %vm1492, %vm1493
    %v1495 = vsel %vm1494, %v1487, %v1491
    %v1496 = vand.u32 2147483647, %v1486
    %vm1497 = vcmp.eq.f32.partialorder %v1496, 8.507059e+37
    %v1498 = vand.u32 %v1486, 2147483648
    %v1499 = vor.u32 1.1754944e-38, %v1498
    %v1500 = vsel %vm1497, %v1499, %v1495
    %v1501 = vmul.f32 1.0, %v1500
    %v1502 = vmul.f32 %v1481, %v892
    %v1503 = vmul.f32 %v1462, %v1482
    %v1504 = vadd.f32 %v1502, %v1503
    %v1505 = vtanh.pop %v1504
    %v1506 = vmul.f32 %v1501, %v1505
    %v1507 = vpack.c.bf16 %v1382, %v1382
    %1508 = vmatpush.bf16.msra.mxu0 %v1116
    %1509 = vmatpush.bf16.msra.mxu0 %v1112
    %1510 = vmatpush.bf16.msra.mxu0 %v1108
    %1511 = vmatpush.bf16.msra.mxu0 %v1104
    %1512 = vmatpush.bf16.msra.mxu0 %v1100
    %1513 = vmatpush.bf16.msra.mxu0 %v1096
    %1514 = vmatpush.bf16.msra.mxu0 %v1092
    %1515 = vmatpush.bf16.msra.mxu0 %v1088
    %1516 = vmatmul.bf16.gmra.mxu0 %v1387
    %v1517 = vpop.f32.mrf.mxu0
    %v1518 = vadd.f32 %v470, %v1517
    %v1519 = vpop.f32.mrf.mxu0
    %1520 = vdwg.mxu0
    %1521 = vmatpush.bf16.msra.mxu0 %v1148
    %1522 = vmatpush.bf16.msra.mxu0 %v1144
    %1523 = vmatpush.bf16.msra.mxu0 %v1140
    %1524 = vmatpush.bf16.msra.mxu0 %v1136
    %1525 = vmatpush.bf16.msra.mxu0 %v1132
    %1526 = vmatpush.bf16.msra.mxu0 %v1128
    %1527 = vmatpush.bf16.msra.mxu0 %v1124
    %1528 = vmatpush.bf16.msra.mxu0 %v1120
    %1529 = vmatmul.bf16.gmra.mxu0 %v1507
    %v1530 = vpop.f32.mrf.mxu0
    %v1531 = vadd.f32 %v1518, %v1530
    %v1532 = vpop.f32.mrf.mxu0
    %1533 = vdwg.mxu0
    %1534 = vmatpush.bf16.msra.mxu0 %v1117
    %1535 = vmatpush.bf16.msra.mxu0 %v1113
    %1536 = vmatpush.bf16.msra.mxu0 %v1109
    %1537 = vmatpush.bf16.msra.mxu0 %v1105
    %1538 = vmatpush.bf16.msra.mxu0 %v1101
    %1539 = vmatpush.bf16.msra.mxu0 %v1097
    %1540 = vmatpush.bf16.msra.mxu0 %v1093
    %1541 = vmatpush.bf16.msra.mxu0 %v1089
    %1542 = vmatmul.bf16.gmra.mxu0 %v1387
    %v1543 = vpop.f32.mrf.mxu0
    %v1544 = vadd.f32 %v471, %v1543
    %v1545 = vpop.f32.mrf.mxu0
    %1546 = vdwg.mxu0
    %1547 = vmatpush.bf16.msra.mxu0 %v1149
    %1548 = vmatpush.bf16.msra.mxu0 %v1145
    %1549 = vmatpush.bf16.msra.mxu0 %v1141
    %1550 = vmatpush.bf16.msra.mxu0 %v1137
    %1551 = vmatpush.bf16.msra.mxu0 %v1133
    %1552 = vmatpush.bf16.msra.mxu0 %v1129
    %1553 = vmatpush.bf16.msra.mxu0 %v1125
    %1554 = vmatpush.bf16.msra.mxu0 %v1121
    %1555 = vmatmul.bf16.gmra.mxu0 %v1507
    %v1556 = vpop.f32.mrf.mxu0
    %v1557 = vadd.f32 %v1544, %v1556
    %v1558 = vpop.f32.mrf.mxu0
    %1559 = vdwg.mxu0
    %1560 = vmatpush.bf16.msra.mxu0 %v1118
    %1561 = vmatpush.bf16.msra.mxu0 %v1114
    %1562 = vmatpush.bf16.msra.mxu0 %v1110
    %1563 = vmatpush.bf16.msra.mxu0 %v1106
    %1564 = vmatpush.bf16.msra.mxu0 %v1102
    %1565 = vmatpush.bf16.msra.mxu0 %v1098
    %1566 = vmatpush.bf16.msra.mxu0 %v1094
    %1567 = vmatpush.bf16.msra.mxu0 %v1090
    %1568 = vmatmul.bf16.gmra.mxu0 %v1387
    %v1569 = vpop.f32.mrf.mxu0
    %v1570 = vadd.f32 %v472, %v1569
    %v1571 = vpop.f32.mrf.mxu0
    %1572 = vdwg.mxu0
    %1573 = vmatpush.bf16.msra.mxu0 %v1150
    %1574 = vmatpush.bf16.msra.mxu0 %v1146
    %1575 = vmatpush.bf16.msra.mxu0 %v1142
    %1576 = vmatpush.bf16.msra.mxu0 %v1138
    %1577 = vmatpush.bf16.msra.mxu0 %v1134
    %1578 = vmatpush.bf16.msra.mxu0 %v1130
    %1579 = vmatpush.bf16.msra.mxu0 %v1126
    %1580 = vmatpush.bf16.msra.mxu0 %v1122
    %1581 = vmatmul.bf16.gmra.mxu0 %v1507
    %v1582 = vpop.f32.mrf.mxu0
    %v1583 = vadd.f32 %v1570, %v1582
    %v1584 = vpop.f32.mrf.mxu0
    %1585 = vdwg.mxu0
    %1586 = vmatpush.bf16.msra.mxu0 %v1119
    %1587 = vmatpush.bf16.msra.mxu0 %v1115
    %1588 = vmatpush.bf16.msra.mxu0 %v1111
    %1589 = vmatpush.bf16.msra.mxu0 %v1107
    %1590 = vmatpush.bf16.msra.mxu0 %v1103
    %1591 = vmatpush.bf16.msra.mxu0 %v1099
    %1592 = vmatpush.bf16.msra.mxu0 %v1095
    %1593 = vmatpush.bf16.msra.mxu0 %v1091
    %1594 = vmatmul.bf16.gmra.mxu0 %v1387
    %v1595 = vpop.f32.mrf.mxu0
    %v1596 = vadd.f32 %v473, %v1595
    %v1597 = vpop.f32.mrf.mxu0
    %1598 = vdwg.mxu0
    %1599 = vmatpush.bf16.msra.mxu0 %v1151
    %1600 = vmatpush.bf16.msra.mxu0 %v1147
    %1601 = vmatpush.bf16.msra.mxu0 %v1143
    %1602 = vmatpush.bf16.msra.mxu0 %v1139
    %1603 = vmatpush.bf16.msra.mxu0 %v1135
    %1604 = vmatpush.bf16.msra.mxu0 %v1131
    %1605 = vmatpush.bf16.msra.mxu0 %v1127
    %1606 = vmatpush.bf16.msra.mxu0 %v1123
    %1607 = vmatmul.bf16.gmra.mxu0 %v1507
    %v1608 = vpop.f32.mrf.mxu0
    %v1609 = vadd.f32 %v1596, %v1608
    %v1610 = vpop.f32.mrf.mxu0
    %1611 = vdwg.mxu0
    %v1612 = vxor.u32 %v1531, 2147483648
    %v1613 = vmul.f32 %v1612, 1.442695
    %v1614 = vpow.pop %v1613
    %v1615 = vadd.f32 %v1614, 1.0
    %v1616 = vrcp.pop %v1615
    %v1617 = vmul.f32 %v1615, %v1616
    %v1618 = vsub.f32 1.0, %v1617
    %v1619 = vmul.f32 %v1616, %v1618
    %v1620 = vadd.f32 %v1616, %v1619
    %vm1621 = vweird.f32 %v1615
    %vm1622 = vweird.f32 %v1616
    %vm1623 = vmor %vm1621, %vm1622
    %v1624 = vsel %vm1623, %v1616, %v1620
    %v1625 = vand.u32 2147483647, %v1615
    %vm1626 = vcmp.eq.f32.partialorder %v1625, 8.507059e+37
    %v1627 = vand.u32 %v1615, 2147483648
    %v1628 = vor.u32 1.1754944e-38, %v1627
    %v1629 = vsel %vm1626, %v1628, %v1624
    %v1630 = vmul.f32 1.0, %v1629
    %v1631 = vxor.u32 %v1557, 2147483648
    %v1632 = vmul.f32 %v1631, 1.442695
    %v1633 = vpow.pop %v1632
    %v1634 = vadd.f32 %v1633, 1.0
    %v1635 = vrcp.pop %v1634
    %v1636 = vmul.f32 %v1634, %v1635
    %v1637 = vsub.f32 1.0, %v1636
    %v1638 = vmul.f32 %v1635, %v1637
    %v1639 = vadd.f32 %v1635, %v1638
    %vm1640 = vweird.f32 %v1634
    %vm1641 = vweird.f32 %v1635
    %vm1642 = vmor %vm1640, %vm1641
    %v1643 = vsel %vm1642, %v1635, %v1639
    %v1644 = vand.u32 2147483647, %v1634
    %vm1645 = vcmp.eq.f32.partialorder %v1644, 8.507059e+37
    %v1646 = vand.u32 %v1634, 2147483648
    %v1647 = vor.u32 1.1754944e-38, %v1646
    %v1648 = vsel %vm1645, %v1647, %v1643
    %v1649 = vmul.f32 1.0, %v1648
    %v1650 = vtanh.pop %v1583
    %v1651 = vxor.u32 %v1609, 2147483648
    %v1652 = vmul.f32 %v1651, 1.442695
    %v1653 = vpow.pop %v1652
    %v1654 = vadd.f32 %v1653, 1.0
    %v1655 = vrcp.pop %v1654
    %v1656 = vmul.f32 %v1654, %v1655
    %v1657 = vsub.f32 1.0, %v1656
    %v1658 = vmul.f32 %v1655, %v1657
    %v1659 = vadd.f32 %v1655, %v1658
    %vm1660 = vweird.f32 %v1654
    %vm1661 = vweird.f32 %v1655
    %vm1662 = vmor %vm1660, %vm1661
    %v1663 = vsel %vm1662, %v1655, %v1659
    %v1664 = vand.u32 2147483647, %v1654
    %vm1665 = vcmp.eq.f32.partialorder %v1664, 8.507059e+37
    %v1666 = vand.u32 %v1654, 2147483648
    %v1667 = vor.u32 1.1754944e-38, %v1666
    %v1668 = vsel %vm1665, %v1667, %v1663
    %v1669 = vmul.f32 1.0, %v1668
    %v1670 = vmul.f32 %v1649, %v1380
    %v1671 = vmul.f32 %v1630, %v1650
    %v1672 = vadd.f32 %v1670, %v1671
    %v1673 = vtanh.pop %v1672
    %v1674 = vmul.f32 %v1669, %v1673
    %v1739 = vunpack.c.l.b16 %v404
    %v1740 = vunpack.c.h.b16 %v404
    %v1741 = vunpack.c.l.b16 %v405
    %v1742 = vunpack.c.h.b16 %v405
    %v1743 = vunpack.c.l.b16 %v406
    %v1744 = vunpack.c.h.b16 %v406
    %v1745 = vunpack.c.l.b16 %v407
    %v1746 = vunpack.c.h.b16 %v407
    %v1747 = vunpack.c.l.b16 %v408
    %v1748 = vunpack.c.h.b16 %v408
    %v1749 = vunpack.c.l.b16 %v409
    %v1750 = vunpack.c.h.b16 %v409
    %v1751 = vunpack.c.l.b16 %v410
    %v1752 = vunpack.c.h.b16 %v410
    %v1753 = vunpack.c.l.b16 %v411
    %v1754 = vunpack.c.h.b16 %v411
    %v1755 = vunpack.c.l.b16 %v412
    %v1756 = vunpack.c.h.b16 %v412
    %v1757 = vunpack.c.l.b16 %v413
    %v1758 = vunpack.c.h.b16 %v413
    %v1759 = vunpack.c.l.b16 %v414
    %v1760 = vunpack.c.h.b16 %v414
    %v1761 = vunpack.c.l.b16 %v415
    %v1762 = vunpack.c.h.b16 %v415
    %v1763 = vunpack.c.l.b16 %v416
    %v1764 = vunpack.c.h.b16 %v416
    %v1765 = vunpack.c.l.b16 %v417
    %v1766 = vunpack.c.h.b16 %v417
    %v1767 = vunpack.c.l.b16 %v418
    %v1768 = vunpack.c.h.b16 %v418
    %v1769 = vunpack.c.l.b16 %v419
    %v1770 = vunpack.c.h.b16 %v419
    %v1771 = vunpack.c.l.b16 %v420
    %v1772 = vunpack.c.h.b16 %v420
    %v1773 = vunpack.c.l.b16 %v421
    %v1774 = vunpack.c.h.b16 %v421
    %v1775 = vunpack.c.l.b16 %v422
    %v1776 = vunpack.c.h.b16 %v422
    %v1777 = vunpack.c.l.b16 %v423
    %v1778 = vunpack.c.h.b16 %v423
    %v1779 = vunpack.c.l.b16 %v424
    %v1780 = vunpack.c.h.b16 %v424
    %v1781 = vunpack.c.l.b16 %v425
    %v1782 = vunpack.c.h.b16 %v425
    %v1783 = vunpack.c.l.b16 %v426
    %v1784 = vunpack.c.h.b16 %v426
    %v1785 = vunpack.c.l.b16 %v427
    %v1786 = vunpack.c.h.b16 %v427
    %v1787 = vunpack.c.l.b16 %v428
    %v1788 = vunpack.c.h.b16 %v428
    %v1789 = vunpack.c.l.b16 %v429
    %v1790 = vunpack.c.h.b16 %v429
    %v1791 = vunpack.c.l.b16 %v430
    %v1792 = vunpack.c.h.b16 %v430
    %v1793 = vunpack.c.l.b16 %v431
    %v1794 = vunpack.c.h.b16 %v431
    %v1795 = vunpack.c.l.b16 %v432
    %v1796 = vunpack.c.h.b16 %v432
    %v1797 = vunpack.c.l.b16 %v433
    %v1798 = vunpack.c.h.b16 %v433
    %v1799 = vunpack.c.l.b16 %v434
    %v1800 = vunpack.c.h.b16 %v434
    %v1801 = vunpack.c.l.b16 %v435
    %v1802 = vunpack.c.h.b16 %v435
    %v1803 = vunpack.c.l.b16 %v436
    %v1804 = vunpack.c.h.b16 %v436
    %v1805 = vunpack.c.l.b16 %v437
    %v1806 = vunpack.c.h.b16 %v437
    %v1807 = vunpack.c.l.b16 %v438
    %v1808 = vunpack.c.h.b16 %v438
    %v1809 = vunpack.c.l.b16 %v439
    %v1810 = vunpack.c.h.b16 %v439
    %v1811 = vunpack.c.l.b16 %v440
    %v1812 = vunpack.c.h.b16 %v440
    %v1813 = vunpack.c.l.b16 %v441
    %v1814 = vunpack.c.h.b16 %v441
    %v1815 = vunpack.c.l.b16 %v442
    %v1816 = vunpack.c.h.b16 %v442
    %v1817 = vunpack.c.l.b16 %v443
    %v1818 = vunpack.c.h.b16 %v443
    %v1819 = vunpack.c.l.b16 %v444
    %v1820 = vunpack.c.h.b16 %v444
    %v1821 = vunpack.c.l.b16 %v445
    %v1822 = vunpack.c.h.b16 %v445
    %v1823 = vunpack.c.l.b16 %v446
    %v1824 = vunpack.c.h.b16 %v446
    %v1825 = vunpack.c.l.b16 %v447
    %v1826 = vunpack.c.h.b16 %v447
    %v1827 = vunpack.c.l.b16 %v448
    %v1828 = vunpack.c.h.b16 %v448
    %v1829 = vunpack.c.l.b16 %v449
    %v1830 = vunpack.c.h.b16 %v449
    %v1831 = vunpack.c.l.b16 %v450
    %v1832 = vunpack.c.h.b16 %v450
    %v1833 = vunpack.c.l.b16 %v451
    %v1834 = vunpack.c.h.b16 %v451
    %v1835 = vunpack.c.l.b16 %v452
    %v1836 = vunpack.c.h.b16 %v452
    %v1837 = vunpack.c.l.b16 %v453
    %v1838 = vunpack.c.h.b16 %v453
    %v1839 = vunpack.c.l.b16 %v454
    %v1840 = vunpack.c.h.b16 %v454
    %v1841 = vunpack.c.l.b16 %v455
    %v1842 = vunpack.c.h.b16 %v455
    %v1843 = vunpack.c.l.b16 %v456
    %v1844 = vunpack.c.h.b16 %v456
    %v1845 = vunpack.c.l.b16 %v457
    %v1846 = vunpack.c.h.b16 %v457
    %v1847 = vunpack.c.l.b16 %v458
    %v1848 = vunpack.c.h.b16 %v458
    %v1849 = vunpack.c.l.b16 %v459
    %v1850 = vunpack.c.h.b16 %v459
    %v1851 = vunpack.c.l.b16 %v460
    %v1852 = vunpack.c.h.b16 %v460
    %v1853 = vunpack.c.l.b16 %v461
    %v1854 = vunpack.c.h.b16 %v461
    %v1855 = vunpack.c.l.b16 %v462
    %v1856 = vunpack.c.h.b16 %v462
    %v1857 = vunpack.c.l.b16 %v463
    %v1858 = vunpack.c.h.b16 %v463
    %v1859 = vunpack.c.l.b16 %v464
    %v1860 = vunpack.c.h.b16 %v464
    %v1861 = vunpack.c.l.b16 %v465
    %v1862 = vunpack.c.h.b16 %v465
    %v1863 = vunpack.c.l.b16 %v466
    %v1864 = vunpack.c.h.b16 %v466
    %v1865 = vunpack.c.l.b16 %v467
    %v1866 = vunpack.c.h.b16 %v467
    %v1867 = vpack.c.b16 %v1743, %v1739
    %v1868 = vpack.c.b16 %v1744, %v1740
    %v1869 = vpack.c.b16 %v1745, %v1741
    %v1870 = vpack.c.b16 %v1746, %v1742
    %v1871 = vpack.c.b16 %v1751, %v1747
    %v1872 = vpack.c.b16 %v1752, %v1748
    %v1873 = vpack.c.b16 %v1753, %v1749
    %v1874 = vpack.c.b16 %v1754, %v1750
    %v1875 = vpack.c.b16 %v1759, %v1755
    %v1876 = vpack.c.b16 %v1760, %v1756
    %v1877 = vpack.c.b16 %v1761, %v1757
    %v1878 = vpack.c.b16 %v1762, %v1758
    %v1879 = vpack.c.b16 %v1767, %v1763
    %v1880 = vpack.c.b16 %v1768, %v1764
    %v1881 = vpack.c.b16 %v1769, %v1765
    %v1882 = vpack.c.b16 %v1770, %v1766
    %v1883 = vpack.c.b16 %v1775, %v1771
    %v1884 = vpack.c.b16 %v1776, %v1772
    %v1885 = vpack.c.b16 %v1777, %v1773
    %v1886 = vpack.c.b16 %v1778, %v1774
    %v1887 = vpack.c.b16 %v1783, %v1779
    %v1888 = vpack.c.b16 %v1784, %v1780
    %v1889 = vpack.c.b16 %v1785, %v1781
    %v1890 = vpack.c.b16 %v1786, %v1782
    %v1891 = vpack.c.b16 %v1791, %v1787
    %v1892 = vpack.c.b16 %v1792, %v1788
    %v1893 = vpack.c.b16 %v1793, %v1789
    %v1894 = vpack.c.b16 %v1794, %v1790
    %v1895 = vpack.c.b16 %v1799, %v1795
    %v1896 = vpack.c.b16 %v1800, %v1796
    %v1897 = vpack.c.b16 %v1801, %v1797
    %v1898 = vpack.c.b16 %v1802, %v1798
    %v1899 = vpack.c.b16 %v1807, %v1803
    %v1900 = vpack.c.b16 %v1808, %v1804
    %v1901 = vpack.c.b16 %v1809, %v1805
    %v1902 = vpack.c.b16 %v1810, %v1806
    %v1903 = vpack.c.b16 %v1815, %v1811
    %v1904 = vpack.c.b16 %v1816, %v1812
    %v1905 = vpack.c.b16 %v1817, %v1813
    %v1906 = vpack.c.b16 %v1818, %v1814
    %v1907 = vpack.c.b16 %v1823, %v1819
    %v1908 = vpack.c.b16 %v1824, %v1820
    %v1909 = vpack.c.b16 %v1825, %v1821
    %v1910 = vpack.c.b16 %v1826, %v1822
    %v1911 = vpack.c.b16 %v1831, %v1827
    %v1912 = vpack.c.b16 %v1832, %v1828
    %v1913 = vpack.c.b16 %v1833, %v1829
    %v1914 = vpack.c.b16 %v1834, %v1830
    %v1915 = vpack.c.b16 %v1839, %v1835
    %v1916 = vpack.c.b16 %v1840, %v1836
    %v1917 = vpack.c.b16 %v1841, %v1837
    %v1918 = vpack.c.b16 %v1842, %v1838
    %v1919 = vpack.c.b16 %v1847, %v1843
    %v1920 = vpack.c.b16 %v1848, %v1844
    %v1921 = vpack.c.b16 %v1849, %v1845
    %v1922 = vpack.c.b16 %v1850, %v1846
    %v1923 = vpack.c.b16 %v1855, %v1851
    %v1924 = vpack.c.b16 %v1856, %v1852
    %v1925 = vpack.c.b16 %v1857, %v1853
    %v1926 = vpack.c.b16 %v1858, %v1854
    %v1927 = vpack.c.b16 %v1863, %v1859
    %v1928 = vpack.c.b16 %v1864, %v1860
    %v1929 = vpack.c.b16 %v1865, %v1861
    %v1930 = vpack.c.b16 %v1866, %v1862
    %1995 = vmatpush.bf16.msra.mxu0 %v1895
    %1996 = vmatpush.bf16.msra.mxu0 %v1891
    %1997 = vmatpush.bf16.msra.mxu0 %v1887
    %1998 = vmatpush.bf16.msra.mxu0 %v1883
    %1999 = vmatpush.bf16.msra.mxu0 %v1879
    %2000 = vmatpush.bf16.msra.mxu0 %v1875
    %2001 = vmatpush.bf16.msra.mxu0 %v1871
    %2002 = vmatpush.bf16.msra.mxu0 %v1867
    %2003 = vmatmul.bf16.gmra.mxu0 %v1507
    %v2004 = vpop.f32.mrf.mxu0
    %v2005 = vadd.f32 %v480, %v2004
    %v2006 = vpop.f32.mrf.mxu0
    %2007 = vdwg.mxu0
    %2008 = vmatpush.bf16.msra.mxu0 %v1927
    %2009 = vmatpush.bf16.msra.mxu0 %v1923
    %2010 = vmatpush.bf16.msra.mxu0 %v1919
    %2011 = vmatpush.bf16.msra.mxu0 %v1915
    %2012 = vmatpush.bf16.msra.mxu0 %v1911
    %2013 = vmatpush.bf16.msra.mxu0 %v1907
    %2014 = vmatpush.bf16.msra.mxu0 %v1903
    %2015 = vmatpush.bf16.msra.mxu0 %v1899
    %2016 = vmatmul.bf16.gmra.mxu0 %v895
    %v2017 = vpop.f32.mrf.mxu0
    %v2018 = vadd.f32 %v2005, %v2017
    %v2019 = vpop.f32.mrf.mxu0
    %2020 = vdwg.mxu0
    %2021 = vmatpush.bf16.msra.mxu0 %v1896
    %2022 = vmatpush.bf16.msra.mxu0 %v1892
    %2023 = vmatpush.bf16.msra.mxu0 %v1888
    %2024 = vmatpush.bf16.msra.mxu0 %v1884
    %2025 = vmatpush.bf16.msra.mxu0 %v1880
    %2026 = vmatpush.bf16.msra.mxu0 %v1876
    %2027 = vmatpush.bf16.msra.mxu0 %v1872
    %2028 = vmatpush.bf16.msra.mxu0 %v1868
    %2029 = vmatmul.bf16.gmra.mxu0 %v1507
    %v2030 = vpop.f32.mrf.mxu0
    %v2031 = vadd.f32 %v481, %v2030
    %v2032 = vpop.f32.mrf.mxu0
    %2033 = vdwg.mxu0
    %2034 = vmatpush.bf16.msra.mxu0 %v1928
    %2035 = vmatpush.bf16.msra.mxu0 %v1924
    %2036 = vmatpush.bf16.msra.mxu0 %v1920
    %2037 = vmatpush.bf16.msra.mxu0 %v1916
    %2038 = vmatpush.bf16.msra.mxu0 %v1912
    %2039 = vmatpush.bf16.msra.mxu0 %v1908
    %2040 = vmatpush.bf16.msra.mxu0 %v1904
    %2041 = vmatpush.bf16.msra.mxu0 %v1900
    %2042 = vmatmul.bf16.gmra.mxu0 %v895
    %v2043 = vpop.f32.mrf.mxu0
    %v2044 = vadd.f32 %v2031, %v2043
    %v2045 = vpop.f32.mrf.mxu0
    %2046 = vdwg.mxu0
    %2047 = vmatpush.bf16.msra.mxu0 %v1897
    %2048 = vmatpush.bf16.msra.mxu0 %v1893
    %2049 = vmatpush.bf16.msra.mxu0 %v1889
    %2050 = vmatpush.bf16.msra.mxu0 %v1885
    %2051 = vmatpush.bf16.msra.mxu0 %v1881
    %2052 = vmatpush.bf16.msra.mxu0 %v1877
    %2053 = vmatpush.bf16.msra.mxu0 %v1873
    %2054 = vmatpush.bf16.msra.mxu0 %v1869
    %2055 = vmatmul.bf16.gmra.mxu0 %v1507
    %v2056 = vpop.f32.mrf.mxu0
    %v2057 = vadd.f32 %v482, %v2056
    %v2058 = vpop.f32.mrf.mxu0
    %2059 = vdwg.mxu0
    %2060 = vmatpush.bf16.msra.mxu0 %v1929
    %2061 = vmatpush.bf16.msra.mxu0 %v1925
    %2062 = vmatpush.bf16.msra.mxu0 %v1921
    %2063 = vmatpush.bf16.msra.mxu0 %v1917
    %2064 = vmatpush.bf16.msra.mxu0 %v1913
    %2065 = vmatpush.bf16.msra.mxu0 %v1909
    %2066 = vmatpush.bf16.msra.mxu0 %v1905
    %2067 = vmatpush.bf16.msra.mxu0 %v1901
    %2068 = vmatmul.bf16.gmra.mxu0 %v895
    %v2069 = vpop.f32.mrf.mxu0
    %v2070 = vadd.f32 %v2057, %v2069
    %v2071 = vpop.f32.mrf.mxu0
    %2072 = vdwg.mxu0
    %2073 = vmatpush.bf16.msra.mxu0 %v1898
    %2074 = vmatpush.bf16.msra.mxu0 %v1894
    %2075 = vmatpush.bf16.msra.mxu0 %v1890
    %2076 = vmatpush.bf16.msra.mxu0 %v1886
    %2077 = vmatpush.bf16.msra.mxu0 %v1882
    %2078 = vmatpush.bf16.msra.mxu0 %v1878
    %2079 = vmatpush.bf16.msra.mxu0 %v1874
    %2080 = vmatpush.bf16.msra.mxu0 %v1870
    %2081 = vmatmul.bf16.gmra.mxu0 %v1507
    %v2082 = vpop.f32.mrf.mxu0
    %v2083 = vadd.f32 %v483, %v2082
    %v2084 = vpop.f32.mrf.mxu0
    %2085 = vdwg.mxu0
    %2086 = vmatpush.bf16.msra.mxu0 %v1930
    %2087 = vmatpush.bf16.msra.mxu0 %v1926
    %2088 = vmatpush.bf16.msra.mxu0 %v1922
    %2089 = vmatpush.bf16.msra.mxu0 %v1918
    %2090 = vmatpush.bf16.msra.mxu0 %v1914
    %2091 = vmatpush.bf16.msra.mxu0 %v1910
    %2092 = vmatpush.bf16.msra.mxu0 %v1906
    %2093 = vmatpush.bf16.msra.mxu0 %v1902
    %2094 = vmatmul.bf16.gmra.mxu0 %v895
    %v2095 = vpop.f32.mrf.mxu0
    %v2096 = vadd.f32 %v2083, %v2095
    %v2097 = vpop.f32.mrf.mxu0
    %2098 = vdwg.mxu0
    %v2099 = vxor.u32 %v2018, 2147483648
    %v2100 = vmul.f32 %v2099, 1.442695
    %v2101 = vpow.pop %v2100
    %v2102 = vadd.f32 %v2101, 1.0
    %v2103 = vrcp.pop %v2102
    %v2104 = vmul.f32 %v2102, %v2103
    %v2105 = vsub.f32 1.0, %v2104
    %v2106 = vmul.f32 %v2103, %v2105
    %v2107 = vadd.f32 %v2103, %v2106
    %vm2108 = vweird.f32 %v2102
    %vm2109 = vweird.f32 %v2103
    %vm2110 = vmor %vm2108, %vm2109
    %v2111 = vsel %vm2110, %v2103, %v2107
    %v2112 = vand.u32 2147483647, %v2102
    %vm2113 = vcmp.eq.f32.partialorder %v2112, 8.507059e+37
    %v2114 = vand.u32 %v2102, 2147483648
    %v2115 = vor.u32 1.1754944e-38, %v2114
    %v2116 = vsel %vm2113, %v2115, %v2111
    %v2117 = vmul.f32 1.0, %v2116
    %v2118 = vxor.u32 %v2044, 2147483648
    %v2119 = vmul.f32 %v2118, 1.442695
    %v2120 = vpow.pop %v2119
    %v2121 = vadd.f32 %v2120, 1.0
    %v2122 = vrcp.pop %v2121
    %v2123 = vmul.f32 %v2121, %v2122
    %v2124 = vsub.f32 1.0, %v2123
    %v2125 = vmul.f32 %v2122, %v2124
    %v2126 = vadd.f32 %v2122, %v2125
    %vm2127 = vweird.f32 %v2121
    %vm2128 = vweird.f32 %v2122
    %vm2129 = vmor %vm2127, %vm2128
    %v2130 = vsel %vm2129, %v2122, %v2126
    %v2131 = vand.u32 2147483647, %v2121
    %vm2132 = vcmp.eq.f32.partialorder %v2131, 8.507059e+37
    %v2133 = vand.u32 %v2121, 2147483648
    %v2134 = vor.u32 1.1754944e-38, %v2133
    %v2135 = vsel %vm2132, %v2134, %v2130
    %v2136 = vmul.f32 1.0, %v2135
    %v2137 = vtanh.pop %v2070
    %v2138 = vxor.u32 %v2096, 2147483648
    %v2139 = vmul.f32 %v2138, 1.442695
    %v2140 = vpow.pop %v2139
    %v2141 = vadd.f32 %v2140, 1.0
    %v2142 = vrcp.pop %v2141
    %v2143 = vmul.f32 %v2141, %v2142
    %v2144 = vsub.f32 1.0, %v2143
    %v2145 = vmul.f32 %v2142, %v2144
    %v2146 = vadd.f32 %v2142, %v2145
    %vm2147 = vweird.f32 %v2141
    %vm2148 = vweird.f32 %v2142
    %vm2149 = vmor %vm2147, %vm2148
    %v2150 = vsel %vm2149, %v2142, %v2146
    %v2151 = vand.u32 2147483647, %v2141
    %vm2152 = vcmp.eq.f32.partialorder %v2151, 8.507059e+37
    %v2153 = vand.u32 %v2141, 2147483648
    %v2154 = vor.u32 1.1754944e-38, %v2153
    %v2155 = vsel %vm2152, %v2154, %v2150
    %v2156 = vmul.f32 1.0, %v2155
    %v2157 = vmul.f32 %v2136, 0.0
    %v2158 = vmul.f32 %v2117, %v2137
    %v2159 = vadd.f32 %v2157, %v2158
    %v2160 = vtanh.pop %v2159
    %v2161 = vmul.f32 %v2156, %v2160
    %v2162 = vld [vmem:[#allocation2 + $0x60] sm:$0xff]
    %v2163 = vld [vmem:[#allocation2 + $0x68] sm:$0xff]
    %v2164 = vld [vmem:[#allocation2 + $0x70] sm:$0xff]
    %v2165 = vld [vmem:[#allocation2 + $0x78] sm:$0xff]
    %v2166 = vpack.c.bf16 %v1506, %v1506
    %2167 = vmatpush.bf16.msra.mxu0 %v616
    %2168 = vmatpush.bf16.msra.mxu0 %v612
    %2169 = vmatpush.bf16.msra.mxu0 %v608
    %2170 = vmatpush.bf16.msra.mxu0 %v604
    %2171 = vmatpush.bf16.msra.mxu0 %v600
    %2172 = vmatpush.bf16.msra.mxu0 %v596
    %2173 = vmatpush.bf16.msra.mxu0 %v592
    %2174 = vmatpush.bf16.msra.mxu0 %v588
    %2175 = vmatmul.bf16.gmra.mxu0 %v2166
    %v2176 = vpop.f32.mrf.mxu0
    %v2177 = vadd.f32 0.0, %v2176
    %v2178 = vpop.f32.mrf.mxu0
    %2179 = vdwg.mxu0
    %2180 = vmatpush.bf16.msra.mxu0 %v617
    %2181 = vmatpush.bf16.msra.mxu0 %v613
    %2182 = vmatpush.bf16.msra.mxu0 %v609
    %2183 = vmatpush.bf16.msra.mxu0 %v605
    %2184 = vmatpush.bf16.msra.mxu0 %v601
    %2185 = vmatpush.bf16.msra.mxu0 %v597
    %2186 = vmatpush.bf16.msra.mxu0 %v593
    %2187 = vmatpush.bf16.msra.mxu0 %v589
    %2188 = vmatmul.bf16.gmra.mxu0 %v2166
    %v2189 = vpop.f32.mrf.mxu0
    %v2190 = vadd.f32 0.0, %v2189
    %v2191 = vpop.f32.mrf.mxu0
    %2192 = vdwg.mxu0
    %2193 = vmatpush.bf16.msra.mxu0 %v618
    %2194 = vmatpush.bf16.msra.mxu0 %v614
    %2195 = vmatpush.bf16.msra.mxu0 %v610
    %2196 = vmatpush.bf16.msra.mxu0 %v606
    %2197 = vmatpush.bf16.msra.mxu0 %v602
    %2198 = vmatpush.bf16.msra.mxu0 %v598
    %2199 = vmatpush.bf16.msra.mxu0 %v594
    %2200 = vmatpush.bf16.msra.mxu0 %v590
    %2201 = vmatmul.bf16.gmra.mxu0 %v2166
    %v2202 = vpop.f32.mrf.mxu0
    %v2203 = vadd.f32 0.0, %v2202
    %v2204 = vpop.f32.mrf.mxu0
    %2205 = vdwg.mxu0
    %2206 = vmatpush.bf16.msra.mxu0 %v619
    %2207 = vmatpush.bf16.msra.mxu0 %v615
    %2208 = vmatpush.bf16.msra.mxu0 %v611
    %2209 = vmatpush.bf16.msra.mxu0 %v607
    %2210 = vmatpush.bf16.msra.mxu0 %v603
    %2211 = vmatpush.bf16.msra.mxu0 %v599
    %2212 = vmatpush.bf16.msra.mxu0 %v595
    %2213 = vmatpush.bf16.msra.mxu0 %v591
    %2214 = vmatmul.bf16.gmra.mxu0 %v2166
    %v2215 = vpop.f32.mrf.mxu0
    %v2216 = vadd.f32 0.0, %v2215
    %v2217 = vpop.f32.mrf.mxu0
    %2218 = vdwg.mxu0
    %v2219 = vadd.f32 %v2162, %v2177
    %v2220 = vadd.f32 %v2163, %v2190
    %v2221 = vadd.f32 %v2164, %v2203
    %v2222 = vadd.f32 %v2165, %v2216
    %v2223 = vxor.u32 %v2219, 2147483648
    %v2224 = vmul.f32 %v2223, 1.442695
    %v2225 = vpow.pop %v2224
    %v2226 = vadd.f32 %v2225, 1.0
    %v2227 = vrcp.pop %v2226
    %v2228 = vmul.f32 %v2226, %v2227
    %v2229 = vsub.f32 1.0, %v2228
    %v2230 = vmul.f32 %v2227, %v2229
    %v2231 = vadd.f32 %v2227, %v2230
    %vm2232 = vweird.f32 %v2226
    %vm2233 = vweird.f32 %v2227
    %vm2234 = vmor %vm2232, %vm2233
    %v2235 = vsel %vm2234, %v2227, %v2231
    %v2236 = vand.u32 2147483647, %v2226
    %vm2237 = vcmp.eq.f32.partialorder %v2236, 8.507059e+37
    %v2238 = vand.u32 %v2226, 2147483648
    %v2239 = vor.u32 1.1754944e-38, %v2238
    %v2240 = vsel %vm2237, %v2239, %v2235
    %v2241 = vmul.f32 1.0, %v2240
    %v2242 = vxor.u32 %v2220, 2147483648
    %v2243 = vmul.f32 %v2242, 1.442695
    %v2244 = vpow.pop %v2243
    %v2245 = vadd.f32 %v2244, 1.0
    %v2246 = vrcp.pop %v2245
    %v2247 = vmul.f32 %v2245, %v2246
    %v2248 = vsub.f32 1.0, %v2247
    %v2249 = vmul.f32 %v2246, %v2248
    %v2250 = vadd.f32 %v2246, %v2249
    %vm2251 = vweird.f32 %v2245
    %vm2252 = vweird.f32 %v2246
    %vm2253 = vmor %vm2251, %vm2252
    %v2254 = vsel %vm2253, %v2246, %v2250
    %v2255 = vand.u32 2147483647, %v2245
    %vm2256 = vcmp.eq.f32.partialorder %v2255, 8.507059e+37
    %v2257 = vand.u32 %v2245, 2147483648
    %v2258 = vor.u32 1.1754944e-38, %v2257
    %v2259 = vsel %vm2256, %v2258, %v2254
    %v2260 = vmul.f32 1.0, %v2259
    %v2261 = vtanh.pop %v2221
    %v2262 = vxor.u32 %v2222, 2147483648
    %v2263 = vmul.f32 %v2262, 1.442695
    %v2264 = vpow.pop %v2263
    %v2265 = vadd.f32 %v2264, 1.0
    %v2266 = vrcp.pop %v2265
    %v2267 = vmul.f32 %v2265, %v2266
    %v2268 = vsub.f32 1.0, %v2267
    %v2269 = vmul.f32 %v2266, %v2268
    %v2270 = vadd.f32 %v2266, %v2269
    %vm2271 = vweird.f32 %v2265
    %vm2272 = vweird.f32 %v2266
    %vm2273 = vmor %vm2271, %vm2272
    %v2274 = vsel %vm2273, %v2266, %v2270
    %v2275 = vand.u32 2147483647, %v2265
    %vm2276 = vcmp.eq.f32.partialorder %v2275, 8.507059e+37
    %v2277 = vand.u32 %v2265, 2147483648
    %v2278 = vor.u32 1.1754944e-38, %v2277
    %v2279 = vsel %vm2276, %v2278, %v2274
    %v2280 = vmul.f32 1.0, %v2279
    %v2281 = vmul.f32 %v2260, %v1504
    %v2282 = vmul.f32 %v2241, %v2261
    %v2283 = vadd.f32 %v2281, %v2282
    %v2284 = vtanh.pop %v2283
    %v2285 = vmul.f32 %v2280, %v2284
    %v2286 = vpack.c.bf16 %v1674, %v1674
    %2287 = vmatpush.bf16.msra.mxu0 %v1116
    %2288 = vmatpush.bf16.msra.mxu0 %v1112
    %2289 = vmatpush.bf16.msra.mxu0 %v1108
    %2290 = vmatpush.bf16.msra.mxu0 %v1104
    %2291 = vmatpush.bf16.msra.mxu0 %v1100
    %2292 = vmatpush.bf16.msra.mxu0 %v1096
    %2293 = vmatpush.bf16.msra.mxu0 %v1092
    %2294 = vmatpush.bf16.msra.mxu0 %v1088
    %2295 = vmatmul.bf16.gmra.mxu0 %v2166
    %v2296 = vpop.f32.mrf.mxu0
    %v2297 = vadd.f32 %v470, %v2296
    %v2298 = vpop.f32.mrf.mxu0
    %2299 = vdwg.mxu0
    %2300 = vmatpush.bf16.msra.mxu0 %v1148
    %2301 = vmatpush.bf16.msra.mxu0 %v1144
    %2302 = vmatpush.bf16.msra.mxu0 %v1140
    %2303 = vmatpush.bf16.msra.mxu0 %v1136
    %2304 = vmatpush.bf16.msra.mxu0 %v1132
    %2305 = vmatpush.bf16.msra.mxu0 %v1128
    %2306 = vmatpush.bf16.msra.mxu0 %v1124
    %2307 = vmatpush.bf16.msra.mxu0 %v1120
    %2308 = vmatmul.bf16.gmra.mxu0 %v2286
    %v2309 = vpop.f32.mrf.mxu0
    %v2310 = vadd.f32 %v2297, %v2309
    %v2311 = vpop.f32.mrf.mxu0
    %2312 = vdwg.mxu0
    %2313 = vmatpush.bf16.msra.mxu0 %v1117
    %2314 = vmatpush.bf16.msra.mxu0 %v1113
    %2315 = vmatpush.bf16.msra.mxu0 %v1109
    %2316 = vmatpush.bf16.msra.mxu0 %v1105
    %2317 = vmatpush.bf16.msra.mxu0 %v1101
    %2318 = vmatpush.bf16.msra.mxu0 %v1097
    %2319 = vmatpush.bf16.msra.mxu0 %v1093
    %2320 = vmatpush.bf16.msra.mxu0 %v1089
    %2321 = vmatmul.bf16.gmra.mxu0 %v2166
    %v2322 = vpop.f32.mrf.mxu0
    %v2323 = vadd.f32 %v471, %v2322
    %v2324 = vpop.f32.mrf.mxu0
    %2325 = vdwg.mxu0
    %2326 = vmatpush.bf16.msra.mxu0 %v1149
    %2327 = vmatpush.bf16.msra.mxu0 %v1145
    %2328 = vmatpush.bf16.msra.mxu0 %v1141
    %2329 = vmatpush.bf16.msra.mxu0 %v1137
    %2330 = vmatpush.bf16.msra.mxu0 %v1133
    %2331 = vmatpush.bf16.msra.mxu0 %v1129
    %2332 = vmatpush.bf16.msra.mxu0 %v1125
    %2333 = vmatpush.bf16.msra.mxu0 %v1121
    %2334 = vmatmul.bf16.gmra.mxu0 %v2286
    %v2335 = vpop.f32.mrf.mxu0
    %v2336 = vadd.f32 %v2323, %v2335
    %v2337 = vpop.f32.mrf.mxu0
    %2338 = vdwg.mxu0
    %2339 = vmatpush.bf16.msra.mxu0 %v1118
    %2340 = vmatpush.bf16.msra.mxu0 %v1114
    %2341 = vmatpush.bf16.msra.mxu0 %v1110
    %2342 = vmatpush.bf16.msra.mxu0 %v1106
    %2343 = vmatpush.bf16.msra.mxu0 %v1102
    %2344 = vmatpush.bf16.msra.mxu0 %v1098
    %2345 = vmatpush.bf16.msra.mxu0 %v1094
    %2346 = vmatpush.bf16.msra.mxu0 %v1090
    %2347 = vmatmul.bf16.gmra.mxu0 %v2166
    %v2348 = vpop.f32.mrf.mxu0
    %v2349 = vadd.f32 %v472, %v2348
    %v2350 = vpop.f32.mrf.mxu0
    %2351 = vdwg.mxu0
    %2352 = vmatpush.bf16.msra.mxu0 %v1150
    %2353 = vmatpush.bf16.msra.mxu0 %v1146
    %2354 = vmatpush.bf16.msra.mxu0 %v1142
    %2355 = vmatpush.bf16.msra.mxu0 %v1138
    %2356 = vmatpush.bf16.msra.mxu0 %v1134
    %2357 = vmatpush.bf16.msra.mxu0 %v1130
    %2358 = vmatpush.bf16.msra.mxu0 %v1126
    %2359 = vmatpush.bf16.msra.mxu0 %v1122
    %2360 = vmatmul.bf16.gmra.mxu0 %v2286
    %v2361 = vpop.f32.mrf.mxu0
    %v2362 = vadd.f32 %v2349, %v2361
    %v2363 = vpop.f32.mrf.mxu0
    %2364 = vdwg.mxu0
    %2365 = vmatpush.bf16.msra.mxu0 %v1119
    %2366 = vmatpush.bf16.msra.mxu0 %v1115
    %2367 = vmatpush.bf16.msra.mxu0 %v1111
    %2368 = vmatpush.bf16.msra.mxu0 %v1107
    %2369 = vmatpush.bf16.msra.mxu0 %v1103
    %2370 = vmatpush.bf16.msra.mxu0 %v1099
    %2371 = vmatpush.bf16.msra.mxu0 %v1095
    %2372 = vmatpush.bf16.msra.mxu0 %v1091
    %2373 = vmatmul.bf16.gmra.mxu0 %v2166
    %v2374 = vpop.f32.mrf.mxu0
    %v2375 = vadd.f32 %v473, %v2374
    %v2376 = vpop.f32.mrf.mxu0
    %2377 = vdwg.mxu0
    %2378 = vmatpush.bf16.msra.mxu0 %v1151
    %2379 = vmatpush.bf16.msra.mxu0 %v1147
    %2380 = vmatpush.bf16.msra.mxu0 %v1143
    %2381 = vmatpush.bf16.msra.mxu0 %v1139
    %2382 = vmatpush.bf16.msra.mxu0 %v1135
    %2383 = vmatpush.bf16.msra.mxu0 %v1131
    %2384 = vmatpush.bf16.msra.mxu0 %v1127
    %2385 = vmatpush.bf16.msra.mxu0 %v1123
    %2386 = vmatmul.bf16.gmra.mxu0 %v2286
    %v2387 = vpop.f32.mrf.mxu0
    %v2388 = vadd.f32 %v2375, %v2387
    %v2389 = vpop.f32.mrf.mxu0
    %2390 = vdwg.mxu0
    %v2391 = vxor.u32 %v2310, 2147483648
    %v2392 = vmul.f32 %v2391, 1.442695
    %v2393 = vpow.pop %v2392
    %v2394 = vadd.f32 %v2393, 1.0
    %v2395 = vrcp.pop %v2394
    %v2396 = vmul.f32 %v2394, %v2395
    %v2397 = vsub.f32 1.0, %v2396
    %v2398 = vmul.f32 %v2395, %v2397
    %v2399 = vadd.f32 %v2395, %v2398
    %vm2400 = vweird.f32 %v2394
    %vm2401 = vweird.f32 %v2395
    %vm2402 = vmor %vm2400, %vm2401
    %v2403 = vsel %vm2402, %v2395, %v2399
    %v2404 = vand.u32 2147483647, %v2394
    %vm2405 = vcmp.eq.f32.partialorder %v2404, 8.507059e+37
    %v2406 = vand.u32 %v2394, 2147483648
    %v2407 = vor.u32 1.1754944e-38, %v2406
    %v2408 = vsel %vm2405, %v2407, %v2403
    %v2409 = vmul.f32 1.0, %v2408
    %v2410 = vxor.u32 %v2336, 2147483648
    %v2411 = vmul.f32 %v2410, 1.442695
    %v2412 = vpow.pop %v2411
    %v2413 = vadd.f32 %v2412, 1.0
    %v2414 = vrcp.pop %v2413
    %v2415 = vmul.f32 %v2413, %v2414
    %v2416 = vsub.f32 1.0, %v2415
    %v2417 = vmul.f32 %v2414, %v2416
    %v2418 = vadd.f32 %v2414, %v2417
    %vm2419 = vweird.f32 %v2413
    %vm2420 = vweird.f32 %v2414
    %vm2421 = vmor %vm2419, %vm2420
    %v2422 = vsel %vm2421, %v2414, %v2418
    %v2423 = vand.u32 2147483647, %v2413
    %vm2424 = vcmp.eq.f32.partialorder %v2423, 8.507059e+37
    %v2425 = vand.u32 %v2413, 2147483648
    %v2426 = vor.u32 1.1754944e-38, %v2425
    %v2427 = vsel %vm2424, %v2426, %v2422
    %v2428 = vmul.f32 1.0, %v2427
    %v2429 = vtanh.pop %v2362
    %v2430 = vxor.u32 %v2388, 2147483648
    %v2431 = vmul.f32 %v2430, 1.442695
    %v2432 = vpow.pop %v2431
    %v2433 = vadd.f32 %v2432, 1.0
    %v2434 = vrcp.pop %v2433
    %v2435 = vmul.f32 %v2433, %v2434
    %v2436 = vsub.f32 1.0, %v2435
    %v2437 = vmul.f32 %v2434, %v2436
    %v2438 = vadd.f32 %v2434, %v2437
    %vm2439 = vweird.f32 %v2433
    %vm2440 = vweird.f32 %v2434
    %vm2441 = vmor %vm2439, %vm2440
    %v2442 = vsel %vm2441, %v2434, %v2438
    %v2443 = vand.u32 2147483647, %v2433
    %vm2444 = vcmp.eq.f32.partialorder %v2443, 8.507059e+37
    %v2445 = vand.u32 %v2433, 2147483648
    %v2446 = vor.u32 1.1754944e-38, %v2445
    %v2447 = vsel %vm2444, %v2446, %v2442
    %v2448 = vmul.f32 1.0, %v2447
    %v2449 = vmul.f32 %v2428, %v1672
    %v2450 = vmul.f32 %v2409, %v2429
    %v2451 = vadd.f32 %v2449, %v2450
    %v2452 = vtanh.pop %v2451
    %v2453 = vmul.f32 %v2448, %v2452
    %v2454 = vpack.c.bf16 %v2161, %v2161
    %2455 = vmatpush.bf16.msra.mxu0 %v1895
    %2456 = vmatpush.bf16.msra.mxu0 %v1891
    %2457 = vmatpush.bf16.msra.mxu0 %v1887
    %2458 = vmatpush.bf16.msra.mxu0 %v1883
    %2459 = vmatpush.bf16.msra.mxu0 %v1879
    %2460 = vmatpush.bf16.msra.mxu0 %v1875
    %2461 = vmatpush.bf16.msra.mxu0 %v1871
    %2462 = vmatpush.bf16.msra.mxu0 %v1867
    %2463 = vmatmul.bf16.gmra.mxu0 %v2286
    %v2464 = vpop.f32.mrf.mxu0
    %v2465 = vadd.f32 %v480, %v2464
    %v2466 = vpop.f32.mrf.mxu0
    %2467 = vdwg.mxu0
    %2468 = vmatpush.bf16.msra.mxu0 %v1927
    %2469 = vmatpush.bf16.msra.mxu0 %v1923
    %2470 = vmatpush.bf16.msra.mxu0 %v1919
    %2471 = vmatpush.bf16.msra.mxu0 %v1915
    %2472 = vmatpush.bf16.msra.mxu0 %v1911
    %2473 = vmatpush.bf16.msra.mxu0 %v1907
    %2474 = vmatpush.bf16.msra.mxu0 %v1903
    %2475 = vmatpush.bf16.msra.mxu0 %v1899
    %2476 = vmatmul.bf16.gmra.mxu0 %v2454
    %v2477 = vpop.f32.mrf.mxu0
    %v2478 = vadd.f32 %v2465, %v2477
    %v2479 = vpop.f32.mrf.mxu0
    %2480 = vdwg.mxu0
    %2481 = vmatpush.bf16.msra.mxu0 %v1896
    %2482 = vmatpush.bf16.msra.mxu0 %v1892
    %2483 = vmatpush.bf16.msra.mxu0 %v1888
    %2484 = vmatpush.bf16.msra.mxu0 %v1884
    %2485 = vmatpush.bf16.msra.mxu0 %v1880
    %2486 = vmatpush.bf16.msra.mxu0 %v1876
    %2487 = vmatpush.bf16.msra.mxu0 %v1872
    %2488 = vmatpush.bf16.msra.mxu0 %v1868
    %2489 = vmatmul.bf16.gmra.mxu0 %v2286
    %v2490 = vpop.f32.mrf.mxu0
    %v2491 = vadd.f32 %v481, %v2490
    %v2492 = vpop.f32.mrf.mxu0
    %2493 = vdwg.mxu0
    %2494 = vmatpush.bf16.msra.mxu0 %v1928
    %2495 = vmatpush.bf16.msra.mxu0 %v1924
    %2496 = vmatpush.bf16.msra.mxu0 %v1920
    %2497 = vmatpush.bf16.msra.mxu0 %v1916
    %2498 = vmatpush.bf16.msra.mxu0 %v1912
    %2499 = vmatpush.bf16.msra.mxu0 %v1908
    %2500 = vmatpush.bf16.msra.mxu0 %v1904
    %2501 = vmatpush.bf16.msra.mxu0 %v1900
    %2502 = vmatmul.bf16.gmra.mxu0 %v2454
    %v2503 = vpop.f32.mrf.mxu0
    %v2504 = vadd.f32 %v2491, %v2503
    %v2505 = vpop.f32.mrf.mxu0
    %2506 = vdwg.mxu0
    %2507 = vmatpush.bf16.msra.mxu0 %v1897
    %2508 = vmatpush.bf16.msra.mxu0 %v1893
    %2509 = vmatpush.bf16.msra.mxu0 %v1889
    %2510 = vmatpush.bf16.msra.mxu0 %v1885
    %2511 = vmatpush.bf16.msra.mxu0 %v1881
    %2512 = vmatpush.bf16.msra.mxu0 %v1877
    %2513 = vmatpush.bf16.msra.mxu0 %v1873
    %2514 = vmatpush.bf16.msra.mxu0 %v1869
    %2515 = vmatmul.bf16.gmra.mxu0 %v2286
    %v2516 = vpop.f32.mrf.mxu0
    %v2517 = vadd.f32 %v482, %v2516
    %v2518 = vpop.f32.mrf.mxu0
    %2519 = vdwg.mxu0
    %2520 = vmatpush.bf16.msra.mxu0 %v1929
    %2521 = vmatpush.bf16.msra.mxu0 %v1925
    %2522 = vmatpush.bf16.msra.mxu0 %v1921
    %2523 = vmatpush.bf16.msra.mxu0 %v1917
    %2524 = vmatpush.bf16.msra.mxu0 %v1913
    %2525 = vmatpush.bf16.msra.mxu0 %v1909
    %2526 = vmatpush.bf16.msra.mxu0 %v1905
    %2527 = vmatpush.bf16.msra.mxu0 %v1901
    %2528 = vmatmul.bf16.gmra.mxu0 %v2454
    %v2529 = vpop.f32.mrf.mxu0
    %v2530 = vadd.f32 %v2517, %v2529
    %v2531 = vpop.f32.mrf.mxu0
    %2532 = vdwg.mxu0
    %2533 = vmatpush.bf16.msra.mxu0 %v1898
    %2534 = vmatpush.bf16.msra.mxu0 %v1894
    %2535 = vmatpush.bf16.msra.mxu0 %v1890
    %2536 = vmatpush.bf16.msra.mxu0 %v1886
    %2537 = vmatpush.bf16.msra.mxu0 %v1882
    %2538 = vmatpush.bf16.msra.mxu0 %v1878
    %2539 = vmatpush.bf16.msra.mxu0 %v1874
    %2540 = vmatpush.bf16.msra.mxu0 %v1870
    %2541 = vmatmul.bf16.gmra.mxu0 %v2286
    %v2542 = vpop.f32.mrf.mxu0
    %v2543 = vadd.f32 %v483, %v2542
    %v2544 = vpop.f32.mrf.mxu0
    %2545 = vdwg.mxu0
    %2546 = vmatpush.bf16.msra.mxu0 %v1930
    %2547 = vmatpush.bf16.msra.mxu0 %v1926
    %2548 = vmatpush.bf16.msra.mxu0 %v1922
    %2549 = vmatpush.bf16.msra.mxu0 %v1918
    %2550 = vmatpush.bf16.msra.mxu0 %v1914
    %2551 = vmatpush.bf16.msra.mxu0 %v1910
    %2552 = vmatpush.bf16.msra.mxu0 %v1906
    %2553 = vmatpush.bf16.msra.mxu0 %v1902
    %2554 = vmatmul.bf16.gmra.mxu0 %v2454
    %v2555 = vpop.f32.mrf.mxu0
    %v2556 = vadd.f32 %v2543, %v2555
    %v2557 = vpop.f32.mrf.mxu0
    %2558 = vdwg.mxu0
    %v2559 = vxor.u32 %v2478, 2147483648
    %v2560 = vmul.f32 %v2559, 1.442695
    %v2561 = vpow.pop %v2560
    %v2562 = vadd.f32 %v2561, 1.0
    %v2563 = vrcp.pop %v2562
    %v2564 = vmul.f32 %v2562, %v2563
    %v2565 = vsub.f32 1.0, %v2564
    %v2566 = vmul.f32 %v2563, %v2565
    %v2567 = vadd.f32 %v2563, %v2566
    %vm2568 = vweird.f32 %v2562
    %vm2569 = vweird.f32 %v2563
    %vm2570 = vmor %vm2568, %vm2569
    %v2571 = vsel %vm2570, %v2563, %v2567
    %v2572 = vand.u32 2147483647, %v2562
    %vm2573 = vcmp.eq.f32.partialorder %v2572, 8.507059e+37
    %v2574 = vand.u32 %v2562, 2147483648
    %v2575 = vor.u32 1.1754944e-38, %v2574
    %v2576 = vsel %vm2573, %v2575, %v2571
    %v2577 = vmul.f32 1.0, %v2576
    %v2578 = vxor.u32 %v2504, 2147483648
    %v2579 = vmul.f32 %v2578, 1.442695
    %v2580 = vpow.pop %v2579
    %v2581 = vadd.f32 %v2580, 1.0
    %v2582 = vrcp.pop %v2581
    %v2583 = vmul.f32 %v2581, %v2582
    %v2584 = vsub.f32 1.0, %v2583
    %v2585 = vmul.f32 %v2582, %v2584
    %v2586 = vadd.f32 %v2582, %v2585
    %vm2587 = vweird.f32 %v2581
    %vm2588 = vweird.f32 %v2582
    %vm2589 = vmor %vm2587, %vm2588
    %v2590 = vsel %vm2589, %v2582, %v2586
    %v2591 = vand.u32 2147483647, %v2581
    %vm2592 = vcmp.eq.f32.partialorder %v2591, 8.507059e+37
    %v2593 = vand.u32 %v2581, 2147483648
    %v2594 = vor.u32 1.1754944e-38, %v2593
    %v2595 = vsel %vm2592, %v2594, %v2590
    %v2596 = vmul.f32 1.0, %v2595
    %v2597 = vtanh.pop %v2530
    %v2598 = vxor.u32 %v2556, 2147483648
    %v2599 = vmul.f32 %v2598, 1.442695
    %v2600 = vpow.pop %v2599
    %v2601 = vadd.f32 %v2600, 1.0
    %v2602 = vrcp.pop %v2601
    %v2603 = vmul.f32 %v2601, %v2602
    %v2604 = vsub.f32 1.0, %v2603
    %v2605 = vmul.f32 %v2602, %v2604
    %v2606 = vadd.f32 %v2602, %v2605
    %vm2607 = vweird.f32 %v2601
    %vm2608 = vweird.f32 %v2602
    %vm2609 = vmor %vm2607, %vm2608
    %v2610 = vsel %vm2609, %v2602, %v2606
    %v2611 = vand.u32 2147483647, %v2601
    %vm2612 = vcmp.eq.f32.partialorder %v2611, 8.507059e+37
    %v2613 = vand.u32 %v2601, 2147483648
    %v2614 = vor.u32 1.1754944e-38, %v2613
    %v2615 = vsel %vm2612, %v2614, %v2610
    %v2616 = vmul.f32 1.0, %v2615
    %v2617 = vmul.f32 %v2596, %v2159
    %v2618 = vmul.f32 %v2577, %v2597
    %v2619 = vadd.f32 %v2617, %v2618
    %v2620 = vtanh.pop %v2619
    %v2621 = vmul.f32 %v2616, %v2620
    %v2622 = vld [vmem:[#allocation2 + $0x80] sm:$0xff]
    %v2623 = vld [vmem:[#allocation2 + $0x88] sm:$0xff]
    %v2624 = vld [vmem:[#allocation2 + $0x90] sm:$0xff]
    %v2625 = vld [vmem:[#allocation2 + $0x98] sm:$0xff]
    %v2626 = vpack.c.bf16 %v2285, %v2285
    %2627 = vmatpush.bf16.msra.mxu0 %v616
    %2628 = vmatpush.bf16.msra.mxu0 %v612
    %2629 = vmatpush.bf16.msra.mxu0 %v608
    %2630 = vmatpush.bf16.msra.mxu0 %v604
    %2631 = vmatpush.bf16.msra.mxu0 %v600
    %2632 = vmatpush.bf16.msra.mxu0 %v596
    %2633 = vmatpush.bf16.msra.mxu0 %v592
    %2634 = vmatpush.bf16.msra.mxu0 %v588
    %2635 = vmatmul.bf16.gmra.mxu0 %v2626
    %v2636 = vpop.f32.mrf.mxu0
    %v2637 = vadd.f32 0.0, %v2636
    %v2638 = vpop.f32.mrf.mxu0
    %2639 = vdwg.mxu0
    %2640 = vmatpush.bf16.msra.mxu0 %v617
    %2641 = vmatpush.bf16.msra.mxu0 %v613
    %2642 = vmatpush.bf16.msra.mxu0 %v609
    %2643 = vmatpush.bf16.msra.mxu0 %v605
    %2644 = vmatpush.bf16.msra.mxu0 %v601
    %2645 = vmatpush.bf16.msra.mxu0 %v597
    %2646 = vmatpush.bf16.msra.mxu0 %v593
    %2647 = vmatpush.bf16.msra.mxu0 %v589
    %2648 = vmatmul.bf16.gmra.mxu0 %v2626
    %v2649 = vpop.f32.mrf.mxu0
    %v2650 = vadd.f32 0.0, %v2649
    %v2651 = vpop.f32.mrf.mxu0
    %2652 = vdwg.mxu0
    %2653 = vmatpush.bf16.msra.mxu0 %v618
    %2654 = vmatpush.bf16.msra.mxu0 %v614
    %2655 = vmatpush.bf16.msra.mxu0 %v610
    %2656 = vmatpush.bf16.msra.mxu0 %v606
    %2657 = vmatpush.bf16.msra.mxu0 %v602
    %2658 = vmatpush.bf16.msra.mxu0 %v598
    %2659 = vmatpush.bf16.msra.mxu0 %v594
    %2660 = vmatpush.bf16.msra.mxu0 %v590
    %2661 = vmatmul.bf16.gmra.mxu0 %v2626
    %v2662 = vpop.f32.mrf.mxu0
    %v2663 = vadd.f32 0.0, %v2662
    %v2664 = vpop.f32.mrf.mxu0
    %2665 = vdwg.mxu0
    %2666 = vmatpush.bf16.msra.mxu0 %v619
    %2667 = vmatpush.bf16.msra.mxu0 %v615
    %2668 = vmatpush.bf16.msra.mxu0 %v611
    %2669 = vmatpush.bf16.msra.mxu0 %v607
    %2670 = vmatpush.bf16.msra.mxu0 %v603
    %2671 = vmatpush.bf16.msra.mxu0 %v599
    %2672 = vmatpush.bf16.msra.mxu0 %v595
    %2673 = vmatpush.bf16.msra.mxu0 %v591
    %2674 = vmatmul.bf16.gmra.mxu0 %v2626
    %v2675 = vpop.f32.mrf.mxu0
    %v2676 = vadd.f32 0.0, %v2675
    %v2677 = vpop.f32.mrf.mxu0
    %2678 = vdwg.mxu0
    %v2679 = vadd.f32 %v2622, %v2637
    %v2680 = vadd.f32 %v2623, %v2650
    %v2681 = vadd.f32 %v2624, %v2663
    %v2682 = vadd.f32 %v2625, %v2676
    %v2683 = vxor.u32 %v2679, 2147483648
    %v2684 = vmul.f32 %v2683, 1.442695
    %v2685 = vpow.pop %v2684
    %v2686 = vadd.f32 %v2685, 1.0
    %v2687 = vrcp.pop %v2686
    %v2688 = vmul.f32 %v2686, %v2687
    %v2689 = vsub.f32 1.0, %v2688
    %v2690 = vmul.f32 %v2687, %v2689
    %v2691 = vadd.f32 %v2687, %v2690
    %vm2692 = vweird.f32 %v2686
    %vm2693 = vweird.f32 %v2687
    %vm2694 = vmor %vm2692, %vm2693
    %v2695 = vsel %vm2694, %v2687, %v2691
    %v2696 = vand.u32 2147483647, %v2686
    %vm2697 = vcmp.eq.f32.partialorder %v2696, 8.507059e+37
    %v2698 = vand.u32 %v2686, 2147483648
    %v2699 = vor.u32 1.1754944e-38, %v2698
    %v2700 = vsel %vm2697, %v2699, %v2695
    %v2701 = vmul.f32 1.0, %v2700
    %v2702 = vxor.u32 %v2680, 2147483648
    %v2703 = vmul.f32 %v2702, 1.442695
    %v2704 = vpow.pop %v2703
    %v2705 = vadd.f32 %v2704, 1.0
    %v2706 = vrcp.pop %v2705
    %v2707 = vmul.f32 %v2705, %v2706
    %v2708 = vsub.f32 1.0, %v2707
    %v2709 = vmul.f32 %v2706, %v2708
    %v2710 = vadd.f32 %v2706, %v2709
    %vm2711 = vweird.f32 %v2705
    %vm2712 = vweird.f32 %v2706
    %vm2713 = vmor %vm2711, %vm2712
    %v2714 = vsel %vm2713, %v2706, %v2710
    %v2715 = vand.u32 2147483647, %v2705
    %vm2716 = vcmp.eq.f32.partialorder %v2715, 8.507059e+37
    %v2717 = vand.u32 %v2705, 2147483648
    %v2718 = vor.u32 1.1754944e-38, %v2717
    %v2719 = vsel %vm2716, %v2718, %v2714
    %v2720 = vmul.f32 1.0, %v2719
    %v2721 = vtanh.pop %v2681
    %v2722 = vxor.u32 %v2682, 2147483648
    %v2723 = vmul.f32 %v2722, 1.442695
    %v2724 = vpow.pop %v2723
    %v2725 = vadd.f32 %v2724, 1.0
    %v2726 = vrcp.pop %v2725
    %v2727 = vmul.f32 %v2725, %v2726
    %v2728 = vsub.f32 1.0, %v2727
    %v2729 = vmul.f32 %v2726, %v2728
    %v2730 = vadd.f32 %v2726, %v2729
    %vm2731 = vweird.f32 %v2725
    %vm2732 = vweird.f32 %v2726
    %vm2733 = vmor %vm2731, %vm2732
    %v2734 = vsel %vm2733, %v2726, %v2730
    %v2735 = vand.u32 2147483647, %v2725
    %vm2736 = vcmp.eq.f32.partialorder %v2735, 8.507059e+37
    %v2737 = vand.u32 %v2725, 2147483648
    %v2738 = vor.u32 1.1754944e-38, %v2737
    %v2739 = vsel %vm2736, %v2738, %v2734
    %v2740 = vmul.f32 1.0, %v2739
    %v2741 = vmul.f32 %v2720, %v2283
    %v2742 = vmul.f32 %v2701, %v2721
    %v2743 = vadd.f32 %v2741, %v2742
    %v2744 = vtanh.pop %v2743
    %v2745 = vmul.f32 %v2740, %v2744
    %v2746 = vpack.c.bf16 %v2453, %v2453
    %2747 = vmatpush.bf16.msra.mxu0 %v1116
    %2748 = vmatpush.bf16.msra.mxu0 %v1112
    %2749 = vmatpush.bf16.msra.mxu0 %v1108
    %2750 = vmatpush.bf16.msra.mxu0 %v1104
    %2751 = vmatpush.bf16.msra.mxu0 %v1100
    %2752 = vmatpush.bf16.msra.mxu0 %v1096
    %2753 = vmatpush.bf16.msra.mxu0 %v1092
    %2754 = vmatpush.bf16.msra.mxu0 %v1088
    %2755 = vmatmul.bf16.gmra.mxu0 %v2626
    %v2756 = vpop.f32.mrf.mxu0
    %v2757 = vadd.f32 %v470, %v2756
    %v2758 = vpop.f32.mrf.mxu0
    %2759 = vdwg.mxu0
    %2760 = vmatpush.bf16.msra.mxu0 %v1148
    %2761 = vmatpush.bf16.msra.mxu0 %v1144
    %2762 = vmatpush.bf16.msra.mxu0 %v1140
    %2763 = vmatpush.bf16.msra.mxu0 %v1136
    %2764 = vmatpush.bf16.msra.mxu0 %v1132
    %2765 = vmatpush.bf16.msra.mxu0 %v1128
    %2766 = vmatpush.bf16.msra.mxu0 %v1124
    %2767 = vmatpush.bf16.msra.mxu0 %v1120
    %2768 = vmatmul.bf16.gmra.mxu0 %v2746
    %v2769 = vpop.f32.mrf.mxu0
    %v2770 = vadd.f32 %v2757, %v2769
    %v2771 = vpop.f32.mrf.mxu0
    %2772 = vdwg.mxu0
    %2773 = vmatpush.bf16.msra.mxu0 %v1117
    %2774 = vmatpush.bf16.msra.mxu0 %v1113
    %2775 = vmatpush.bf16.msra.mxu0 %v1109
    %2776 = vmatpush.bf16.msra.mxu0 %v1105
    %2777 = vmatpush.bf16.msra.mxu0 %v1101
    %2778 = vmatpush.bf16.msra.mxu0 %v1097
    %2779 = vmatpush.bf16.msra.mxu0 %v1093
    %2780 = vmatpush.bf16.msra.mxu0 %v1089
    %2781 = vmatmul.bf16.gmra.mxu0 %v2626
    %v2782 = vpop.f32.mrf.mxu0
    %v2783 = vadd.f32 %v471, %v2782
    %v2784 = vpop.f32.mrf.mxu0
    %2785 = vdwg.mxu0
    %2786 = vmatpush.bf16.msra.mxu0 %v1149
    %2787 = vmatpush.bf16.msra.mxu0 %v1145
    %2788 = vmatpush.bf16.msra.mxu0 %v1141
    %2789 = vmatpush.bf16.msra.mxu0 %v1137
    %2790 = vmatpush.bf16.msra.mxu0 %v1133
    %2791 = vmatpush.bf16.msra.mxu0 %v1129
    %2792 = vmatpush.bf16.msra.mxu0 %v1125
    %2793 = vmatpush.bf16.msra.mxu0 %v1121
    %2794 = vmatmul.bf16.gmra.mxu0 %v2746
    %v2795 = vpop.f32.mrf.mxu0
    %v2796 = vadd.f32 %v2783, %v2795
    %v2797 = vpop.f32.mrf.mxu0
    %2798 = vdwg.mxu0
    %2799 = vmatpush.bf16.msra.mxu0 %v1118
    %2800 = vmatpush.bf16.msra.mxu0 %v1114
    %2801 = vmatpush.bf16.msra.mxu0 %v1110
    %2802 = vmatpush.bf16.msra.mxu0 %v1106
    %2803 = vmatpush.bf16.msra.mxu0 %v1102
    %2804 = vmatpush.bf16.msra.mxu0 %v1098
    %2805 = vmatpush.bf16.msra.mxu0 %v1094
    %2806 = vmatpush.bf16.msra.mxu0 %v1090
    %2807 = vmatmul.bf16.gmra.mxu0 %v2626
    %v2808 = vpop.f32.mrf.mxu0
    %v2809 = vadd.f32 %v472, %v2808
    %v2810 = vpop.f32.mrf.mxu0
    %2811 = vdwg.mxu0
    %2812 = vmatpush.bf16.msra.mxu0 %v1150
    %2813 = vmatpush.bf16.msra.mxu0 %v1146
    %2814 = vmatpush.bf16.msra.mxu0 %v1142
    %2815 = vmatpush.bf16.msra.mxu0 %v1138
    %2816 = vmatpush.bf16.msra.mxu0 %v1134
    %2817 = vmatpush.bf16.msra.mxu0 %v1130
    %2818 = vmatpush.bf16.msra.mxu0 %v1126
    %2819 = vmatpush.bf16.msra.mxu0 %v1122
    %2820 = vmatmul.bf16.gmra.mxu0 %v2746
    %v2821 = vpop.f32.mrf.mxu0
    %v2822 = vadd.f32 %v2809, %v2821
    %v2823 = vpop.f32.mrf.mxu0
    %2824 = vdwg.mxu0
    %2825 = vmatpush.bf16.msra.mxu0 %v1119
    %2826 = vmatpush.bf16.msra.mxu0 %v1115
    %2827 = vmatpush.bf16.msra.mxu0 %v1111
    %2828 = vmatpush.bf16.msra.mxu0 %v1107
    %2829 = vmatpush.bf16.msra.mxu0 %v1103
    %2830 = vmatpush.bf16.msra.mxu0 %v1099
    %2831 = vmatpush.bf16.msra.mxu0 %v1095
    %2832 = vmatpush.bf16.msra.mxu0 %v1091
    %2833 = vmatmul.bf16.gmra.mxu0 %v2626
    %v2834 = vpop.f32.mrf.mxu0
    %v2835 = vadd.f32 %v473, %v2834
    %v2836 = vpop.f32.mrf.mxu0
    %2837 = vdwg.mxu0
    %2838 = vmatpush.bf16.msra.mxu0 %v1151
    %2839 = vmatpush.bf16.msra.mxu0 %v1147
    %2840 = vmatpush.bf16.msra.mxu0 %v1143
    %2841 = vmatpush.bf16.msra.mxu0 %v1139
    %2842 = vmatpush.bf16.msra.mxu0 %v1135
    %2843 = vmatpush.bf16.msra.mxu0 %v1131
    %2844 = vmatpush.bf16.msra.mxu0 %v1127
    %2845 = vmatpush.bf16.msra.mxu0 %v1123
    %2846 = vmatmul.bf16.gmra.mxu0 %v2746
    %v2847 = vpop.f32.mrf.mxu0
    %v2848 = vadd.f32 %v2835, %v2847
    %v2849 = vpop.f32.mrf.mxu0
    %2850 = vdwg.mxu0
    %v2851 = vxor.u32 %v2770, 2147483648
    %v2852 = vmul.f32 %v2851, 1.442695
    %v2853 = vpow.pop %v2852
    %v2854 = vadd.f32 %v2853, 1.0
    %v2855 = vrcp.pop %v2854
    %v2856 = vmul.f32 %v2854, %v2855
    %v2857 = vsub.f32 1.0, %v2856
    %v2858 = vmul.f32 %v2855, %v2857
    %v2859 = vadd.f32 %v2855, %v2858
    %vm2860 = vweird.f32 %v2854
    %vm2861 = vweird.f32 %v2855
    %vm2862 = vmor %vm2860, %vm2861
    %v2863 = vsel %vm2862, %v2855, %v2859
    %v2864 = vand.u32 2147483647, %v2854
    %vm2865 = vcmp.eq.f32.partialorder %v2864, 8.507059e+37
    %v2866 = vand.u32 %v2854, 2147483648
    %v2867 = vor.u32 1.1754944e-38, %v2866
    %v2868 = vsel %vm2865, %v2867, %v2863
    %v2869 = vmul.f32 1.0, %v2868
    %v2870 = vxor.u32 %v2796, 2147483648
    %v2871 = vmul.f32 %v2870, 1.442695
    %v2872 = vpow.pop %v2871
    %v2873 = vadd.f32 %v2872, 1.0
    %v2874 = vrcp.pop %v2873
    %v2875 = vmul.f32 %v2873, %v2874
    %v2876 = vsub.f32 1.0, %v2875
    %v2877 = vmul.f32 %v2874, %v2876
    %v2878 = vadd.f32 %v2874, %v2877
    %vm2879 = vweird.f32 %v2873
    %vm2880 = vweird.f32 %v2874
    %vm2881 = vmor %vm2879, %vm2880
    %v2882 = vsel %vm2881, %v2874, %v2878
    %v2883 = vand.u32 2147483647, %v2873
    %vm2884 = vcmp.eq.f32.partialorder %v2883, 8.507059e+37
    %v2885 = vand.u32 %v2873, 2147483648
    %v2886 = vor.u32 1.1754944e-38, %v2885
    %v2887 = vsel %vm2884, %v2886, %v2882
    %v2888 = vmul.f32 1.0, %v2887
    %v2889 = vtanh.pop %v2822
    %v2890 = vxor.u32 %v2848, 2147483648
    %v2891 = vmul.f32 %v2890, 1.442695
    %v2892 = vpow.pop %v2891
    %v2893 = vadd.f32 %v2892, 1.0
    %v2894 = vrcp.pop %v2893
    %v2895 = vmul.f32 %v2893, %v2894
    %v2896 = vsub.f32 1.0, %v2895
    %v2897 = vmul.f32 %v2894, %v2896
    %v2898 = vadd.f32 %v2894, %v2897
    %vm2899 = vweird.f32 %v2893
    %vm2900 = vweird.f32 %v2894
    %vm2901 = vmor %vm2899, %vm2900
    %v2902 = vsel %vm2901, %v2894, %v2898
    %v2903 = vand.u32 2147483647, %v2893
    %vm2904 = vcmp.eq.f32.partialorder %v2903, 8.507059e+37
    %v2905 = vand.u32 %v2893, 2147483648
    %v2906 = vor.u32 1.1754944e-38, %v2905
    %v2907 = vsel %vm2904, %v2906, %v2902
    %v2908 = vmul.f32 1.0, %v2907
    %v2909 = vmul.f32 %v2888, %v2451
    %v2910 = vmul.f32 %v2869, %v2889
    %v2911 = vadd.f32 %v2909, %v2910
    %v2912 = vtanh.pop %v2911
    %v2913 = vmul.f32 %v2908, %v2912
    %v2914 = vpack.c.bf16 %v2621, %v2621
    %2915 = vmatpush.bf16.msra.mxu0 %v1895
    %2916 = vmatpush.bf16.msra.mxu0 %v1891
    %2917 = vmatpush.bf16.msra.mxu0 %v1887
    %2918 = vmatpush.bf16.msra.mxu0 %v1883
    %2919 = vmatpush.bf16.msra.mxu0 %v1879
    %2920 = vmatpush.bf16.msra.mxu0 %v1875
    %2921 = vmatpush.bf16.msra.mxu0 %v1871
    %2922 = vmatpush.bf16.msra.mxu0 %v1867
    %2923 = vmatmul.bf16.gmra.mxu0 %v2746
    %v2924 = vpop.f32.mrf.mxu0
    %v2925 = vadd.f32 %v480, %v2924
    %v2926 = vpop.f32.mrf.mxu0
    %2927 = vdwg.mxu0
    %2928 = vmatpush.bf16.msra.mxu0 %v1927
    %2929 = vmatpush.bf16.msra.mxu0 %v1923
    %2930 = vmatpush.bf16.msra.mxu0 %v1919
    %2931 = vmatpush.bf16.msra.mxu0 %v1915
    %2932 = vmatpush.bf16.msra.mxu0 %v1911
    %2933 = vmatpush.bf16.msra.mxu0 %v1907
    %2934 = vmatpush.bf16.msra.mxu0 %v1903
    %2935 = vmatpush.bf16.msra.mxu0 %v1899
    %2936 = vmatmul.bf16.gmra.mxu0 %v2914
    %v2937 = vpop.f32.mrf.mxu0
    %v2938 = vadd.f32 %v2925, %v2937
    %v2939 = vpop.f32.mrf.mxu0
    %2940 = vdwg.mxu0
    %2941 = vmatpush.bf16.msra.mxu0 %v1896
    %2942 = vmatpush.bf16.msra.mxu0 %v1892
    %2943 = vmatpush.bf16.msra.mxu0 %v1888
    %2944 = vmatpush.bf16.msra.mxu0 %v1884
    %2945 = vmatpush.bf16.msra.mxu0 %v1880
    %2946 = vmatpush.bf16.msra.mxu0 %v1876
    %2947 = vmatpush.bf16.msra.mxu0 %v1872
    %2948 = vmatpush.bf16.msra.mxu0 %v1868
    %2949 = vmatmul.bf16.gmra.mxu0 %v2746
    %v2950 = vpop.f32.mrf.mxu0
    %v2951 = vadd.f32 %v481, %v2950
    %v2952 = vpop.f32.mrf.mxu0
    %2953 = vdwg.mxu0
    %2954 = vmatpush.bf16.msra.mxu0 %v1928
    %2955 = vmatpush.bf16.msra.mxu0 %v1924
    %2956 = vmatpush.bf16.msra.mxu0 %v1920
    %2957 = vmatpush.bf16.msra.mxu0 %v1916
    %2958 = vmatpush.bf16.msra.mxu0 %v1912
    %2959 = vmatpush.bf16.msra.mxu0 %v1908
    %2960 = vmatpush.bf16.msra.mxu0 %v1904
    %2961 = vmatpush.bf16.msra.mxu0 %v1900
    %2962 = vmatmul.bf16.gmra.mxu0 %v2914
    %v2963 = vpop.f32.mrf.mxu0
    %v2964 = vadd.f32 %v2951, %v2963
    %v2965 = vpop.f32.mrf.mxu0
    %2966 = vdwg.mxu0
    %2967 = vmatpush.bf16.msra.mxu0 %v1897
    %2968 = vmatpush.bf16.msra.mxu0 %v1893
    %2969 = vmatpush.bf16.msra.mxu0 %v1889
    %2970 = vmatpush.bf16.msra.mxu0 %v1885
    %2971 = vmatpush.bf16.msra.mxu0 %v1881
    %2972 = vmatpush.bf16.msra.mxu0 %v1877
    %2973 = vmatpush.bf16.msra.mxu0 %v1873
    %2974 = vmatpush.bf16.msra.mxu0 %v1869
    %2975 = vmatmul.bf16.gmra.mxu0 %v2746
    %v2976 = vpop.f32.mrf.mxu0
    %v2977 = vadd.f32 %v482, %v2976
    %v2978 = vpop.f32.mrf.mxu0
    %2979 = vdwg.mxu0
    %2980 = vmatpush.bf16.msra.mxu0 %v1929
    %2981 = vmatpush.bf16.msra.mxu0 %v1925
    %2982 = vmatpush.bf16.msra.mxu0 %v1921
    %2983 = vmatpush.bf16.msra.mxu0 %v1917
    %2984 = vmatpush.bf16.msra.mxu0 %v1913
    %2985 = vmatpush.bf16.msra.mxu0 %v1909
    %2986 = vmatpush.bf16.msra.mxu0 %v1905
    %2987 = vmatpush.bf16.msra.mxu0 %v1901
    %2988 = vmatmul.bf16.gmra.mxu0 %v2914
    %v2989 = vpop.f32.mrf.mxu0
    %v2990 = vadd.f32 %v2977, %v2989
    %v2991 = vpop.f32.mrf.mxu0
    %2992 = vdwg.mxu0
    %2993 = vmatpush.bf16.msra.mxu0 %v1898
    %2994 = vmatpush.bf16.msra.mxu0 %v1894
    %2995 = vmatpush.bf16.msra.mxu0 %v1890
    %2996 = vmatpush.bf16.msra.mxu0 %v1886
    %2997 = vmatpush.bf16.msra.mxu0 %v1882
    %2998 = vmatpush.bf16.msra.mxu0 %v1878
    %2999 = vmatpush.bf16.msra.mxu0 %v1874
    %3000 = vmatpush.bf16.msra.mxu0 %v1870
    %3001 = vmatmul.bf16.gmra.mxu0 %v2746
    %v3002 = vpop.f32.mrf.mxu0
    %v3003 = vadd.f32 %v483, %v3002
    %v3004 = vpop.f32.mrf.mxu0
    %3005 = vdwg.mxu0
    %3006 = vmatpush.bf16.msra.mxu0 %v1930
    %3007 = vmatpush.bf16.msra.mxu0 %v1926
    %3008 = vmatpush.bf16.msra.mxu0 %v1922
    %3009 = vmatpush.bf16.msra.mxu0 %v1918
    %3010 = vmatpush.bf16.msra.mxu0 %v1914
    %3011 = vmatpush.bf16.msra.mxu0 %v1910
    %3012 = vmatpush.bf16.msra.mxu0 %v1906
    %3013 = vmatpush.bf16.msra.mxu0 %v1902
    %3014 = vmatmul.bf16.gmra.mxu0 %v2914
    %v3015 = vpop.f32.mrf.mxu0
    %v3016 = vadd.f32 %v3003, %v3015
    %v3017 = vpop.f32.mrf.mxu0
    %3018 = vdwg.mxu0
    %v3019 = vxor.u32 %v2938, 2147483648
    %v3020 = vmul.f32 %v3019, 1.442695
    %v3021 = vpow.pop %v3020
    %v3022 = vadd.f32 %v3021, 1.0
    %v3023 = vrcp.pop %v3022
    %v3024 = vmul.f32 %v3022, %v3023
    %v3025 = vsub.f32 1.0, %v3024
    %v3026 = vmul.f32 %v3023, %v3025
    %v3027 = vadd.f32 %v3023, %v3026
    %vm3028 = vweird.f32 %v3022
    %vm3029 = vweird.f32 %v3023
    %vm3030 = vmor %vm3028, %vm3029
    %v3031 = vsel %vm3030, %v3023, %v3027
    %v3032 = vand.u32 2147483647, %v3022
    %vm3033 = vcmp.eq.f32.partialorder %v3032, 8.507059e+37
    %v3034 = vand.u32 %v3022, 2147483648
    %v3035 = vor.u32 1.1754944e-38, %v3034
    %v3036 = vsel %vm3033, %v3035, %v3031
    %v3037 = vmul.f32 1.0, %v3036
    %v3038 = vxor.u32 %v2964, 2147483648
    %v3039 = vmul.f32 %v3038, 1.442695
    %v3040 = vpow.pop %v3039
    %v3041 = vadd.f32 %v3040, 1.0
    %v3042 = vrcp.pop %v3041
    %v3043 = vmul.f32 %v3041, %v3042
    %v3044 = vsub.f32 1.0, %v3043
    %v3045 = vmul.f32 %v3042, %v3044
    %v3046 = vadd.f32 %v3042, %v3045
    %vm3047 = vweird.f32 %v3041
    %vm3048 = vweird.f32 %v3042
    %vm3049 = vmor %vm3047, %vm3048
    %v3050 = vsel %vm3049, %v3042, %v3046
    %v3051 = vand.u32 2147483647, %v3041
    %vm3052 = vcmp.eq.f32.partialorder %v3051, 8.507059e+37
    %v3053 = vand.u32 %v3041, 2147483648
    %v3054 = vor.u32 1.1754944e-38, %v3053
    %v3055 = vsel %vm3052, %v3054, %v3050
    %v3056 = vmul.f32 1.0, %v3055
    %v3057 = vtanh.pop %v2990
    %v3058 = vxor.u32 %v3016, 2147483648
    %v3059 = vmul.f32 %v3058, 1.442695
    %v3060 = vpow.pop %v3059
    %v3061 = vadd.f32 %v3060, 1.0
    %v3062 = vrcp.pop %v3061
    %v3063 = vmul.f32 %v3061, %v3062
    %v3064 = vsub.f32 1.0, %v3063
    %v3065 = vmul.f32 %v3062, %v3064
    %v3066 = vadd.f32 %v3062, %v3065
    %vm3067 = vweird.f32 %v3061
    %vm3068 = vweird.f32 %v3062
    %vm3069 = vmor %vm3067, %vm3068
    %v3070 = vsel %vm3069, %v3062, %v3066
    %v3071 = vand.u32 2147483647, %v3061
    %vm3072 = vcmp.eq.f32.partialorder %v3071, 8.507059e+37
    %v3073 = vand.u32 %v3061, 2147483648
    %v3074 = vor.u32 1.1754944e-38, %v3073
    %v3075 = vsel %vm3072, %v3074, %v3070
    %v3076 = vmul.f32 1.0, %v3075
    %v3077 = vmul.f32 %v3056, %v2619
    %v3078 = vmul.f32 %v3037, %v3057
    %v3079 = vadd.f32 %v3077, %v3078
    %v3080 = vtanh.pop %v3079
    %v3081 = vmul.f32 %v3076, %v3080
    %v3082 = vld [vmem:[#allocation2 + $0xa0] sm:$0xff]
    %v3083 = vld [vmem:[#allocation2 + $0xa8] sm:$0xff]
    %v3084 = vld [vmem:[#allocation2 + $0xb0] sm:$0xff]
    %v3085 = vld [vmem:[#allocation2 + $0xb8] sm:$0xff]
    %v3086 = vpack.c.bf16 %v2745, %v2745
    %3087 = vmatpush.bf16.msra.mxu0 %v616
    %3088 = vmatpush.bf16.msra.mxu0 %v612
    %3089 = vmatpush.bf16.msra.mxu0 %v608
    %3090 = vmatpush.bf16.msra.mxu0 %v604
    %3091 = vmatpush.bf16.msra.mxu0 %v600
    %3092 = vmatpush.bf16.msra.mxu0 %v596
    %3093 = vmatpush.bf16.msra.mxu0 %v592
    %3094 = vmatpush.bf16.msra.mxu0 %v588
    %3095 = vmatmul.bf16.gmra.mxu0 %v3086
    %v3096 = vpop.f32.mrf.mxu0
    %v3097 = vadd.f32 0.0, %v3096
    %v3098 = vpop.f32.mrf.mxu0
    %3099 = vdwg.mxu0
    %3100 = vmatpush.bf16.msra.mxu0 %v617
    %3101 = vmatpush.bf16.msra.mxu0 %v613
    %3102 = vmatpush.bf16.msra.mxu0 %v609
    %3103 = vmatpush.bf16.msra.mxu0 %v605
    %3104 = vmatpush.bf16.msra.mxu0 %v601
    %3105 = vmatpush.bf16.msra.mxu0 %v597
    %3106 = vmatpush.bf16.msra.mxu0 %v593
    %3107 = vmatpush.bf16.msra.mxu0 %v589
    %3108 = vmatmul.bf16.gmra.mxu0 %v3086
    %v3109 = vpop.f32.mrf.mxu0
    %v3110 = vadd.f32 0.0, %v3109
    %v3111 = vpop.f32.mrf.mxu0
    %3112 = vdwg.mxu0
    %3113 = vmatpush.bf16.msra.mxu0 %v618
    %3114 = vmatpush.bf16.msra.mxu0 %v614
    %3115 = vmatpush.bf16.msra.mxu0 %v610
    %3116 = vmatpush.bf16.msra.mxu0 %v606
    %3117 = vmatpush.bf16.msra.mxu0 %v602
    %3118 = vmatpush.bf16.msra.mxu0 %v598
    %3119 = vmatpush.bf16.msra.mxu0 %v594
    %3120 = vmatpush.bf16.msra.mxu0 %v590
    %3121 = vmatmul.bf16.gmra.mxu0 %v3086
    %v3122 = vpop.f32.mrf.mxu0
    %v3123 = vadd.f32 0.0, %v3122
    %v3124 = vpop.f32.mrf.mxu0
    %3125 = vdwg.mxu0
    %3126 = vmatpush.bf16.msra.mxu0 %v619
    %3127 = vmatpush.bf16.msra.mxu0 %v615
    %3128 = vmatpush.bf16.msra.mxu0 %v611
    %3129 = vmatpush.bf16.msra.mxu0 %v607
    %3130 = vmatpush.bf16.msra.mxu0 %v603
    %3131 = vmatpush.bf16.msra.mxu0 %v599
    %3132 = vmatpush.bf16.msra.mxu0 %v595
    %3133 = vmatpush.bf16.msra.mxu0 %v591
    %3134 = vmatmul.bf16.gmra.mxu0 %v3086
    %v3135 = vpop.f32.mrf.mxu0
    %v3136 = vadd.f32 0.0, %v3135
    %v3137 = vpop.f32.mrf.mxu0
    %3138 = vdwg.mxu0
    %v3139 = vadd.f32 %v3082, %v3097
    %v3140 = vadd.f32 %v3083, %v3110
    %v3141 = vadd.f32 %v3084, %v3123
    %v3142 = vadd.f32 %v3085, %v3136
    %v3143 = vxor.u32 %v3139, 2147483648
    %v3144 = vmul.f32 %v3143, 1.442695
    %v3145 = vpow.pop %v3144
    %v3146 = vadd.f32 %v3145, 1.0
    %v3147 = vrcp.pop %v3146
    %v3148 = vmul.f32 %v3146, %v3147
    %v3149 = vsub.f32 1.0, %v3148
    %v3150 = vmul.f32 %v3147, %v3149
    %v3151 = vadd.f32 %v3147, %v3150
    %vm3152 = vweird.f32 %v3146
    %vm3153 = vweird.f32 %v3147
    %vm3154 = vmor %vm3152, %vm3153
    %v3155 = vsel %vm3154, %v3147, %v3151
    %v3156 = vand.u32 2147483647, %v3146
    %vm3157 = vcmp.eq.f32.partialorder %v3156, 8.507059e+37
    %v3158 = vand.u32 %v3146, 2147483648
    %v3159 = vor.u32 1.1754944e-38, %v3158
    %v3160 = vsel %vm3157, %v3159, %v3155
    %v3161 = vmul.f32 1.0, %v3160
    %v3162 = vxor.u32 %v3140, 2147483648
    %v3163 = vmul.f32 %v3162, 1.442695
    %v3164 = vpow.pop %v3163
    %v3165 = vadd.f32 %v3164, 1.0
    %v3166 = vrcp.pop %v3165
    %v3167 = vmul.f32 %v3165, %v3166
    %v3168 = vsub.f32 1.0, %v3167
    %v3169 = vmul.f32 %v3166, %v3168
    %v3170 = vadd.f32 %v3166, %v3169
    %vm3171 = vweird.f32 %v3165
    %vm3172 = vweird.f32 %v3166
    %vm3173 = vmor %vm3171, %vm3172
    %v3174 = vsel %vm3173, %v3166, %v3170
    %v3175 = vand.u32 2147483647, %v3165
    %vm3176 = vcmp.eq.f32.partialorder %v3175, 8.507059e+37
    %v3177 = vand.u32 %v3165, 2147483648
    %v3178 = vor.u32 1.1754944e-38, %v3177
    %v3179 = vsel %vm3176, %v3178, %v3174
    %v3180 = vmul.f32 1.0, %v3179
    %v3181 = vtanh.pop %v3141
    %v3182 = vxor.u32 %v3142, 2147483648
    %v3183 = vmul.f32 %v3182, 1.442695
    %v3184 = vpow.pop %v3183
    %v3185 = vadd.f32 %v3184, 1.0
    %v3186 = vrcp.pop %v3185
    %v3187 = vmul.f32 %v3185, %v3186
    %v3188 = vsub.f32 1.0, %v3187
    %v3189 = vmul.f32 %v3186, %v3188
    %v3190 = vadd.f32 %v3186, %v3189
    %vm3191 = vweird.f32 %v3185
    %vm3192 = vweird.f32 %v3186
    %vm3193 = vmor %vm3191, %vm3192
    %v3194 = vsel %vm3193, %v3186, %v3190
    %v3195 = vand.u32 2147483647, %v3185
    %vm3196 = vcmp.eq.f32.partialorder %v3195, 8.507059e+37
    %v3197 = vand.u32 %v3185, 2147483648
    %v3198 = vor.u32 1.1754944e-38, %v3197
    %v3199 = vsel %vm3196, %v3198, %v3194
    %v3200 = vmul.f32 1.0, %v3199
    %v3201 = vmul.f32 %v3180, %v2743
    %v3202 = vmul.f32 %v3161, %v3181
    %v3203 = vadd.f32 %v3201, %v3202
    %v3204 = vtanh.pop %v3203
    %v3205 = vmul.f32 %v3200, %v3204
    %v3206 = vpack.c.bf16 %v2913, %v2913
    %3207 = vmatpush.bf16.msra.mxu0 %v1116
    %3208 = vmatpush.bf16.msra.mxu0 %v1112
    %3209 = vmatpush.bf16.msra.mxu0 %v1108
    %3210 = vmatpush.bf16.msra.mxu0 %v1104
    %3211 = vmatpush.bf16.msra.mxu0 %v1100
    %3212 = vmatpush.bf16.msra.mxu0 %v1096
    %3213 = vmatpush.bf16.msra.mxu0 %v1092
    %3214 = vmatpush.bf16.msra.mxu0 %v1088
    %3215 = vmatmul.bf16.gmra.mxu0 %v3086
    %v3216 = vpop.f32.mrf.mxu0
    %v3217 = vadd.f32 %v470, %v3216
    %v3218 = vpop.f32.mrf.mxu0
    %3219 = vdwg.mxu0
    %3220 = vmatpush.bf16.msra.mxu0 %v1148
    %3221 = vmatpush.bf16.msra.mxu0 %v1144
    %3222 = vmatpush.bf16.msra.mxu0 %v1140
    %3223 = vmatpush.bf16.msra.mxu0 %v1136
    %3224 = vmatpush.bf16.msra.mxu0 %v1132
    %3225 = vmatpush.bf16.msra.mxu0 %v1128
    %3226 = vmatpush.bf16.msra.mxu0 %v1124
    %3227 = vmatpush.bf16.msra.mxu0 %v1120
    %3228 = vmatmul.bf16.gmra.mxu0 %v3206
    %v3229 = vpop.f32.mrf.mxu0
    %v3230 = vadd.f32 %v3217, %v3229
    %v3231 = vpop.f32.mrf.mxu0
    %3232 = vdwg.mxu0
    %3233 = vmatpush.bf16.msra.mxu0 %v1117
    %3234 = vmatpush.bf16.msra.mxu0 %v1113
    %3235 = vmatpush.bf16.msra.mxu0 %v1109
    %3236 = vmatpush.bf16.msra.mxu0 %v1105
    %3237 = vmatpush.bf16.msra.mxu0 %v1101
    %3238 = vmatpush.bf16.msra.mxu0 %v1097
    %3239 = vmatpush.bf16.msra.mxu0 %v1093
    %3240 = vmatpush.bf16.msra.mxu0 %v1089
    %3241 = vmatmul.bf16.gmra.mxu0 %v3086
    %v3242 = vpop.f32.mrf.mxu0
    %v3243 = vadd.f32 %v471, %v3242
    %v3244 = vpop.f32.mrf.mxu0
    %3245 = vdwg.mxu0
    %3246 = vmatpush.bf16.msra.mxu0 %v1149
    %3247 = vmatpush.bf16.msra.mxu0 %v1145
    %3248 = vmatpush.bf16.msra.mxu0 %v1141
    %3249 = vmatpush.bf16.msra.mxu0 %v1137
    %3250 = vmatpush.bf16.msra.mxu0 %v1133
    %3251 = vmatpush.bf16.msra.mxu0 %v1129
    %3252 = vmatpush.bf16.msra.mxu0 %v1125
    %3253 = vmatpush.bf16.msra.mxu0 %v1121
    %3254 = vmatmul.bf16.gmra.mxu0 %v3206
    %v3255 = vpop.f32.mrf.mxu0
    %v3256 = vadd.f32 %v3243, %v3255
    %v3257 = vpop.f32.mrf.mxu0
    %3258 = vdwg.mxu0
    %3259 = vmatpush.bf16.msra.mxu0 %v1118
    %3260 = vmatpush.bf16.msra.mxu0 %v1114
    %3261 = vmatpush.bf16.msra.mxu0 %v1110
    %3262 = vmatpush.bf16.msra.mxu0 %v1106
    %3263 = vmatpush.bf16.msra.mxu0 %v1102
    %3264 = vmatpush.bf16.msra.mxu0 %v1098
    %3265 = vmatpush.bf16.msra.mxu0 %v1094
    %3266 = vmatpush.bf16.msra.mxu0 %v1090
    %3267 = vmatmul.bf16.gmra.mxu0 %v3086
    %v3268 = vpop.f32.mrf.mxu0
    %v3269 = vadd.f32 %v472, %v3268
    %v3270 = vpop.f32.mrf.mxu0
    %3271 = vdwg.mxu0
    %3272 = vmatpush.bf16.msra.mxu0 %v1150
    %3273 = vmatpush.bf16.msra.mxu0 %v1146
    %3274 = vmatpush.bf16.msra.mxu0 %v1142
    %3275 = vmatpush.bf16.msra.mxu0 %v1138
    %3276 = vmatpush.bf16.msra.mxu0 %v1134
    %3277 = vmatpush.bf16.msra.mxu0 %v1130
    %3278 = vmatpush.bf16.msra.mxu0 %v1126
    %3279 = vmatpush.bf16.msra.mxu0 %v1122
    %3280 = vmatmul.bf16.gmra.mxu0 %v3206
    %v3281 = vpop.f32.mrf.mxu0
    %v3282 = vadd.f32 %v3269, %v3281
    %v3283 = vpop.f32.mrf.mxu0
    %3284 = vdwg.mxu0
    %3285 = vmatpush.bf16.msra.mxu0 %v1119
    %3286 = vmatpush.bf16.msra.mxu0 %v1115
    %3287 = vmatpush.bf16.msra.mxu0 %v1111
    %3288 = vmatpush.bf16.msra.mxu0 %v1107
    %3289 = vmatpush.bf16.msra.mxu0 %v1103
    %3290 = vmatpush.bf16.msra.mxu0 %v1099
    %3291 = vmatpush.bf16.msra.mxu0 %v1095
    %3292 = vmatpush.bf16.msra.mxu0 %v1091
    %3293 = vmatmul.bf16.gmra.mxu0 %v3086
    %v3294 = vpop.f32.mrf.mxu0
    %v3295 = vadd.f32 %v473, %v3294
    %v3296 = vpop.f32.mrf.mxu0
    %3297 = vdwg.mxu0
    %3298 = vmatpush.bf16.msra.mxu0 %v1151
    %3299 = vmatpush.bf16.msra.mxu0 %v1147
    %3300 = vmatpush.bf16.msra.mxu0 %v1143
    %3301 = vmatpush.bf16.msra.mxu0 %v1139
    %3302 = vmatpush.bf16.msra.mxu0 %v1135
    %3303 = vmatpush.bf16.msra.mxu0 %v1131
    %3304 = vmatpush.bf16.msra.mxu0 %v1127
    %3305 = vmatpush.bf16.msra.mxu0 %v1123
    %3306 = vmatmul.bf16.gmra.mxu0 %v3206
    %v3307 = vpop.f32.mrf.mxu0
    %v3308 = vadd.f32 %v3295, %v3307
    %v3309 = vpop.f32.mrf.mxu0
    %3310 = vdwg.mxu0
    %v3311 = vxor.u32 %v3230, 2147483648
    %v3312 = vmul.f32 %v3311, 1.442695
    %v3313 = vpow.pop %v3312
    %v3314 = vadd.f32 %v3313, 1.0
    %v3315 = vrcp.pop %v3314
    %v3316 = vmul.f32 %v3314, %v3315
    %v3317 = vsub.f32 1.0, %v3316
    %v3318 = vmul.f32 %v3315, %v3317
    %v3319 = vadd.f32 %v3315, %v3318
    %vm3320 = vweird.f32 %v3314
    %vm3321 = vweird.f32 %v3315
    %vm3322 = vmor %vm3320, %vm3321
    %v3323 = vsel %vm3322, %v3315, %v3319
    %v3324 = vand.u32 2147483647, %v3314
    %vm3325 = vcmp.eq.f32.partialorder %v3324, 8.507059e+37
    %v3326 = vand.u32 %v3314, 2147483648
    %v3327 = vor.u32 1.1754944e-38, %v3326
    %v3328 = vsel %vm3325, %v3327, %v3323
    %v3329 = vmul.f32 1.0, %v3328
    %v3330 = vxor.u32 %v3256, 2147483648
    %v3331 = vmul.f32 %v3330, 1.442695
    %v3332 = vpow.pop %v3331
    %v3333 = vadd.f32 %v3332, 1.0
    %v3334 = vrcp.pop %v3333
    %v3335 = vmul.f32 %v3333, %v3334
    %v3336 = vsub.f32 1.0, %v3335
    %v3337 = vmul.f32 %v3334, %v3336
    %v3338 = vadd.f32 %v3334, %v3337
    %vm3339 = vweird.f32 %v3333
    %vm3340 = vweird.f32 %v3334
    %vm3341 = vmor %vm3339, %vm3340
    %v3342 = vsel %vm3341, %v3334, %v3338
    %v3343 = vand.u32 2147483647, %v3333
    %vm3344 = vcmp.eq.f32.partialorder %v3343, 8.507059e+37
    %v3345 = vand.u32 %v3333, 2147483648
    %v3346 = vor.u32 1.1754944e-38, %v3345
    %v3347 = vsel %vm3344, %v3346, %v3342
    %v3348 = vmul.f32 1.0, %v3347
    %v3349 = vtanh.pop %v3282
    %v3350 = vxor.u32 %v3308, 2147483648
    %v3351 = vmul.f32 %v3350, 1.442695
    %v3352 = vpow.pop %v3351
    %v3353 = vadd.f32 %v3352, 1.0
    %v3354 = vrcp.pop %v3353
    %v3355 = vmul.f32 %v3353, %v3354
    %v3356 = vsub.f32 1.0, %v3355
    %v3357 = vmul.f32 %v3354, %v3356
    %v3358 = vadd.f32 %v3354, %v3357
    %vm3359 = vweird.f32 %v3353
    %vm3360 = vweird.f32 %v3354
    %vm3361 = vmor %vm3359, %vm3360
    %v3362 = vsel %vm3361, %v3354, %v3358
    %v3363 = vand.u32 2147483647, %v3353
    %vm3364 = vcmp.eq.f32.partialorder %v3363, 8.507059e+37
    %v3365 = vand.u32 %v3353, 2147483648
    %v3366 = vor.u32 1.1754944e-38, %v3365
    %v3367 = vsel %vm3364, %v3366, %v3362
    %v3368 = vmul.f32 1.0, %v3367
    %v3369 = vmul.f32 %v3348, %v2911
    %v3370 = vmul.f32 %v3329, %v3349
    %v3371 = vadd.f32 %v3369, %v3370
    %v3372 = vtanh.pop %v3371
    %v3373 = vmul.f32 %v3368, %v3372
    %v3374 = vpack.c.bf16 %v3081, %v3081
    %3375 = vmatpush.bf16.msra.mxu0 %v1895
    %3376 = vmatpush.bf16.msra.mxu0 %v1891
    %3377 = vmatpush.bf16.msra.mxu0 %v1887
    %3378 = vmatpush.bf16.msra.mxu0 %v1883
    %3379 = vmatpush.bf16.msra.mxu0 %v1879
    %3380 = vmatpush.bf16.msra.mxu0 %v1875
    %3381 = vmatpush.bf16.msra.mxu0 %v1871
    %3382 = vmatpush.bf16.msra.mxu0 %v1867
    %3383 = vmatmul.bf16.gmra.mxu0 %v3206
    %v3384 = vpop.f32.mrf.mxu0
    %v3385 = vadd.f32 %v480, %v3384
    %v3386 = vpop.f32.mrf.mxu0
    %3387 = vdwg.mxu0
    %3388 = vmatpush.bf16.msra.mxu0 %v1927
    %3389 = vmatpush.bf16.msra.mxu0 %v1923
    %3390 = vmatpush.bf16.msra.mxu0 %v1919
    %3391 = vmatpush.bf16.msra.mxu0 %v1915
    %3392 = vmatpush.bf16.msra.mxu0 %v1911
    %3393 = vmatpush.bf16.msra.mxu0 %v1907
    %3394 = vmatpush.bf16.msra.mxu0 %v1903
    %3395 = vmatpush.bf16.msra.mxu0 %v1899
    %3396 = vmatmul.bf16.gmra.mxu0 %v3374
    %v3397 = vpop.f32.mrf.mxu0
    %v3398 = vadd.f32 %v3385, %v3397
    %v3399 = vpop.f32.mrf.mxu0
    %3400 = vdwg.mxu0
    %3401 = vmatpush.bf16.msra.mxu0 %v1896
    %3402 = vmatpush.bf16.msra.mxu0 %v1892
    %3403 = vmatpush.bf16.msra.mxu0 %v1888
    %3404 = vmatpush.bf16.msra.mxu0 %v1884
    %3405 = vmatpush.bf16.msra.mxu0 %v1880
    %3406 = vmatpush.bf16.msra.mxu0 %v1876
    %3407 = vmatpush.bf16.msra.mxu0 %v1872
    %3408 = vmatpush.bf16.msra.mxu0 %v1868
    %3409 = vmatmul.bf16.gmra.mxu0 %v3206
    %v3410 = vpop.f32.mrf.mxu0
    %v3411 = vadd.f32 %v481, %v3410
    %v3412 = vpop.f32.mrf.mxu0
    %3413 = vdwg.mxu0
    %3414 = vmatpush.bf16.msra.mxu0 %v1928
    %3415 = vmatpush.bf16.msra.mxu0 %v1924
    %3416 = vmatpush.bf16.msra.mxu0 %v1920
    %3417 = vmatpush.bf16.msra.mxu0 %v1916
    %3418 = vmatpush.bf16.msra.mxu0 %v1912
    %3419 = vmatpush.bf16.msra.mxu0 %v1908
    %3420 = vmatpush.bf16.msra.mxu0 %v1904
    %3421 = vmatpush.bf16.msra.mxu0 %v1900
    %3422 = vmatmul.bf16.gmra.mxu0 %v3374
    %v3423 = vpop.f32.mrf.mxu0
    %v3424 = vadd.f32 %v3411, %v3423
    %v3425 = vpop.f32.mrf.mxu0
    %3426 = vdwg.mxu0
    %3427 = vmatpush.bf16.msra.mxu0 %v1897
    %3428 = vmatpush.bf16.msra.mxu0 %v1893
    %3429 = vmatpush.bf16.msra.mxu0 %v1889
    %3430 = vmatpush.bf16.msra.mxu0 %v1885
    %3431 = vmatpush.bf16.msra.mxu0 %v1881
    %3432 = vmatpush.bf16.msra.mxu0 %v1877
    %3433 = vmatpush.bf16.msra.mxu0 %v1873
    %3434 = vmatpush.bf16.msra.mxu0 %v1869
    %3435 = vmatmul.bf16.gmra.mxu0 %v3206
    %v3436 = vpop.f32.mrf.mxu0
    %v3437 = vadd.f32 %v482, %v3436
    %v3438 = vpop.f32.mrf.mxu0
    %3439 = vdwg.mxu0
    %3440 = vmatpush.bf16.msra.mxu0 %v1929
    %3441 = vmatpush.bf16.msra.mxu0 %v1925
    %3442 = vmatpush.bf16.msra.mxu0 %v1921
    %3443 = vmatpush.bf16.msra.mxu0 %v1917
    %3444 = vmatpush.bf16.msra.mxu0 %v1913
    %3445 = vmatpush.bf16.msra.mxu0 %v1909
    %3446 = vmatpush.bf16.msra.mxu0 %v1905
    %3447 = vmatpush.bf16.msra.mxu0 %v1901
    %3448 = vmatmul.bf16.gmra.mxu0 %v3374
    %v3449 = vpop.f32.mrf.mxu0
    %v3450 = vadd.f32 %v3437, %v3449
    %v3451 = vpop.f32.mrf.mxu0
    %3452 = vdwg.mxu0
    %3453 = vmatpush.bf16.msra.mxu0 %v1898
    %3454 = vmatpush.bf16.msra.mxu0 %v1894
    %3455 = vmatpush.bf16.msra.mxu0 %v1890
    %3456 = vmatpush.bf16.msra.mxu0 %v1886
    %3457 = vmatpush.bf16.msra.mxu0 %v1882
    %3458 = vmatpush.bf16.msra.mxu0 %v1878
    %3459 = vmatpush.bf16.msra.mxu0 %v1874
    %3460 = vmatpush.bf16.msra.mxu0 %v1870
    %3461 = vmatmul.bf16.gmra.mxu0 %v3206
    %v3462 = vpop.f32.mrf.mxu0
    %v3463 = vadd.f32 %v483, %v3462
    %v3464 = vpop.f32.mrf.mxu0
    %3465 = vdwg.mxu0
    %3466 = vmatpush.bf16.msra.mxu0 %v1930
    %3467 = vmatpush.bf16.msra.mxu0 %v1926
    %3468 = vmatpush.bf16.msra.mxu0 %v1922
    %3469 = vmatpush.bf16.msra.mxu0 %v1918
    %3470 = vmatpush.bf16.msra.mxu0 %v1914
    %3471 = vmatpush.bf16.msra.mxu0 %v1910
    %3472 = vmatpush.bf16.msra.mxu0 %v1906
    %3473 = vmatpush.bf16.msra.mxu0 %v1902
    %3474 = vmatmul.bf16.gmra.mxu0 %v3374
    %v3475 = vpop.f32.mrf.mxu0
    %v3476 = vadd.f32 %v3463, %v3475
    %v3477 = vpop.f32.mrf.mxu0
    %3478 = vdwg.mxu0
    %v3479 = vxor.u32 %v3398, 2147483648
    %v3480 = vmul.f32 %v3479, 1.442695
    %v3481 = vpow.pop %v3480
    %v3482 = vadd.f32 %v3481, 1.0
    %v3483 = vrcp.pop %v3482
    %v3484 = vmul.f32 %v3482, %v3483
    %v3485 = vsub.f32 1.0, %v3484
    %v3486 = vmul.f32 %v3483, %v3485
    %v3487 = vadd.f32 %v3483, %v3486
    %vm3488 = vweird.f32 %v3482
    %vm3489 = vweird.f32 %v3483
    %vm3490 = vmor %vm3488, %vm3489
    %v3491 = vsel %vm3490, %v3483, %v3487
    %v3492 = vand.u32 2147483647, %v3482
    %vm3493 = vcmp.eq.f32.partialorder %v3492, 8.507059e+37
    %v3494 = vand.u32 %v3482, 2147483648
    %v3495 = vor.u32 1.1754944e-38, %v3494
    %v3496 = vsel %vm3493, %v3495, %v3491
    %v3497 = vmul.f32 1.0, %v3496
    %v3498 = vxor.u32 %v3424, 2147483648
    %v3499 = vmul.f32 %v3498, 1.442695
    %v3500 = vpow.pop %v3499
    %v3501 = vadd.f32 %v3500, 1.0
    %v3502 = vrcp.pop %v3501
    %v3503 = vmul.f32 %v3501, %v3502
    %v3504 = vsub.f32 1.0, %v3503
    %v3505 = vmul.f32 %v3502, %v3504
    %v3506 = vadd.f32 %v3502, %v3505
    %vm3507 = vweird.f32 %v3501
    %vm3508 = vweird.f32 %v3502
    %vm3509 = vmor %vm3507, %vm3508
    %v3510 = vsel %vm3509, %v3502, %v3506
    %v3511 = vand.u32 2147483647, %v3501
    %vm3512 = vcmp.eq.f32.partialorder %v3511, 8.507059e+37
    %v3513 = vand.u32 %v3501, 2147483648
    %v3514 = vor.u32 1.1754944e-38, %v3513
    %v3515 = vsel %vm3512, %v3514, %v3510
    %v3516 = vmul.f32 1.0, %v3515
    %v3517 = vtanh.pop %v3450
    %v3518 = vxor.u32 %v3476, 2147483648
    %v3519 = vmul.f32 %v3518, 1.442695
    %v3520 = vpow.pop %v3519
    %v3521 = vadd.f32 %v3520, 1.0
    %v3522 = vrcp.pop %v3521
    %v3523 = vmul.f32 %v3521, %v3522
    %v3524 = vsub.f32 1.0, %v3523
    %v3525 = vmul.f32 %v3522, %v3524
    %v3526 = vadd.f32 %v3522, %v3525
    %vm3527 = vweird.f32 %v3521
    %vm3528 = vweird.f32 %v3522
    %vm3529 = vmor %vm3527, %vm3528
    %v3530 = vsel %vm3529, %v3522, %v3526
    %v3531 = vand.u32 2147483647, %v3521
    %vm3532 = vcmp.eq.f32.partialorder %v3531, 8.507059e+37
    %v3533 = vand.u32 %v3521, 2147483648
    %v3534 = vor.u32 1.1754944e-38, %v3533
    %v3535 = vsel %vm3532, %v3534, %v3530
    %v3536 = vmul.f32 1.0, %v3535
    %v3537 = vmul.f32 %v3516, %v3079
    %v3538 = vmul.f32 %v3497, %v3517
    %v3539 = vadd.f32 %v3537, %v3538
    %v3540 = vtanh.pop %v3539
    %v3541 = vmul.f32 %v3536, %v3540
    %v3542 = vld [vmem:[#allocation2 + $0xc0] sm:$0xff]
    %v3543 = vld [vmem:[#allocation2 + $0xc8] sm:$0xff]
    %v3544 = vld [vmem:[#allocation2 + $0xd0] sm:$0xff]
    %v3545 = vld [vmem:[#allocation2 + $0xd8] sm:$0xff]
    %v3546 = vpack.c.bf16 %v3205, %v3205
    %3547 = vmatpush.bf16.msra.mxu0 %v616
    %3548 = vmatpush.bf16.msra.mxu0 %v612
    %3549 = vmatpush.bf16.msra.mxu0 %v608
    %3550 = vmatpush.bf16.msra.mxu0 %v604
    %3551 = vmatpush.bf16.msra.mxu0 %v600
    %3552 = vmatpush.bf16.msra.mxu0 %v596
    %3553 = vmatpush.bf16.msra.mxu0 %v592
    %3554 = vmatpush.bf16.msra.mxu0 %v588
    %3555 = vmatmul.bf16.gmra.mxu0 %v3546
    %v3556 = vpop.f32.mrf.mxu0
    %v3557 = vadd.f32 0.0, %v3556
    %v3558 = vpop.f32.mrf.mxu0
    %3559 = vdwg.mxu0
    %3560 = vmatpush.bf16.msra.mxu0 %v617
    %3561 = vmatpush.bf16.msra.mxu0 %v613
    %3562 = vmatpush.bf16.msra.mxu0 %v609
    %3563 = vmatpush.bf16.msra.mxu0 %v605
    %3564 = vmatpush.bf16.msra.mxu0 %v601
    %3565 = vmatpush.bf16.msra.mxu0 %v597
    %3566 = vmatpush.bf16.msra.mxu0 %v593
    %3567 = vmatpush.bf16.msra.mxu0 %v589
    %3568 = vmatmul.bf16.gmra.mxu0 %v3546
    %v3569 = vpop.f32.mrf.mxu0
    %v3570 = vadd.f32 0.0, %v3569
    %v3571 = vpop.f32.mrf.mxu0
    %3572 = vdwg.mxu0
    %3573 = vmatpush.bf16.msra.mxu0 %v618
    %3574 = vmatpush.bf16.msra.mxu0 %v614
    %3575 = vmatpush.bf16.msra.mxu0 %v610
    %3576 = vmatpush.bf16.msra.mxu0 %v606
    %3577 = vmatpush.bf16.msra.mxu0 %v602
    %3578 = vmatpush.bf16.msra.mxu0 %v598
    %3579 = vmatpush.bf16.msra.mxu0 %v594
    %3580 = vmatpush.bf16.msra.mxu0 %v590
    %3581 = vmatmul.bf16.gmra.mxu0 %v3546
    %v3582 = vpop.f32.mrf.mxu0
    %v3583 = vadd.f32 0.0, %v3582
    %v3584 = vpop.f32.mrf.mxu0
    %3585 = vdwg.mxu0
    %3586 = vmatpush.bf16.msra.mxu0 %v619
    %3587 = vmatpush.bf16.msra.mxu0 %v615
    %3588 = vmatpush.bf16.msra.mxu0 %v611
    %3589 = vmatpush.bf16.msra.mxu0 %v607
    %3590 = vmatpush.bf16.msra.mxu0 %v603
    %3591 = vmatpush.bf16.msra.mxu0 %v599
    %3592 = vmatpush.bf16.msra.mxu0 %v595
    %3593 = vmatpush.bf16.msra.mxu0 %v591
    %3594 = vmatmul.bf16.gmra.mxu0 %v3546
    %v3595 = vpop.f32.mrf.mxu0
    %v3596 = vadd.f32 0.0, %v3595
    %v3597 = vpop.f32.mrf.mxu0
    %3598 = vdwg.mxu0
    %v3599 = vadd.f32 %v3542, %v3557
    %v3600 = vadd.f32 %v3543, %v3570
    %v3601 = vadd.f32 %v3544, %v3583
    %v3602 = vadd.f32 %v3545, %v3596
    %v3603 = vxor.u32 %v3599, 2147483648
    %v3604 = vmul.f32 %v3603, 1.442695
    %v3605 = vpow.pop %v3604
    %v3606 = vadd.f32 %v3605, 1.0
    %v3607 = vrcp.pop %v3606
    %v3608 = vmul.f32 %v3606, %v3607
    %v3609 = vsub.f32 1.0, %v3608
    %v3610 = vmul.f32 %v3607, %v3609
    %v3611 = vadd.f32 %v3607, %v3610
    %vm3612 = vweird.f32 %v3606
    %vm3613 = vweird.f32 %v3607
    %vm3614 = vmor %vm3612, %vm3613
    %v3615 = vsel %vm3614, %v3607, %v3611
    %v3616 = vand.u32 2147483647, %v3606
    %vm3617 = vcmp.eq.f32.partialorder %v3616, 8.507059e+37
    %v3618 = vand.u32 %v3606, 2147483648
    %v3619 = vor.u32 1.1754944e-38, %v3618
    %v3620 = vsel %vm3617, %v3619, %v3615
    %v3621 = vmul.f32 1.0, %v3620
    %v3622 = vxor.u32 %v3600, 2147483648
    %v3623 = vmul.f32 %v3622, 1.442695
    %v3624 = vpow.pop %v3623
    %v3625 = vadd.f32 %v3624, 1.0
    %v3626 = vrcp.pop %v3625
    %v3627 = vmul.f32 %v3625, %v3626
    %v3628 = vsub.f32 1.0, %v3627
    %v3629 = vmul.f32 %v3626, %v3628
    %v3630 = vadd.f32 %v3626, %v3629
    %vm3631 = vweird.f32 %v3625
    %vm3632 = vweird.f32 %v3626
    %vm3633 = vmor %vm3631, %vm3632
    %v3634 = vsel %vm3633, %v3626, %v3630
    %v3635 = vand.u32 2147483647, %v3625
    %vm3636 = vcmp.eq.f32.partialorder %v3635, 8.507059e+37
    %v3637 = vand.u32 %v3625, 2147483648
    %v3638 = vor.u32 1.1754944e-38, %v3637
    %v3639 = vsel %vm3636, %v3638, %v3634
    %v3640 = vmul.f32 1.0, %v3639
    %v3641 = vtanh.pop %v3601
    %v3642 = vxor.u32 %v3602, 2147483648
    %v3643 = vmul.f32 %v3642, 1.442695
    %v3644 = vpow.pop %v3643
    %v3645 = vadd.f32 %v3644, 1.0
    %v3646 = vrcp.pop %v3645
    %v3647 = vmul.f32 %v3645, %v3646
    %v3648 = vsub.f32 1.0, %v3647
    %v3649 = vmul.f32 %v3646, %v3648
    %v3650 = vadd.f32 %v3646, %v3649
    %vm3651 = vweird.f32 %v3645
    %vm3652 = vweird.f32 %v3646
    %vm3653 = vmor %vm3651, %vm3652
    %v3654 = vsel %vm3653, %v3646, %v3650
    %v3655 = vand.u32 2147483647, %v3645
    %vm3656 = vcmp.eq.f32.partialorder %v3655, 8.507059e+37
    %v3657 = vand.u32 %v3645, 2147483648
    %v3658 = vor.u32 1.1754944e-38, %v3657
    %v3659 = vsel %vm3656, %v3658, %v3654
    %v3660 = vmul.f32 1.0, %v3659
    %v3661 = vmul.f32 %v3640, %v3203
    %v3662 = vmul.f32 %v3621, %v3641
    %v3663 = vadd.f32 %v3661, %v3662
    %v3664 = vtanh.pop %v3663
    %v3665 = vmul.f32 %v3660, %v3664
    %v3666 = vpack.c.bf16 %v3373, %v3373
    %3667 = vmatpush.bf16.msra.mxu0 %v1116
    %3668 = vmatpush.bf16.msra.mxu0 %v1112
    %3669 = vmatpush.bf16.msra.mxu0 %v1108
    %3670 = vmatpush.bf16.msra.mxu0 %v1104
    %3671 = vmatpush.bf16.msra.mxu0 %v1100
    %3672 = vmatpush.bf16.msra.mxu0 %v1096
    %3673 = vmatpush.bf16.msra.mxu0 %v1092
    %3674 = vmatpush.bf16.msra.mxu0 %v1088
    %3675 = vmatmul.bf16.gmra.mxu0 %v3546
    %v3676 = vpop.f32.mrf.mxu0
    %v3677 = vadd.f32 %v470, %v3676
    %v3678 = vpop.f32.mrf.mxu0
    %3679 = vdwg.mxu0
    %3680 = vmatpush.bf16.msra.mxu0 %v1148
    %3681 = vmatpush.bf16.msra.mxu0 %v1144
    %3682 = vmatpush.bf16.msra.mxu0 %v1140
    %3683 = vmatpush.bf16.msra.mxu0 %v1136
    %3684 = vmatpush.bf16.msra.mxu0 %v1132
    %3685 = vmatpush.bf16.msra.mxu0 %v1128
    %3686 = vmatpush.bf16.msra.mxu0 %v1124
    %3687 = vmatpush.bf16.msra.mxu0 %v1120
    %3688 = vmatmul.bf16.gmra.mxu0 %v3666
    %v3689 = vpop.f32.mrf.mxu0
    %v3690 = vadd.f32 %v3677, %v3689
    %v3691 = vpop.f32.mrf.mxu0
    %3692 = vdwg.mxu0
    %3693 = vmatpush.bf16.msra.mxu0 %v1117
    %3694 = vmatpush.bf16.msra.mxu0 %v1113
    %3695 = vmatpush.bf16.msra.mxu0 %v1109
    %3696 = vmatpush.bf16.msra.mxu0 %v1105
    %3697 = vmatpush.bf16.msra.mxu0 %v1101
    %3698 = vmatpush.bf16.msra.mxu0 %v1097
    %3699 = vmatpush.bf16.msra.mxu0 %v1093
    %3700 = vmatpush.bf16.msra.mxu0 %v1089
    %3701 = vmatmul.bf16.gmra.mxu0 %v3546
    %v3702 = vpop.f32.mrf.mxu0
    %v3703 = vadd.f32 %v471, %v3702
    %v3704 = vpop.f32.mrf.mxu0
    %3705 = vdwg.mxu0
    %3706 = vmatpush.bf16.msra.mxu0 %v1149
    %3707 = vmatpush.bf16.msra.mxu0 %v1145
    %3708 = vmatpush.bf16.msra.mxu0 %v1141
    %3709 = vmatpush.bf16.msra.mxu0 %v1137
    %3710 = vmatpush.bf16.msra.mxu0 %v1133
    %3711 = vmatpush.bf16.msra.mxu0 %v1129
    %3712 = vmatpush.bf16.msra.mxu0 %v1125
    %3713 = vmatpush.bf16.msra.mxu0 %v1121
    %3714 = vmatmul.bf16.gmra.mxu0 %v3666
    %v3715 = vpop.f32.mrf.mxu0
    %v3716 = vadd.f32 %v3703, %v3715
    %v3717 = vpop.f32.mrf.mxu0
    %3718 = vdwg.mxu0
    %3719 = vmatpush.bf16.msra.mxu0 %v1118
    %3720 = vmatpush.bf16.msra.mxu0 %v1114
    %3721 = vmatpush.bf16.msra.mxu0 %v1110
    %3722 = vmatpush.bf16.msra.mxu0 %v1106
    %3723 = vmatpush.bf16.msra.mxu0 %v1102
    %3724 = vmatpush.bf16.msra.mxu0 %v1098
    %3725 = vmatpush.bf16.msra.mxu0 %v1094
    %3726 = vmatpush.bf16.msra.mxu0 %v1090
    %3727 = vmatmul.bf16.gmra.mxu0 %v3546
    %v3728 = vpop.f32.mrf.mxu0
    %v3729 = vadd.f32 %v472, %v3728
    %v3730 = vpop.f32.mrf.mxu0
    %3731 = vdwg.mxu0
    %3732 = vmatpush.bf16.msra.mxu0 %v1150
    %3733 = vmatpush.bf16.msra.mxu0 %v1146
    %3734 = vmatpush.bf16.msra.mxu0 %v1142
    %3735 = vmatpush.bf16.msra.mxu0 %v1138
    %3736 = vmatpush.bf16.msra.mxu0 %v1134
    %3737 = vmatpush.bf16.msra.mxu0 %v1130
    %3738 = vmatpush.bf16.msra.mxu0 %v1126
    %3739 = vmatpush.bf16.msra.mxu0 %v1122
    %3740 = vmatmul.bf16.gmra.mxu0 %v3666
    %v3741 = vpop.f32.mrf.mxu0
    %v3742 = vadd.f32 %v3729, %v3741
    %v3743 = vpop.f32.mrf.mxu0
    %3744 = vdwg.mxu0
    %3745 = vmatpush.bf16.msra.mxu0 %v1119
    %3746 = vmatpush.bf16.msra.mxu0 %v1115
    %3747 = vmatpush.bf16.msra.mxu0 %v1111
    %3748 = vmatpush.bf16.msra.mxu0 %v1107
    %3749 = vmatpush.bf16.msra.mxu0 %v1103
    %3750 = vmatpush.bf16.msra.mxu0 %v1099
    %3751 = vmatpush.bf16.msra.mxu0 %v1095
    %3752 = vmatpush.bf16.msra.mxu0 %v1091
    %3753 = vmatmul.bf16.gmra.mxu0 %v3546
    %v3754 = vpop.f32.mrf.mxu0
    %v3755 = vadd.f32 %v473, %v3754
    %v3756 = vpop.f32.mrf.mxu0
    %3757 = vdwg.mxu0
    %3758 = vmatpush.bf16.msra.mxu0 %v1151
    %3759 = vmatpush.bf16.msra.mxu0 %v1147
    %3760 = vmatpush.bf16.msra.mxu0 %v1143
    %3761 = vmatpush.bf16.msra.mxu0 %v1139
    %3762 = vmatpush.bf16.msra.mxu0 %v1135
    %3763 = vmatpush.bf16.msra.mxu0 %v1131
    %3764 = vmatpush.bf16.msra.mxu0 %v1127
    %3765 = vmatpush.bf16.msra.mxu0 %v1123
    %3766 = vmatmul.bf16.gmra.mxu0 %v3666
    %v3767 = vpop.f32.mrf.mxu0
    %v3768 = vadd.f32 %v3755, %v3767
    %v3769 = vpop.f32.mrf.mxu0
    %3770 = vdwg.mxu0
    %v3771 = vxor.u32 %v3690, 2147483648
    %v3772 = vmul.f32 %v3771, 1.442695
    %v3773 = vpow.pop %v3772
    %v3774 = vadd.f32 %v3773, 1.0
    %v3775 = vrcp.pop %v3774
    %v3776 = vmul.f32 %v3774, %v3775
    %v3777 = vsub.f32 1.0, %v3776
    %v3778 = vmul.f32 %v3775, %v3777
    %v3779 = vadd.f32 %v3775, %v3778
    %vm3780 = vweird.f32 %v3774
    %vm3781 = vweird.f32 %v3775
    %vm3782 = vmor %vm3780, %vm3781
    %v3783 = vsel %vm3782, %v3775, %v3779
    %v3784 = vand.u32 2147483647, %v3774
    %vm3785 = vcmp.eq.f32.partialorder %v3784, 8.507059e+37
    %v3786 = vand.u32 %v3774, 2147483648
    %v3787 = vor.u32 1.1754944e-38, %v3786
    %v3788 = vsel %vm3785, %v3787, %v3783
    %v3789 = vmul.f32 1.0, %v3788
    %v3790 = vxor.u32 %v3716, 2147483648
    %v3791 = vmul.f32 %v3790, 1.442695
    %v3792 = vpow.pop %v3791
    %v3793 = vadd.f32 %v3792, 1.0
    %v3794 = vrcp.pop %v3793
    %v3795 = vmul.f32 %v3793, %v3794
    %v3796 = vsub.f32 1.0, %v3795
    %v3797 = vmul.f32 %v3794, %v3796
    %v3798 = vadd.f32 %v3794, %v3797
    %vm3799 = vweird.f32 %v3793
    %vm3800 = vweird.f32 %v3794
    %vm3801 = vmor %vm3799, %vm3800
    %v3802 = vsel %vm3801, %v3794, %v3798
    %v3803 = vand.u32 2147483647, %v3793
    %vm3804 = vcmp.eq.f32.partialorder %v3803, 8.507059e+37
    %v3805 = vand.u32 %v3793, 2147483648
    %v3806 = vor.u32 1.1754944e-38, %v3805
    %v3807 = vsel %vm3804, %v3806, %v3802
    %v3808 = vmul.f32 1.0, %v3807
    %v3809 = vtanh.pop %v3742
    %v3810 = vxor.u32 %v3768, 2147483648
    %v3811 = vmul.f32 %v3810, 1.442695
    %v3812 = vpow.pop %v3811
    %v3813 = vadd.f32 %v3812, 1.0
    %v3814 = vrcp.pop %v3813
    %v3815 = vmul.f32 %v3813, %v3814
    %v3816 = vsub.f32 1.0, %v3815
    %v3817 = vmul.f32 %v3814, %v3816
    %v3818 = vadd.f32 %v3814, %v3817
    %vm3819 = vweird.f32 %v3813
    %vm3820 = vweird.f32 %v3814
    %vm3821 = vmor %vm3819, %vm3820
    %v3822 = vsel %vm3821, %v3814, %v3818
    %v3823 = vand.u32 2147483647, %v3813
    %vm3824 = vcmp.eq.f32.partialorder %v3823, 8.507059e+37
    %v3825 = vand.u32 %v3813, 2147483648
    %v3826 = vor.u32 1.1754944e-38, %v3825
    %v3827 = vsel %vm3824, %v3826, %v3822
    %v3828 = vmul.f32 1.0, %v3827
    %v3829 = vmul.f32 %v3808, %v3371
    %v3830 = vmul.f32 %v3789, %v3809
    %v3831 = vadd.f32 %v3829, %v3830
    %v3832 = vtanh.pop %v3831
    %v3833 = vmul.f32 %v3828, %v3832
    %v3834 = vpack.c.bf16 %v3541, %v3541
    %3835 = vmatpush.bf16.msra.mxu0 %v1895
    %3836 = vmatpush.bf16.msra.mxu0 %v1891
    %3837 = vmatpush.bf16.msra.mxu0 %v1887
    %3838 = vmatpush.bf16.msra.mxu0 %v1883
    %3839 = vmatpush.bf16.msra.mxu0 %v1879
    %3840 = vmatpush.bf16.msra.mxu0 %v1875
    %3841 = vmatpush.bf16.msra.mxu0 %v1871
    %3842 = vmatpush.bf16.msra.mxu0 %v1867
    %3843 = vmatmul.bf16.gmra.mxu0 %v3666
    %v3844 = vpop.f32.mrf.mxu0
    %v3845 = vadd.f32 %v480, %v3844
    %v3846 = vpop.f32.mrf.mxu0
    %3847 = vdwg.mxu0
    %3848 = vmatpush.bf16.msra.mxu0 %v1927
    %3849 = vmatpush.bf16.msra.mxu0 %v1923
    %3850 = vmatpush.bf16.msra.mxu0 %v1919
    %3851 = vmatpush.bf16.msra.mxu0 %v1915
    %3852 = vmatpush.bf16.msra.mxu0 %v1911
    %3853 = vmatpush.bf16.msra.mxu0 %v1907
    %3854 = vmatpush.bf16.msra.mxu0 %v1903
    %3855 = vmatpush.bf16.msra.mxu0 %v1899
    %3856 = vmatmul.bf16.gmra.mxu0 %v3834
    %v3857 = vpop.f32.mrf.mxu0
    %v3858 = vadd.f32 %v3845, %v3857
    %v3859 = vpop.f32.mrf.mxu0
    %3860 = vdwg.mxu0
    %3861 = vmatpush.bf16.msra.mxu0 %v1896
    %3862 = vmatpush.bf16.msra.mxu0 %v1892
    %3863 = vmatpush.bf16.msra.mxu0 %v1888
    %3864 = vmatpush.bf16.msra.mxu0 %v1884
    %3865 = vmatpush.bf16.msra.mxu0 %v1880
    %3866 = vmatpush.bf16.msra.mxu0 %v1876
    %3867 = vmatpush.bf16.msra.mxu0 %v1872
    %3868 = vmatpush.bf16.msra.mxu0 %v1868
    %3869 = vmatmul.bf16.gmra.mxu0 %v3666
    %v3870 = vpop.f32.mrf.mxu0
    %v3871 = vadd.f32 %v481, %v3870
    %v3872 = vpop.f32.mrf.mxu0
    %3873 = vdwg.mxu0
    %3874 = vmatpush.bf16.msra.mxu0 %v1928
    %3875 = vmatpush.bf16.msra.mxu0 %v1924
    %3876 = vmatpush.bf16.msra.mxu0 %v1920
    %3877 = vmatpush.bf16.msra.mxu0 %v1916
    %3878 = vmatpush.bf16.msra.mxu0 %v1912
    %3879 = vmatpush.bf16.msra.mxu0 %v1908
    %3880 = vmatpush.bf16.msra.mxu0 %v1904
    %3881 = vmatpush.bf16.msra.mxu0 %v1900
    %3882 = vmatmul.bf16.gmra.mxu0 %v3834
    %v3883 = vpop.f32.mrf.mxu0
    %v3884 = vadd.f32 %v3871, %v3883
    %v3885 = vpop.f32.mrf.mxu0
    %3886 = vdwg.mxu0
    %3887 = vmatpush.bf16.msra.mxu0 %v1897
    %3888 = vmatpush.bf16.msra.mxu0 %v1893
    %3889 = vmatpush.bf16.msra.mxu0 %v1889
    %3890 = vmatpush.bf16.msra.mxu0 %v1885
    %3891 = vmatpush.bf16.msra.mxu0 %v1881
    %3892 = vmatpush.bf16.msra.mxu0 %v1877
    %3893 = vmatpush.bf16.msra.mxu0 %v1873
    %3894 = vmatpush.bf16.msra.mxu0 %v1869
    %3895 = vmatmul.bf16.gmra.mxu0 %v3666
    %v3896 = vpop.f32.mrf.mxu0
    %v3897 = vadd.f32 %v482, %v3896
    %v3898 = vpop.f32.mrf.mxu0
    %3899 = vdwg.mxu0
    %3900 = vmatpush.bf16.msra.mxu0 %v1929
    %3901 = vmatpush.bf16.msra.mxu0 %v1925
    %3902 = vmatpush.bf16.msra.mxu0 %v1921
    %3903 = vmatpush.bf16.msra.mxu0 %v1917
    %3904 = vmatpush.bf16.msra.mxu0 %v1913
    %3905 = vmatpush.bf16.msra.mxu0 %v1909
    %3906 = vmatpush.bf16.msra.mxu0 %v1905
    %3907 = vmatpush.bf16.msra.mxu0 %v1901
    %3908 = vmatmul.bf16.gmra.mxu0 %v3834
    %v3909 = vpop.f32.mrf.mxu0
    %v3910 = vadd.f32 %v3897, %v3909
    %v3911 = vpop.f32.mrf.mxu0
    %3912 = vdwg.mxu0
    %3913 = vmatpush.bf16.msra.mxu0 %v1898
    %3914 = vmatpush.bf16.msra.mxu0 %v1894
    %3915 = vmatpush.bf16.msra.mxu0 %v1890
    %3916 = vmatpush.bf16.msra.mxu0 %v1886
    %3917 = vmatpush.bf16.msra.mxu0 %v1882
    %3918 = vmatpush.bf16.msra.mxu0 %v1878
    %3919 = vmatpush.bf16.msra.mxu0 %v1874
    %3920 = vmatpush.bf16.msra.mxu0 %v1870
    %3921 = vmatmul.bf16.gmra.mxu0 %v3666
    %v3922 = vpop.f32.mrf.mxu0
    %v3923 = vadd.f32 %v483, %v3922
    %v3924 = vpop.f32.mrf.mxu0
    %3925 = vdwg.mxu0
    %3926 = vmatpush.bf16.msra.mxu0 %v1930
    %3927 = vmatpush.bf16.msra.mxu0 %v1926
    %3928 = vmatpush.bf16.msra.mxu0 %v1922
    %3929 = vmatpush.bf16.msra.mxu0 %v1918
    %3930 = vmatpush.bf16.msra.mxu0 %v1914
    %3931 = vmatpush.bf16.msra.mxu0 %v1910
    %3932 = vmatpush.bf16.msra.mxu0 %v1906
    %3933 = vmatpush.bf16.msra.mxu0 %v1902
    %3934 = vmatmul.bf16.gmra.mxu0 %v3834
    %v3935 = vpop.f32.mrf.mxu0
    %v3936 = vadd.f32 %v3923, %v3935
    %v3937 = vpop.f32.mrf.mxu0
    %3938 = vdwg.mxu0
    %v3939 = vxor.u32 %v3858, 2147483648
    %v3940 = vmul.f32 %v3939, 1.442695
    %v3941 = vpow.pop %v3940
    %v3942 = vadd.f32 %v3941, 1.0
    %v3943 = vrcp.pop %v3942
    %v3944 = vmul.f32 %v3942, %v3943
    %v3945 = vsub.f32 1.0, %v3944
    %v3946 = vmul.f32 %v3943, %v3945
    %v3947 = vadd.f32 %v3943, %v3946
    %vm3948 = vweird.f32 %v3942
    %vm3949 = vweird.f32 %v3943
    %vm3950 = vmor %vm3948, %vm3949
    %v3951 = vsel %vm3950, %v3943, %v3947
    %v3952 = vand.u32 2147483647, %v3942
    %vm3953 = vcmp.eq.f32.partialorder %v3952, 8.507059e+37
    %v3954 = vand.u32 %v3942, 2147483648
    %v3955 = vor.u32 1.1754944e-38, %v3954
    %v3956 = vsel %vm3953, %v3955, %v3951
    %v3957 = vmul.f32 1.0, %v3956
    %v3958 = vxor.u32 %v3884, 2147483648
    %v3959 = vmul.f32 %v3958, 1.442695
    %v3960 = vpow.pop %v3959
    %v3961 = vadd.f32 %v3960, 1.0
    %v3962 = vrcp.pop %v3961
    %v3963 = vmul.f32 %v3961, %v3962
    %v3964 = vsub.f32 1.0, %v3963
    %v3965 = vmul.f32 %v3962, %v3964
    %v3966 = vadd.f32 %v3962, %v3965
    %vm3967 = vweird.f32 %v3961
    %vm3968 = vweird.f32 %v3962
    %vm3969 = vmor %vm3967, %vm3968
    %v3970 = vsel %vm3969, %v3962, %v3966
    %v3971 = vand.u32 2147483647, %v3961
    %vm3972 = vcmp.eq.f32.partialorder %v3971, 8.507059e+37
    %v3973 = vand.u32 %v3961, 2147483648
    %v3974 = vor.u32 1.1754944e-38, %v3973
    %v3975 = vsel %vm3972, %v3974, %v3970
    %v3976 = vmul.f32 1.0, %v3975
    %v3977 = vtanh.pop %v3910
    %v3978 = vxor.u32 %v3936, 2147483648
    %v3979 = vmul.f32 %v3978, 1.442695
    %v3980 = vpow.pop %v3979
    %v3981 = vadd.f32 %v3980, 1.0
    %v3982 = vrcp.pop %v3981
    %v3983 = vmul.f32 %v3981, %v3982
    %v3984 = vsub.f32 1.0, %v3983
    %v3985 = vmul.f32 %v3982, %v3984
    %v3986 = vadd.f32 %v3982, %v3985
    %vm3987 = vweird.f32 %v3981
    %vm3988 = vweird.f32 %v3982
    %vm3989 = vmor %vm3987, %vm3988
    %v3990 = vsel %vm3989, %v3982, %v3986
    %v3991 = vand.u32 2147483647, %v3981
    %vm3992 = vcmp.eq.f32.partialorder %v3991, 8.507059e+37
    %v3993 = vand.u32 %v3981, 2147483648
    %v3994 = vor.u32 1.1754944e-38, %v3993
    %v3995 = vsel %vm3992, %v3994, %v3990
    %v3996 = vmul.f32 1.0, %v3995
    %v3997 = vmul.f32 %v3976, %v3539
    %v3998 = vmul.f32 %v3957, %v3977
    %v3999 = vadd.f32 %v3997, %v3998
    %v4000 = vtanh.pop %v3999
    %v4001 = vmul.f32 %v3996, %v4000
    %v4002 = vld [vmem:[#allocation2 + $0xe0] sm:$0xff]
    %v4003 = vld [vmem:[#allocation2 + $0xe8] sm:$0xff]
    %v4004 = vld [vmem:[#allocation2 + $0xf0] sm:$0xff]
    %v4005 = vld [vmem:[#allocation2 + $0xf8] sm:$0xff]
    %v4006 = vpack.c.bf16 %v3665, %v3665
    %4007 = vmatpush.bf16.msra.mxu0 %v616
    %4008 = vmatpush.bf16.msra.mxu0 %v612
    %4009 = vmatpush.bf16.msra.mxu0 %v608
    %4010 = vmatpush.bf16.msra.mxu0 %v604
    %4011 = vmatpush.bf16.msra.mxu0 %v600
    %4012 = vmatpush.bf16.msra.mxu0 %v596
    %4013 = vmatpush.bf16.msra.mxu0 %v592
    %4014 = vmatpush.bf16.msra.mxu0 %v588
    %4015 = vmatmul.bf16.gmra.mxu0 %v4006
    %v4016 = vpop.f32.mrf.mxu0
    %v4017 = vadd.f32 0.0, %v4016
    %v4018 = vpop.f32.mrf.mxu0
    %4019 = vdwg.mxu0
    %4020 = vmatpush.bf16.msra.mxu0 %v617
    %4021 = vmatpush.bf16.msra.mxu0 %v613
    %4022 = vmatpush.bf16.msra.mxu0 %v609
    %4023 = vmatpush.bf16.msra.mxu0 %v605
    %4024 = vmatpush.bf16.msra.mxu0 %v601
    %4025 = vmatpush.bf16.msra.mxu0 %v597
    %4026 = vmatpush.bf16.msra.mxu0 %v593
    %4027 = vmatpush.bf16.msra.mxu0 %v589
    %4028 = vmatmul.bf16.gmra.mxu0 %v4006
    %v4029 = vpop.f32.mrf.mxu0
    %v4030 = vadd.f32 0.0, %v4029
    %v4031 = vpop.f32.mrf.mxu0
    %4032 = vdwg.mxu0
    %4033 = vmatpush.bf16.msra.mxu0 %v618
    %4034 = vmatpush.bf16.msra.mxu0 %v614
    %4035 = vmatpush.bf16.msra.mxu0 %v610
    %4036 = vmatpush.bf16.msra.mxu0 %v606
    %4037 = vmatpush.bf16.msra.mxu0 %v602
    %4038 = vmatpush.bf16.msra.mxu0 %v598
    %4039 = vmatpush.bf16.msra.mxu0 %v594
    %4040 = vmatpush.bf16.msra.mxu0 %v590
    %4041 = vmatmul.bf16.gmra.mxu0 %v4006
    %v4042 = vpop.f32.mrf.mxu0
    %v4043 = vadd.f32 0.0, %v4042
    %v4044 = vpop.f32.mrf.mxu0
    %4045 = vdwg.mxu0
    %4046 = vmatpush.bf16.msra.mxu0 %v619
    %4047 = vmatpush.bf16.msra.mxu0 %v615
    %4048 = vmatpush.bf16.msra.mxu0 %v611
    %4049 = vmatpush.bf16.msra.mxu0 %v607
    %4050 = vmatpush.bf16.msra.mxu0 %v603
    %4051 = vmatpush.bf16.msra.mxu0 %v599
    %4052 = vmatpush.bf16.msra.mxu0 %v595
    %4053 = vmatpush.bf16.msra.mxu0 %v591
    %4054 = vmatmul.bf16.gmra.mxu0 %v4006
    %v4055 = vpop.f32.mrf.mxu0
    %v4056 = vadd.f32 0.0, %v4055
    %v4057 = vpop.f32.mrf.mxu0
    %4058 = vdwg.mxu0
    %v4059 = vadd.f32 %v4002, %v4017
    %v4060 = vadd.f32 %v4003, %v4030
    %v4061 = vadd.f32 %v4004, %v4043
    %v4062 = vadd.f32 %v4005, %v4056
    %v4063 = vxor.u32 %v4059, 2147483648
    %v4064 = vmul.f32 %v4063, 1.442695
    %v4065 = vpow.pop %v4064
    %v4066 = vadd.f32 %v4065, 1.0
    %v4067 = vrcp.pop %v4066
    %v4068 = vmul.f32 %v4066, %v4067
    %v4069 = vsub.f32 1.0, %v4068
    %v4070 = vmul.f32 %v4067, %v4069
    %v4071 = vadd.f32 %v4067, %v4070
    %vm4072 = vweird.f32 %v4066
    %vm4073 = vweird.f32 %v4067
    %vm4074 = vmor %vm4072, %vm4073
    %v4075 = vsel %vm4074, %v4067, %v4071
    %v4076 = vand.u32 2147483647, %v4066
    %vm4077 = vcmp.eq.f32.partialorder %v4076, 8.507059e+37
    %v4078 = vand.u32 %v4066, 2147483648
    %v4079 = vor.u32 1.1754944e-38, %v4078
    %v4080 = vsel %vm4077, %v4079, %v4075
    %v4081 = vmul.f32 1.0, %v4080
    %v4082 = vxor.u32 %v4060, 2147483648
    %v4083 = vmul.f32 %v4082, 1.442695
    %v4084 = vpow.pop %v4083
    %v4085 = vadd.f32 %v4084, 1.0
    %v4086 = vrcp.pop %v4085
    %v4087 = vmul.f32 %v4085, %v4086
    %v4088 = vsub.f32 1.0, %v4087
    %v4089 = vmul.f32 %v4086, %v4088
    %v4090 = vadd.f32 %v4086, %v4089
    %vm4091 = vweird.f32 %v4085
    %vm4092 = vweird.f32 %v4086
    %vm4093 = vmor %vm4091, %vm4092
    %v4094 = vsel %vm4093, %v4086, %v4090
    %v4095 = vand.u32 2147483647, %v4085
    %vm4096 = vcmp.eq.f32.partialorder %v4095, 8.507059e+37
    %v4097 = vand.u32 %v4085, 2147483648
    %v4098 = vor.u32 1.1754944e-38, %v4097
    %v4099 = vsel %vm4096, %v4098, %v4094
    %v4100 = vmul.f32 1.0, %v4099
    %v4101 = vtanh.pop %v4061
    %v4102 = vxor.u32 %v4062, 2147483648
    %v4103 = vmul.f32 %v4102, 1.442695
    %v4104 = vpow.pop %v4103
    %v4105 = vadd.f32 %v4104, 1.0
    %v4106 = vrcp.pop %v4105
    %v4107 = vmul.f32 %v4105, %v4106
    %v4108 = vsub.f32 1.0, %v4107
    %v4109 = vmul.f32 %v4106, %v4108
    %v4110 = vadd.f32 %v4106, %v4109
    %vm4111 = vweird.f32 %v4105
    %vm4112 = vweird.f32 %v4106
    %vm4113 = vmor %vm4111, %vm4112
    %v4114 = vsel %vm4113, %v4106, %v4110
    %v4115 = vand.u32 2147483647, %v4105
    %vm4116 = vcmp.eq.f32.partialorder %v4115, 8.507059e+37
    %v4117 = vand.u32 %v4105, 2147483648
    %v4118 = vor.u32 1.1754944e-38, %v4117
    %v4119 = vsel %vm4116, %v4118, %v4114
    %v4120 = vmul.f32 1.0, %v4119
    %v4121 = vmul.f32 %v4100, %v3663
    %v4122 = vmul.f32 %v4081, %v4101
    %v4123 = vadd.f32 %v4121, %v4122
    %v4124 = vtanh.pop %v4123
    %v4125 = vmul.f32 %v4120, %v4124
    %v4126 = vpack.c.bf16 %v3833, %v3833
    %4127 = vmatpush.bf16.msra.mxu0 %v1116
    %4128 = vmatpush.bf16.msra.mxu0 %v1112
    %4129 = vmatpush.bf16.msra.mxu0 %v1108
    %4130 = vmatpush.bf16.msra.mxu0 %v1104
    %4131 = vmatpush.bf16.msra.mxu0 %v1100
    %4132 = vmatpush.bf16.msra.mxu0 %v1096
    %4133 = vmatpush.bf16.msra.mxu0 %v1092
    %4134 = vmatpush.bf16.msra.mxu0 %v1088
    %4135 = vmatmul.bf16.gmra.mxu0 %v4006
    %v4136 = vpop.f32.mrf.mxu0
    %v4137 = vadd.f32 %v470, %v4136
    %v4138 = vpop.f32.mrf.mxu0
    %4139 = vdwg.mxu0
    %4140 = vmatpush.bf16.msra.mxu0 %v1148
    %4141 = vmatpush.bf16.msra.mxu0 %v1144
    %4142 = vmatpush.bf16.msra.mxu0 %v1140
    %4143 = vmatpush.bf16.msra.mxu0 %v1136
    %4144 = vmatpush.bf16.msra.mxu0 %v1132
    %4145 = vmatpush.bf16.msra.mxu0 %v1128
    %4146 = vmatpush.bf16.msra.mxu0 %v1124
    %4147 = vmatpush.bf16.msra.mxu0 %v1120
    %4148 = vmatmul.bf16.gmra.mxu0 %v4126
    %v4149 = vpop.f32.mrf.mxu0
    %v4150 = vadd.f32 %v4137, %v4149
    %v4151 = vpop.f32.mrf.mxu0
    %4152 = vdwg.mxu0
    %4153 = vmatpush.bf16.msra.mxu0 %v1117
    %4154 = vmatpush.bf16.msra.mxu0 %v1113
    %4155 = vmatpush.bf16.msra.mxu0 %v1109
    %4156 = vmatpush.bf16.msra.mxu0 %v1105
    %4157 = vmatpush.bf16.msra.mxu0 %v1101
    %4158 = vmatpush.bf16.msra.mxu0 %v1097
    %4159 = vmatpush.bf16.msra.mxu0 %v1093
    %4160 = vmatpush.bf16.msra.mxu0 %v1089
    %4161 = vmatmul.bf16.gmra.mxu0 %v4006
    %v4162 = vpop.f32.mrf.mxu0
    %v4163 = vadd.f32 %v471, %v4162
    %v4164 = vpop.f32.mrf.mxu0
    %4165 = vdwg.mxu0
    %4166 = vmatpush.bf16.msra.mxu0 %v1149
    %4167 = vmatpush.bf16.msra.mxu0 %v1145
    %4168 = vmatpush.bf16.msra.mxu0 %v1141
    %4169 = vmatpush.bf16.msra.mxu0 %v1137
    %4170 = vmatpush.bf16.msra.mxu0 %v1133
    %4171 = vmatpush.bf16.msra.mxu0 %v1129
    %4172 = vmatpush.bf16.msra.mxu0 %v1125
    %4173 = vmatpush.bf16.msra.mxu0 %v1121
    %4174 = vmatmul.bf16.gmra.mxu0 %v4126
    %v4175 = vpop.f32.mrf.mxu0
    %v4176 = vadd.f32 %v4163, %v4175
    %v4177 = vpop.f32.mrf.mxu0
    %4178 = vdwg.mxu0
    %4179 = vmatpush.bf16.msra.mxu0 %v1118
    %4180 = vmatpush.bf16.msra.mxu0 %v1114
    %4181 = vmatpush.bf16.msra.mxu0 %v1110
    %4182 = vmatpush.bf16.msra.mxu0 %v1106
    %4183 = vmatpush.bf16.msra.mxu0 %v1102
    %4184 = vmatpush.bf16.msra.mxu0 %v1098
    %4185 = vmatpush.bf16.msra.mxu0 %v1094
    %4186 = vmatpush.bf16.msra.mxu0 %v1090
    %4187 = vmatmul.bf16.gmra.mxu0 %v4006
    %v4188 = vpop.f32.mrf.mxu0
    %v4189 = vadd.f32 %v472, %v4188
    %v4190 = vpop.f32.mrf.mxu0
    %4191 = vdwg.mxu0
    %4192 = vmatpush.bf16.msra.mxu0 %v1150
    %4193 = vmatpush.bf16.msra.mxu0 %v1146
    %4194 = vmatpush.bf16.msra.mxu0 %v1142
    %4195 = vmatpush.bf16.msra.mxu0 %v1138
    %4196 = vmatpush.bf16.msra.mxu0 %v1134
    %4197 = vmatpush.bf16.msra.mxu0 %v1130
    %4198 = vmatpush.bf16.msra.mxu0 %v1126
    %4199 = vmatpush.bf16.msra.mxu0 %v1122
    %4200 = vmatmul.bf16.gmra.mxu0 %v4126
    %v4201 = vpop.f32.mrf.mxu0
    %v4202 = vadd.f32 %v4189, %v4201
    %v4203 = vpop.f32.mrf.mxu0
    %4204 = vdwg.mxu0
    %4205 = vmatpush.bf16.msra.mxu0 %v1119
    %4206 = vmatpush.bf16.msra.mxu0 %v1115
    %4207 = vmatpush.bf16.msra.mxu0 %v1111
    %4208 = vmatpush.bf16.msra.mxu0 %v1107
    %4209 = vmatpush.bf16.msra.mxu0 %v1103
    %4210 = vmatpush.bf16.msra.mxu0 %v1099
    %4211 = vmatpush.bf16.msra.mxu0 %v1095
    %4212 = vmatpush.bf16.msra.mxu0 %v1091
    %4213 = vmatmul.bf16.gmra.mxu0 %v4006
    %v4214 = vpop.f32.mrf.mxu0
    %v4215 = vadd.f32 %v473, %v4214
    %v4216 = vpop.f32.mrf.mxu0
    %4217 = vdwg.mxu0
    %4218 = vmatpush.bf16.msra.mxu0 %v1151
    %4219 = vmatpush.bf16.msra.mxu0 %v1147
    %4220 = vmatpush.bf16.msra.mxu0 %v1143
    %4221 = vmatpush.bf16.msra.mxu0 %v1139
    %4222 = vmatpush.bf16.msra.mxu0 %v1135
    %4223 = vmatpush.bf16.msra.mxu0 %v1131
    %4224 = vmatpush.bf16.msra.mxu0 %v1127
    %4225 = vmatpush.bf16.msra.mxu0 %v1123
    %4226 = vmatmul.bf16.gmra.mxu0 %v4126
    %v4227 = vpop.f32.mrf.mxu0
    %v4228 = vadd.f32 %v4215, %v4227
    %v4229 = vpop.f32.mrf.mxu0
    %4230 = vdwg.mxu0
    %v4231 = vxor.u32 %v4150, 2147483648
    %v4232 = vmul.f32 %v4231, 1.442695
    %v4233 = vpow.pop %v4232
    %v4234 = vadd.f32 %v4233, 1.0
    %v4235 = vrcp.pop %v4234
    %v4236 = vmul.f32 %v4234, %v4235
    %v4237 = vsub.f32 1.0, %v4236
    %v4238 = vmul.f32 %v4235, %v4237
    %v4239 = vadd.f32 %v4235, %v4238
    %vm4240 = vweird.f32 %v4234
    %vm4241 = vweird.f32 %v4235
    %vm4242 = vmor %vm4240, %vm4241
    %v4243 = vsel %vm4242, %v4235, %v4239
    %v4244 = vand.u32 2147483647, %v4234
    %vm4245 = vcmp.eq.f32.partialorder %v4244, 8.507059e+37
    %v4246 = vand.u32 %v4234, 2147483648
    %v4247 = vor.u32 1.1754944e-38, %v4246
    %v4248 = vsel %vm4245, %v4247, %v4243
    %v4249 = vmul.f32 1.0, %v4248
    %v4250 = vxor.u32 %v4176, 2147483648
    %v4251 = vmul.f32 %v4250, 1.442695
    %v4252 = vpow.pop %v4251
    %v4253 = vadd.f32 %v4252, 1.0
    %v4254 = vrcp.pop %v4253
    %v4255 = vmul.f32 %v4253, %v4254
    %v4256 = vsub.f32 1.0, %v4255
    %v4257 = vmul.f32 %v4254, %v4256
    %v4258 = vadd.f32 %v4254, %v4257
    %vm4259 = vweird.f32 %v4253
    %vm4260 = vweird.f32 %v4254
    %vm4261 = vmor %vm4259, %vm4260
    %v4262 = vsel %vm4261, %v4254, %v4258
    %v4263 = vand.u32 2147483647, %v4253
    %vm4264 = vcmp.eq.f32.partialorder %v4263, 8.507059e+37
    %v4265 = vand.u32 %v4253, 2147483648
    %v4266 = vor.u32 1.1754944e-38, %v4265
    %v4267 = vsel %vm4264, %v4266, %v4262
    %v4268 = vmul.f32 1.0, %v4267
    %v4269 = vtanh.pop %v4202
    %v4270 = vxor.u32 %v4228, 2147483648
    %v4271 = vmul.f32 %v4270, 1.442695
    %v4272 = vpow.pop %v4271
    %v4273 = vadd.f32 %v4272, 1.0
    %v4274 = vrcp.pop %v4273
    %v4275 = vmul.f32 %v4273, %v4274
    %v4276 = vsub.f32 1.0, %v4275
    %v4277 = vmul.f32 %v4274, %v4276
    %v4278 = vadd.f32 %v4274, %v4277
    %vm4279 = vweird.f32 %v4273
    %vm4280 = vweird.f32 %v4274
    %vm4281 = vmor %vm4279, %vm4280
    %v4282 = vsel %vm4281, %v4274, %v4278
    %v4283 = vand.u32 2147483647, %v4273
    %vm4284 = vcmp.eq.f32.partialorder %v4283, 8.507059e+37
    %v4285 = vand.u32 %v4273, 2147483648
    %v4286 = vor.u32 1.1754944e-38, %v4285
    %v4287 = vsel %vm4284, %v4286, %v4282
    %v4288 = vmul.f32 1.0, %v4287
    %v4289 = vmul.f32 %v4268, %v3831
    %v4290 = vmul.f32 %v4249, %v4269
    %v4291 = vadd.f32 %v4289, %v4290
    %v4292 = vtanh.pop %v4291
    %v4293 = vmul.f32 %v4288, %v4292
    %v4294 = vpack.c.bf16 %v4001, %v4001
    %4295 = vmatpush.bf16.msra.mxu0 %v1895
    %4296 = vmatpush.bf16.msra.mxu0 %v1891
    %4297 = vmatpush.bf16.msra.mxu0 %v1887
    %4298 = vmatpush.bf16.msra.mxu0 %v1883
    %4299 = vmatpush.bf16.msra.mxu0 %v1879
    %4300 = vmatpush.bf16.msra.mxu0 %v1875
    %4301 = vmatpush.bf16.msra.mxu0 %v1871
    %4302 = vmatpush.bf16.msra.mxu0 %v1867
    %4303 = vmatmul.bf16.gmra.mxu0 %v4126
    %v4304 = vpop.f32.mrf.mxu0
    %v4305 = vadd.f32 %v480, %v4304
    %v4306 = vpop.f32.mrf.mxu0
    %4307 = vdwg.mxu0
    %4308 = vmatpush.bf16.msra.mxu0 %v1927
    %4309 = vmatpush.bf16.msra.mxu0 %v1923
    %4310 = vmatpush.bf16.msra.mxu0 %v1919
    %4311 = vmatpush.bf16.msra.mxu0 %v1915
    %4312 = vmatpush.bf16.msra.mxu0 %v1911
    %4313 = vmatpush.bf16.msra.mxu0 %v1907
    %4314 = vmatpush.bf16.msra.mxu0 %v1903
    %4315 = vmatpush.bf16.msra.mxu0 %v1899
    %4316 = vmatmul.bf16.gmra.mxu0 %v4294
    %v4317 = vpop.f32.mrf.mxu0
    %v4318 = vadd.f32 %v4305, %v4317
    %v4319 = vpop.f32.mrf.mxu0
    %4320 = vdwg.mxu0
    %4321 = vmatpush.bf16.msra.mxu0 %v1896
    %4322 = vmatpush.bf16.msra.mxu0 %v1892
    %4323 = vmatpush.bf16.msra.mxu0 %v1888
    %4324 = vmatpush.bf16.msra.mxu0 %v1884
    %4325 = vmatpush.bf16.msra.mxu0 %v1880
    %4326 = vmatpush.bf16.msra.mxu0 %v1876
    %4327 = vmatpush.bf16.msra.mxu0 %v1872
    %4328 = vmatpush.bf16.msra.mxu0 %v1868
    %4329 = vmatmul.bf16.gmra.mxu0 %v4126
    %v4330 = vpop.f32.mrf.mxu0
    %v4331 = vadd.f32 %v481, %v4330
    %v4332 = vpop.f32.mrf.mxu0
    %4333 = vdwg.mxu0
    %4334 = vmatpush.bf16.msra.mxu0 %v1928
    %4335 = vmatpush.bf16.msra.mxu0 %v1924
    %4336 = vmatpush.bf16.msra.mxu0 %v1920
    %4337 = vmatpush.bf16.msra.mxu0 %v1916
    %4338 = vmatpush.bf16.msra.mxu0 %v1912
    %4339 = vmatpush.bf16.msra.mxu0 %v1908
    %4340 = vmatpush.bf16.msra.mxu0 %v1904
    %4341 = vmatpush.bf16.msra.mxu0 %v1900
    %4342 = vmatmul.bf16.gmra.mxu0 %v4294
    %v4343 = vpop.f32.mrf.mxu0
    %v4344 = vadd.f32 %v4331, %v4343
    %v4345 = vpop.f32.mrf.mxu0
    %4346 = vdwg.mxu0
    %4347 = vmatpush.bf16.msra.mxu0 %v1897
    %4348 = vmatpush.bf16.msra.mxu0 %v1893
    %4349 = vmatpush.bf16.msra.mxu0 %v1889
    %4350 = vmatpush.bf16.msra.mxu0 %v1885
    %4351 = vmatpush.bf16.msra.mxu0 %v1881
    %4352 = vmatpush.bf16.msra.mxu0 %v1877
    %4353 = vmatpush.bf16.msra.mxu0 %v1873
    %4354 = vmatpush.bf16.msra.mxu0 %v1869
    %4355 = vmatmul.bf16.gmra.mxu0 %v4126
    %v4356 = vpop.f32.mrf.mxu0
    %v4357 = vadd.f32 %v482, %v4356
    %v4358 = vpop.f32.mrf.mxu0
    %4359 = vdwg.mxu0
    %4360 = vmatpush.bf16.msra.mxu0 %v1929
    %4361 = vmatpush.bf16.msra.mxu0 %v1925
    %4362 = vmatpush.bf16.msra.mxu0 %v1921
    %4363 = vmatpush.bf16.msra.mxu0 %v1917
    %4364 = vmatpush.bf16.msra.mxu0 %v1913
    %4365 = vmatpush.bf16.msra.mxu0 %v1909
    %4366 = vmatpush.bf16.msra.mxu0 %v1905
    %4367 = vmatpush.bf16.msra.mxu0 %v1901
    %4368 = vmatmul.bf16.gmra.mxu0 %v4294
    %v4369 = vpop.f32.mrf.mxu0
    %v4370 = vadd.f32 %v4357, %v4369
    %v4371 = vpop.f32.mrf.mxu0
    %4372 = vdwg.mxu0
    %4373 = vmatpush.bf16.msra.mxu0 %v1898
    %4374 = vmatpush.bf16.msra.mxu0 %v1894
    %4375 = vmatpush.bf16.msra.mxu0 %v1890
    %4376 = vmatpush.bf16.msra.mxu0 %v1886
    %4377 = vmatpush.bf16.msra.mxu0 %v1882
    %4378 = vmatpush.bf16.msra.mxu0 %v1878
    %4379 = vmatpush.bf16.msra.mxu0 %v1874
    %4380 = vmatpush.bf16.msra.mxu0 %v1870
    %4381 = vmatmul.bf16.gmra.mxu0 %v4126
    %v4382 = vpop.f32.mrf.mxu0
    %v4383 = vadd.f32 %v483, %v4382
    %v4384 = vpop.f32.mrf.mxu0
    %4385 = vdwg.mxu0
    %4386 = vmatpush.bf16.msra.mxu0 %v1930
    %4387 = vmatpush.bf16.msra.mxu0 %v1926
    %4388 = vmatpush.bf16.msra.mxu0 %v1922
    %4389 = vmatpush.bf16.msra.mxu0 %v1918
    %4390 = vmatpush.bf16.msra.mxu0 %v1914
    %4391 = vmatpush.bf16.msra.mxu0 %v1910
    %4392 = vmatpush.bf16.msra.mxu0 %v1906
    %4393 = vmatpush.bf16.msra.mxu0 %v1902
    %4394 = vmatmul.bf16.gmra.mxu0 %v4294
    %v4395 = vpop.f32.mrf.mxu0
    %v4396 = vadd.f32 %v4383, %v4395
    %v4397 = vpop.f32.mrf.mxu0
    %4398 = vdwg.mxu0
    %v4399 = vxor.u32 %v4318, 2147483648
    %v4400 = vmul.f32 %v4399, 1.442695
    %v4401 = vpow.pop %v4400
    %v4402 = vadd.f32 %v4401, 1.0
    %v4403 = vrcp.pop %v4402
    %v4404 = vmul.f32 %v4402, %v4403
    %v4405 = vsub.f32 1.0, %v4404
    %v4406 = vmul.f32 %v4403, %v4405
    %v4407 = vadd.f32 %v4403, %v4406
    %vm4408 = vweird.f32 %v4402
    %vm4409 = vweird.f32 %v4403
    %vm4410 = vmor %vm4408, %vm4409
    %v4411 = vsel %vm4410, %v4403, %v4407
    %v4412 = vand.u32 2147483647, %v4402
    %vm4413 = vcmp.eq.f32.partialorder %v4412, 8.507059e+37
    %v4414 = vand.u32 %v4402, 2147483648
    %v4415 = vor.u32 1.1754944e-38, %v4414
    %v4416 = vsel %vm4413, %v4415, %v4411
    %v4417 = vmul.f32 1.0, %v4416
    %v4418 = vxor.u32 %v4344, 2147483648
    %v4419 = vmul.f32 %v4418, 1.442695
    %v4420 = vpow.pop %v4419
    %v4421 = vadd.f32 %v4420, 1.0
    %v4422 = vrcp.pop %v4421
    %v4423 = vmul.f32 %v4421, %v4422
    %v4424 = vsub.f32 1.0, %v4423
    %v4425 = vmul.f32 %v4422, %v4424
    %v4426 = vadd.f32 %v4422, %v4425
    %vm4427 = vweird.f32 %v4421
    %vm4428 = vweird.f32 %v4422
    %vm4429 = vmor %vm4427, %vm4428
    %v4430 = vsel %vm4429, %v4422, %v4426
    %v4431 = vand.u32 2147483647, %v4421
    %vm4432 = vcmp.eq.f32.partialorder %v4431, 8.507059e+37
    %v4433 = vand.u32 %v4421, 2147483648
    %v4434 = vor.u32 1.1754944e-38, %v4433
    %v4435 = vsel %vm4432, %v4434, %v4430
    %v4436 = vmul.f32 1.0, %v4435
    %v4437 = vtanh.pop %v4370
    %v4438 = vxor.u32 %v4396, 2147483648
    %v4439 = vmul.f32 %v4438, 1.442695
    %v4440 = vpow.pop %v4439
    %v4441 = vadd.f32 %v4440, 1.0
    %v4442 = vrcp.pop %v4441
    %v4443 = vmul.f32 %v4441, %v4442
    %v4444 = vsub.f32 1.0, %v4443
    %v4445 = vmul.f32 %v4442, %v4444
    %v4446 = vadd.f32 %v4442, %v4445
    %vm4447 = vweird.f32 %v4441
    %vm4448 = vweird.f32 %v4442
    %vm4449 = vmor %vm4447, %vm4448
    %v4450 = vsel %vm4449, %v4442, %v4446
    %v4451 = vand.u32 2147483647, %v4441
    %vm4452 = vcmp.eq.f32.partialorder %v4451, 8.507059e+37
    %v4453 = vand.u32 %v4441, 2147483648
    %v4454 = vor.u32 1.1754944e-38, %v4453
    %v4455 = vsel %vm4452, %v4454, %v4450
    %v4456 = vmul.f32 1.0, %v4455
    %v4457 = vmul.f32 %v4436, %v3999
    %v4458 = vmul.f32 %v4417, %v4437
    %v4459 = vadd.f32 %v4457, %v4458
    %v4460 = vtanh.pop %v4459
    %v4461 = vmul.f32 %v4456, %v4460
    %v4462 = vpack.c.bf16 %v4125, %v4125
    %v4463 = vpack.c.bf16 %v4293, %v4293
    %4464 = vmatpush.bf16.msra.mxu0 %v1116
    %4465 = vmatpush.bf16.msra.mxu0 %v1112
    %4466 = vmatpush.bf16.msra.mxu0 %v1108
    %4467 = vmatpush.bf16.msra.mxu0 %v1104
    %4468 = vmatpush.bf16.msra.mxu0 %v1100
    %4469 = vmatpush.bf16.msra.mxu0 %v1096
    %4470 = vmatpush.bf16.msra.mxu0 %v1092
    %4471 = vmatpush.bf16.msra.mxu0 %v1088
    %4472 = vmatmul.bf16.gmra.mxu0 %v4462
    %v4473 = vpop.f32.mrf.mxu0
    %v4474 = vadd.f32 %v470, %v4473
    %v4475 = vpop.f32.mrf.mxu0
    %4476 = vdwg.mxu0
    %4477 = vmatpush.bf16.msra.mxu0 %v1148
    %4478 = vmatpush.bf16.msra.mxu0 %v1144
    %4479 = vmatpush.bf16.msra.mxu0 %v1140
    %4480 = vmatpush.bf16.msra.mxu0 %v1136
    %4481 = vmatpush.bf16.msra.mxu0 %v1132
    %4482 = vmatpush.bf16.msra.mxu0 %v1128
    %4483 = vmatpush.bf16.msra.mxu0 %v1124
    %4484 = vmatpush.bf16.msra.mxu0 %v1120
    %4485 = vmatmul.bf16.gmra.mxu0 %v4463
    %v4486 = vpop.f32.mrf.mxu0
    %v4487 = vadd.f32 %v4474, %v4486
    %v4488 = vpop.f32.mrf.mxu0
    %4489 = vdwg.mxu0
    %4490 = vmatpush.bf16.msra.mxu0 %v1117
    %4491 = vmatpush.bf16.msra.mxu0 %v1113
    %4492 = vmatpush.bf16.msra.mxu0 %v1109
    %4493 = vmatpush.bf16.msra.mxu0 %v1105
    %4494 = vmatpush.bf16.msra.mxu0 %v1101
    %4495 = vmatpush.bf16.msra.mxu0 %v1097
    %4496 = vmatpush.bf16.msra.mxu0 %v1093
    %4497 = vmatpush.bf16.msra.mxu0 %v1089
    %4498 = vmatmul.bf16.gmra.mxu0 %v4462
    %v4499 = vpop.f32.mrf.mxu0
    %v4500 = vadd.f32 %v471, %v4499
    %v4501 = vpop.f32.mrf.mxu0
    %4502 = vdwg.mxu0
    %4503 = vmatpush.bf16.msra.mxu0 %v1149
    %4504 = vmatpush.bf16.msra.mxu0 %v1145
    %4505 = vmatpush.bf16.msra.mxu0 %v1141
    %4506 = vmatpush.bf16.msra.mxu0 %v1137
    %4507 = vmatpush.bf16.msra.mxu0 %v1133
    %4508 = vmatpush.bf16.msra.mxu0 %v1129
    %4509 = vmatpush.bf16.msra.mxu0 %v1125
    %4510 = vmatpush.bf16.msra.mxu0 %v1121
    %4511 = vmatmul.bf16.gmra.mxu0 %v4463
    %v4512 = vpop.f32.mrf.mxu0
    %v4513 = vadd.f32 %v4500, %v4512
    %v4514 = vpop.f32.mrf.mxu0
    %4515 = vdwg.mxu0
    %4516 = vmatpush.bf16.msra.mxu0 %v1118
    %4517 = vmatpush.bf16.msra.mxu0 %v1114
    %4518 = vmatpush.bf16.msra.mxu0 %v1110
    %4519 = vmatpush.bf16.msra.mxu0 %v1106
    %4520 = vmatpush.bf16.msra.mxu0 %v1102
    %4521 = vmatpush.bf16.msra.mxu0 %v1098
    %4522 = vmatpush.bf16.msra.mxu0 %v1094
    %4523 = vmatpush.bf16.msra.mxu0 %v1090
    %4524 = vmatmul.bf16.gmra.mxu0 %v4462
    %v4525 = vpop.f32.mrf.mxu0
    %v4526 = vadd.f32 %v472, %v4525
    %v4527 = vpop.f32.mrf.mxu0
    %4528 = vdwg.mxu0
    %4529 = vmatpush.bf16.msra.mxu0 %v1150
    %4530 = vmatpush.bf16.msra.mxu0 %v1146
    %4531 = vmatpush.bf16.msra.mxu0 %v1142
    %4532 = vmatpush.bf16.msra.mxu0 %v1138
    %4533 = vmatpush.bf16.msra.mxu0 %v1134
    %4534 = vmatpush.bf16.msra.mxu0 %v1130
    %4535 = vmatpush.bf16.msra.mxu0 %v1126
    %4536 = vmatpush.bf16.msra.mxu0 %v1122
    %4537 = vmatmul.bf16.gmra.mxu0 %v4463
    %v4538 = vpop.f32.mrf.mxu0
    %v4539 = vadd.f32 %v4526, %v4538
    %v4540 = vpop.f32.mrf.mxu0
    %4541 = vdwg.mxu0
    %4542 = vmatpush.bf16.msra.mxu0 %v1119
    %4543 = vmatpush.bf16.msra.mxu0 %v1115
    %4544 = vmatpush.bf16.msra.mxu0 %v1111
    %4545 = vmatpush.bf16.msra.mxu0 %v1107
    %4546 = vmatpush.bf16.msra.mxu0 %v1103
    %4547 = vmatpush.bf16.msra.mxu0 %v1099
    %4548 = vmatpush.bf16.msra.mxu0 %v1095
    %4549 = vmatpush.bf16.msra.mxu0 %v1091
    %4550 = vmatmul.bf16.gmra.mxu0 %v4462
    %v4551 = vpop.f32.mrf.mxu0
    %v4552 = vadd.f32 %v473, %v4551
    %v4553 = vpop.f32.mrf.mxu0
    %4554 = vdwg.mxu0
    %4555 = vmatpush.bf16.msra.mxu0 %v1151
    %4556 = vmatpush.bf16.msra.mxu0 %v1147
    %4557 = vmatpush.bf16.msra.mxu0 %v1143
    %4558 = vmatpush.bf16.msra.mxu0 %v1139
    %4559 = vmatpush.bf16.msra.mxu0 %v1135
    %4560 = vmatpush.bf16.msra.mxu0 %v1131
    %4561 = vmatpush.bf16.msra.mxu0 %v1127
    %4562 = vmatpush.bf16.msra.mxu0 %v1123
    %4563 = vmatmul.bf16.gmra.mxu0 %v4463
    %v4564 = vpop.f32.mrf.mxu0
    %v4565 = vadd.f32 %v4552, %v4564
    %v4566 = vpop.f32.mrf.mxu0
    %4567 = vdwg.mxu0
    %v4568 = vxor.u32 %v4487, 2147483648
    %v4569 = vmul.f32 %v4568, 1.442695
    %v4570 = vpow.pop %v4569
    %v4571 = vadd.f32 %v4570, 1.0
    %v4572 = vrcp.pop %v4571
    %v4573 = vmul.f32 %v4571, %v4572
    %v4574 = vsub.f32 1.0, %v4573
    %v4575 = vmul.f32 %v4572, %v4574
    %v4576 = vadd.f32 %v4572, %v4575
    %vm4577 = vweird.f32 %v4571
    %vm4578 = vweird.f32 %v4572
    %vm4579 = vmor %vm4577, %vm4578
    %v4580 = vsel %vm4579, %v4572, %v4576
    %v4581 = vand.u32 2147483647, %v4571
    %vm4582 = vcmp.eq.f32.partialorder %v4581, 8.507059e+37
    %v4583 = vand.u32 %v4571, 2147483648
    %v4584 = vor.u32 1.1754944e-38, %v4583
    %v4585 = vsel %vm4582, %v4584, %v4580
    %v4586 = vmul.f32 1.0, %v4585
    %v4587 = vxor.u32 %v4513, 2147483648
    %v4588 = vmul.f32 %v4587, 1.442695
    %v4589 = vpow.pop %v4588
    %v4590 = vadd.f32 %v4589, 1.0
    %v4591 = vrcp.pop %v4590
    %v4592 = vmul.f32 %v4590, %v4591
    %v4593 = vsub.f32 1.0, %v4592
    %v4594 = vmul.f32 %v4591, %v4593
    %v4595 = vadd.f32 %v4591, %v4594
    %vm4596 = vweird.f32 %v4590
    %vm4597 = vweird.f32 %v4591
    %vm4598 = vmor %vm4596, %vm4597
    %v4599 = vsel %vm4598, %v4591, %v4595
    %v4600 = vand.u32 2147483647, %v4590
    %vm4601 = vcmp.eq.f32.partialorder %v4600, 8.507059e+37
    %v4602 = vand.u32 %v4590, 2147483648
    %v4603 = vor.u32 1.1754944e-38, %v4602
    %v4604 = vsel %vm4601, %v4603, %v4599
    %v4605 = vmul.f32 1.0, %v4604
    %v4606 = vtanh.pop %v4539
    %v4607 = vxor.u32 %v4565, 2147483648
    %v4608 = vmul.f32 %v4607, 1.442695
    %v4609 = vpow.pop %v4608
    %v4610 = vadd.f32 %v4609, 1.0
    %v4611 = vrcp.pop %v4610
    %v4612 = vmul.f32 %v4610, %v4611
    %v4613 = vsub.f32 1.0, %v4612
    %v4614 = vmul.f32 %v4611, %v4613
    %v4615 = vadd.f32 %v4611, %v4614
    %vm4616 = vweird.f32 %v4610
    %vm4617 = vweird.f32 %v4611
    %vm4618 = vmor %vm4616, %vm4617
    %v4619 = vsel %vm4618, %v4611, %v4615
    %v4620 = vand.u32 2147483647, %v4610
    %vm4621 = vcmp.eq.f32.partialorder %v4620, 8.507059e+37
    %v4622 = vand.u32 %v4610, 2147483648
    %v4623 = vor.u32 1.1754944e-38, %v4622
    %v4624 = vsel %vm4621, %v4623, %v4619
    %v4625 = vmul.f32 1.0, %v4624
    %v4626 = vmul.f32 %v4605, %v4291
    %v4627 = vmul.f32 %v4586, %v4606
    %v4628 = vadd.f32 %v4626, %v4627
    %v4629 = vtanh.pop %v4628
    %v4630 = vmul.f32 %v4625, %v4629
    %v4631 = vpack.c.bf16 %v4461, %v4461
    %4632 = vmatpush.bf16.msra.mxu0 %v1895
    %4633 = vmatpush.bf16.msra.mxu0 %v1891
    %4634 = vmatpush.bf16.msra.mxu0 %v1887
    %4635 = vmatpush.bf16.msra.mxu0 %v1883
    %4636 = vmatpush.bf16.msra.mxu0 %v1879
    %4637 = vmatpush.bf16.msra.mxu0 %v1875
    %4638 = vmatpush.bf16.msra.mxu0 %v1871
    %4639 = vmatpush.bf16.msra.mxu0 %v1867
    %4640 = vmatmul.bf16.gmra.mxu0 %v4463
    %v4641 = vpop.f32.mrf.mxu0
    %v4642 = vadd.f32 %v480, %v4641
    %v4643 = vpop.f32.mrf.mxu0
    %4644 = vdwg.mxu0
    %4645 = vmatpush.bf16.msra.mxu0 %v1927
    %4646 = vmatpush.bf16.msra.mxu0 %v1923
    %4647 = vmatpush.bf16.msra.mxu0 %v1919
    %4648 = vmatpush.bf16.msra.mxu0 %v1915
    %4649 = vmatpush.bf16.msra.mxu0 %v1911
    %4650 = vmatpush.bf16.msra.mxu0 %v1907
    %4651 = vmatpush.bf16.msra.mxu0 %v1903
    %4652 = vmatpush.bf16.msra.mxu0 %v1899
    %4653 = vmatmul.bf16.gmra.mxu0 %v4631
    %v4654 = vpop.f32.mrf.mxu0
    %v4655 = vadd.f32 %v4642, %v4654
    %v4656 = vpop.f32.mrf.mxu0
    %4657 = vdwg.mxu0
    %4658 = vmatpush.bf16.msra.mxu0 %v1896
    %4659 = vmatpush.bf16.msra.mxu0 %v1892
    %4660 = vmatpush.bf16.msra.mxu0 %v1888
    %4661 = vmatpush.bf16.msra.mxu0 %v1884
    %4662 = vmatpush.bf16.msra.mxu0 %v1880
    %4663 = vmatpush.bf16.msra.mxu0 %v1876
    %4664 = vmatpush.bf16.msra.mxu0 %v1872
    %4665 = vmatpush.bf16.msra.mxu0 %v1868
    %4666 = vmatmul.bf16.gmra.mxu0 %v4463
    %v4667 = vpop.f32.mrf.mxu0
    %v4668 = vadd.f32 %v481, %v4667
    %v4669 = vpop.f32.mrf.mxu0
    %4670 = vdwg.mxu0
    %4671 = vmatpush.bf16.msra.mxu0 %v1928
    %4672 = vmatpush.bf16.msra.mxu0 %v1924
    %4673 = vmatpush.bf16.msra.mxu0 %v1920
    %4674 = vmatpush.bf16.msra.mxu0 %v1916
    %4675 = vmatpush.bf16.msra.mxu0 %v1912
    %4676 = vmatpush.bf16.msra.mxu0 %v1908
    %4677 = vmatpush.bf16.msra.mxu0 %v1904
    %4678 = vmatpush.bf16.msra.mxu0 %v1900
    %4679 = vmatmul.bf16.gmra.mxu0 %v4631
    %v4680 = vpop.f32.mrf.mxu0
    %v4681 = vadd.f32 %v4668, %v4680
    %v4682 = vpop.f32.mrf.mxu0
    %4683 = vdwg.mxu0
    %4684 = vmatpush.bf16.msra.mxu0 %v1897
    %4685 = vmatpush.bf16.msra.mxu0 %v1893
    %4686 = vmatpush.bf16.msra.mxu0 %v1889
    %4687 = vmatpush.bf16.msra.mxu0 %v1885
    %4688 = vmatpush.bf16.msra.mxu0 %v1881
    %4689 = vmatpush.bf16.msra.mxu0 %v1877
    %4690 = vmatpush.bf16.msra.mxu0 %v1873
    %4691 = vmatpush.bf16.msra.mxu0 %v1869
    %4692 = vmatmul.bf16.gmra.mxu0 %v4463
    %v4693 = vpop.f32.mrf.mxu0
    %v4694 = vadd.f32 %v482, %v4693
    %v4695 = vpop.f32.mrf.mxu0
    %4696 = vdwg.mxu0
    %4697 = vmatpush.bf16.msra.mxu0 %v1929
    %4698 = vmatpush.bf16.msra.mxu0 %v1925
    %4699 = vmatpush.bf16.msra.mxu0 %v1921
    %4700 = vmatpush.bf16.msra.mxu0 %v1917
    %4701 = vmatpush.bf16.msra.mxu0 %v1913
    %4702 = vmatpush.bf16.msra.mxu0 %v1909
    %4703 = vmatpush.bf16.msra.mxu0 %v1905
    %4704 = vmatpush.bf16.msra.mxu0 %v1901
    %4705 = vmatmul.bf16.gmra.mxu0 %v4631
    %v4706 = vpop.f32.mrf.mxu0
    %v4707 = vadd.f32 %v4694, %v4706
    %v4708 = vpop.f32.mrf.mxu0
    %4709 = vdwg.mxu0
    %4710 = vmatpush.bf16.msra.mxu0 %v1898
    %4711 = vmatpush.bf16.msra.mxu0 %v1894
    %4712 = vmatpush.bf16.msra.mxu0 %v1890
    %4713 = vmatpush.bf16.msra.mxu0 %v1886
    %4714 = vmatpush.bf16.msra.mxu0 %v1882
    %4715 = vmatpush.bf16.msra.mxu0 %v1878
    %4716 = vmatpush.bf16.msra.mxu0 %v1874
    %4717 = vmatpush.bf16.msra.mxu0 %v1870
    %4718 = vmatmul.bf16.gmra.mxu0 %v4463
    %v4719 = vpop.f32.mrf.mxu0
    %v4720 = vadd.f32 %v483, %v4719
    %v4721 = vpop.f32.mrf.mxu0
    %4722 = vdwg.mxu0
    %4723 = vmatpush.bf16.msra.mxu0 %v1930
    %4724 = vmatpush.bf16.msra.mxu0 %v1926
    %4725 = vmatpush.bf16.msra.mxu0 %v1922
    %4726 = vmatpush.bf16.msra.mxu0 %v1918
    %4727 = vmatpush.bf16.msra.mxu0 %v1914
    %4728 = vmatpush.bf16.msra.mxu0 %v1910
    %4729 = vmatpush.bf16.msra.mxu0 %v1906
    %4730 = vmatpush.bf16.msra.mxu0 %v1902
    %4731 = vmatmul.bf16.gmra.mxu0 %v4631
    %v4732 = vpop.f32.mrf.mxu0
    %v4733 = vadd.f32 %v4720, %v4732
    %v4734 = vpop.f32.mrf.mxu0
    %4735 = vdwg.mxu0
    %v4736 = vxor.u32 %v4655, 2147483648
    %v4737 = vmul.f32 %v4736, 1.442695
    %v4738 = vpow.pop %v4737
    %v4739 = vadd.f32 %v4738, 1.0
    %v4740 = vrcp.pop %v4739
    %v4741 = vmul.f32 %v4739, %v4740
    %v4742 = vsub.f32 1.0, %v4741
    %v4743 = vmul.f32 %v4740, %v4742
    %v4744 = vadd.f32 %v4740, %v4743
    %vm4745 = vweird.f32 %v4739
    %vm4746 = vweird.f32 %v4740
    %vm4747 = vmor %vm4745, %vm4746
    %v4748 = vsel %vm4747, %v4740, %v4744
    %v4749 = vand.u32 2147483647, %v4739
    %vm4750 = vcmp.eq.f32.partialorder %v4749, 8.507059e+37
    %v4751 = vand.u32 %v4739, 2147483648
    %v4752 = vor.u32 1.1754944e-38, %v4751
    %v4753 = vsel %vm4750, %v4752, %v4748
    %v4754 = vmul.f32 1.0, %v4753
    %v4755 = vxor.u32 %v4681, 2147483648
    %v4756 = vmul.f32 %v4755, 1.442695
    %v4757 = vpow.pop %v4756
    %v4758 = vadd.f32 %v4757, 1.0
    %v4759 = vrcp.pop %v4758
    %v4760 = vmul.f32 %v4758, %v4759
    %v4761 = vsub.f32 1.0, %v4760
    %v4762 = vmul.f32 %v4759, %v4761
    %v4763 = vadd.f32 %v4759, %v4762
    %vm4764 = vweird.f32 %v4758
    %vm4765 = vweird.f32 %v4759
    %vm4766 = vmor %vm4764, %vm4765
    %v4767 = vsel %vm4766, %v4759, %v4763
    %v4768 = vand.u32 2147483647, %v4758
    %vm4769 = vcmp.eq.f32.partialorder %v4768, 8.507059e+37
    %v4770 = vand.u32 %v4758, 2147483648
    %v4771 = vor.u32 1.1754944e-38, %v4770
    %v4772 = vsel %vm4769, %v4771, %v4767
    %v4773 = vmul.f32 1.0, %v4772
    %v4774 = vtanh.pop %v4707
    %v4775 = vxor.u32 %v4733, 2147483648
    %v4776 = vmul.f32 %v4775, 1.442695
    %v4777 = vpow.pop %v4776
    %v4778 = vadd.f32 %v4777, 1.0
    %v4779 = vrcp.pop %v4778
    %v4780 = vmul.f32 %v4778, %v4779
    %v4781 = vsub.f32 1.0, %v4780
    %v4782 = vmul.f32 %v4779, %v4781
    %v4783 = vadd.f32 %v4779, %v4782
    %vm4784 = vweird.f32 %v4778
    %vm4785 = vweird.f32 %v4779
    %vm4786 = vmor %vm4784, %vm4785
    %v4787 = vsel %vm4786, %v4779, %v4783
    %v4788 = vand.u32 2147483647, %v4778
    %vm4789 = vcmp.eq.f32.partialorder %v4788, 8.507059e+37
    %v4790 = vand.u32 %v4778, 2147483648
    %v4791 = vor.u32 1.1754944e-38, %v4790
    %v4792 = vsel %vm4789, %v4791, %v4787
    %v4793 = vmul.f32 1.0, %v4792
    %v4794 = vmul.f32 %v4773, %v4459
    %v4795 = vmul.f32 %v4754, %v4774
    %v4796 = vadd.f32 %v4794, %v4795
    %v4797 = vtanh.pop %v4796
    %v4798 = vmul.f32 %v4793, %v4797
    %v4799 = vpack.c.bf16 %v4630, %v4630
    %v4800 = vpack.c.bf16 %v4798, %v4798
    %4801 = vmatpush.bf16.msra.mxu0 %v1895
    %4802 = vmatpush.bf16.msra.mxu0 %v1891
    %4803 = vmatpush.bf16.msra.mxu0 %v1887
    %4804 = vmatpush.bf16.msra.mxu0 %v1883
    %4805 = vmatpush.bf16.msra.mxu0 %v1879
    %4806 = vmatpush.bf16.msra.mxu0 %v1875
    %4807 = vmatpush.bf16.msra.mxu0 %v1871
    %4808 = vmatpush.bf16.msra.mxu0 %v1867
    %4809 = vmatmul.bf16.gmra.mxu0 %v4799
    %v4810 = vpop.f32.mrf.mxu0
    %v4811 = vadd.f32 %v480, %v4810
    %v4812 = vpop.f32.mrf.mxu0
    %4813 = vdwg.mxu0
    %4814 = vmatpush.bf16.msra.mxu0 %v1927
    %4815 = vmatpush.bf16.msra.mxu0 %v1923
    %4816 = vmatpush.bf16.msra.mxu0 %v1919
    %4817 = vmatpush.bf16.msra.mxu0 %v1915
    %4818 = vmatpush.bf16.msra.mxu0 %v1911
    %4819 = vmatpush.bf16.msra.mxu0 %v1907
    %4820 = vmatpush.bf16.msra.mxu0 %v1903
    %4821 = vmatpush.bf16.msra.mxu0 %v1899
    %4822 = vmatmul.bf16.gmra.mxu0 %v4800
    %v4823 = vpop.f32.mrf.mxu0
    %v4824 = vadd.f32 %v4811, %v4823
    %v4825 = vpop.f32.mrf.mxu0
    %4826 = vdwg.mxu0
    %4827 = vmatpush.bf16.msra.mxu0 %v1896
    %4828 = vmatpush.bf16.msra.mxu0 %v1892
    %4829 = vmatpush.bf16.msra.mxu0 %v1888
    %4830 = vmatpush.bf16.msra.mxu0 %v1884
    %4831 = vmatpush.bf16.msra.mxu0 %v1880
    %4832 = vmatpush.bf16.msra.mxu0 %v1876
    %4833 = vmatpush.bf16.msra.mxu0 %v1872
    %4834 = vmatpush.bf16.msra.mxu0 %v1868
    %4835 = vmatmul.bf16.gmra.mxu0 %v4799
    %v4836 = vpop.f32.mrf.mxu0
    %v4837 = vadd.f32 %v481, %v4836
    %v4838 = vpop.f32.mrf.mxu0
    %4839 = vdwg.mxu0
    %4840 = vmatpush.bf16.msra.mxu0 %v1928
    %4841 = vmatpush.bf16.msra.mxu0 %v1924
    %4842 = vmatpush.bf16.msra.mxu0 %v1920
    %4843 = vmatpush.bf16.msra.mxu0 %v1916
    %4844 = vmatpush.bf16.msra.mxu0 %v1912
    %4845 = vmatpush.bf16.msra.mxu0 %v1908
    %4846 = vmatpush.bf16.msra.mxu0 %v1904
    %4847 = vmatpush.bf16.msra.mxu0 %v1900
    %4848 = vmatmul.bf16.gmra.mxu0 %v4800
    %v4849 = vpop.f32.mrf.mxu0
    %v4850 = vadd.f32 %v4837, %v4849
    %v4851 = vpop.f32.mrf.mxu0
    %4852 = vdwg.mxu0
    %4853 = vmatpush.bf16.msra.mxu0 %v1897
    %4854 = vmatpush.bf16.msra.mxu0 %v1893
    %4855 = vmatpush.bf16.msra.mxu0 %v1889
    %4856 = vmatpush.bf16.msra.mxu0 %v1885
    %4857 = vmatpush.bf16.msra.mxu0 %v1881
    %4858 = vmatpush.bf16.msra.mxu0 %v1877
    %4859 = vmatpush.bf16.msra.mxu0 %v1873
    %4860 = vmatpush.bf16.msra.mxu0 %v1869
    %4861 = vmatmul.bf16.gmra.mxu0 %v4799
    %v4862 = vpop.f32.mrf.mxu0
    %v4863 = vadd.f32 %v482, %v4862
    %v4864 = vpop.f32.mrf.mxu0
    %4865 = vdwg.mxu0
    %4866 = vmatpush.bf16.msra.mxu0 %v1929
    %4867 = vmatpush.bf16.msra.mxu0 %v1925
    %4868 = vmatpush.bf16.msra.mxu0 %v1921
    %4869 = vmatpush.bf16.msra.mxu0 %v1917
    %4870 = vmatpush.bf16.msra.mxu0 %v1913
    %4871 = vmatpush.bf16.msra.mxu0 %v1909
    %4872 = vmatpush.bf16.msra.mxu0 %v1905
    %4873 = vmatpush.bf16.msra.mxu0 %v1901
    %4874 = vmatmul.bf16.gmra.mxu0 %v4800
    %v4875 = vpop.f32.mrf.mxu0
    %v4876 = vadd.f32 %v4863, %v4875
    %v4877 = vpop.f32.mrf.mxu0
    %4878 = vdwg.mxu0
    %4879 = vmatpush.bf16.msra.mxu0 %v1898
    %4880 = vmatpush.bf16.msra.mxu0 %v1894
    %4881 = vmatpush.bf16.msra.mxu0 %v1890
    %4882 = vmatpush.bf16.msra.mxu0 %v1886
    %4883 = vmatpush.bf16.msra.mxu0 %v1882
    %4884 = vmatpush.bf16.msra.mxu0 %v1878
    %4885 = vmatpush.bf16.msra.mxu0 %v1874
    %4886 = vmatpush.bf16.msra.mxu0 %v1870
    %4887 = vmatmul.bf16.gmra.mxu0 %v4799
    %v4888 = vpop.f32.mrf.mxu0
    %v4889 = vadd.f32 %v483, %v4888
    %v4890 = vpop.f32.mrf.mxu0
    %4891 = vdwg.mxu0
    %4892 = vmatpush.bf16.msra.mxu0 %v1930
    %4893 = vmatpush.bf16.msra.mxu0 %v1926
    %4894 = vmatpush.bf16.msra.mxu0 %v1922
    %4895 = vmatpush.bf16.msra.mxu0 %v1918
    %4896 = vmatpush.bf16.msra.mxu0 %v1914
    %4897 = vmatpush.bf16.msra.mxu0 %v1910
    %4898 = vmatpush.bf16.msra.mxu0 %v1906
    %4899 = vmatpush.bf16.msra.mxu0 %v1902
    %4900 = vmatmul.bf16.gmra.mxu0 %v4800
    %v4901 = vpop.f32.mrf.mxu0
    %v4902 = vadd.f32 %v4889, %v4901
    %v4903 = vpop.f32.mrf.mxu0
    %4904 = vdwg.mxu0
    %v4905 = vxor.u32 %v4824, 2147483648
    %v4906 = vmul.f32 %v4905, 1.442695
    %v4907 = vpow.pop %v4906
    %v4908 = vadd.f32 %v4907, 1.0
    %v4909 = vrcp.pop %v4908
    %v4910 = vmul.f32 %v4908, %v4909
    %v4911 = vsub.f32 1.0, %v4910
    %v4912 = vmul.f32 %v4909, %v4911
    %v4913 = vadd.f32 %v4909, %v4912
    %vm4914 = vweird.f32 %v4908
    %vm4915 = vweird.f32 %v4909
    %vm4916 = vmor %vm4914, %vm4915
    %v4917 = vsel %vm4916, %v4909, %v4913
    %v4918 = vand.u32 2147483647, %v4908
    %vm4919 = vcmp.eq.f32.partialorder %v4918, 8.507059e+37
    %v4920 = vand.u32 %v4908, 2147483648
    %v4921 = vor.u32 1.1754944e-38, %v4920
    %v4922 = vsel %vm4919, %v4921, %v4917
    %v4923 = vmul.f32 1.0, %v4922
    %v4924 = vxor.u32 %v4850, 2147483648
    %v4925 = vmul.f32 %v4924, 1.442695
    %v4926 = vpow.pop %v4925
    %v4927 = vadd.f32 %v4926, 1.0
    %v4928 = vrcp.pop %v4927
    %v4929 = vmul.f32 %v4927, %v4928
    %v4930 = vsub.f32 1.0, %v4929
    %v4931 = vmul.f32 %v4928, %v4930
    %v4932 = vadd.f32 %v4928, %v4931
    %vm4933 = vweird.f32 %v4927
    %vm4934 = vweird.f32 %v4928
    %vm4935 = vmor %vm4933, %vm4934
    %v4936 = vsel %vm4935, %v4928, %v4932
    %v4937 = vand.u32 2147483647, %v4927
    %vm4938 = vcmp.eq.f32.partialorder %v4937, 8.507059e+37
    %v4939 = vand.u32 %v4927, 2147483648
    %v4940 = vor.u32 1.1754944e-38, %v4939
    %v4941 = vsel %vm4938, %v4940, %v4936
    %v4942 = vmul.f32 1.0, %v4941
    %v4943 = vtanh.pop %v4876
    %v4944 = vxor.u32 %v4902, 2147483648
    %v4945 = vmul.f32 %v4944, 1.442695
    %v4946 = vpow.pop %v4945
    %v4947 = vadd.f32 %v4946, 1.0
    %v4948 = vrcp.pop %v4947
    %v4949 = vmul.f32 %v4947, %v4948
    %v4950 = vsub.f32 1.0, %v4949
    %v4951 = vmul.f32 %v4948, %v4950
    %v4952 = vadd.f32 %v4948, %v4951
    %vm4953 = vweird.f32 %v4947
    %vm4954 = vweird.f32 %v4948
    %vm4955 = vmor %vm4953, %vm4954
    %v4956 = vsel %vm4955, %v4948, %v4952
    %v4957 = vand.u32 2147483647, %v4947
    %vm4958 = vcmp.eq.f32.partialorder %v4957, 8.507059e+37
    %v4959 = vand.u32 %v4947, 2147483648
    %v4960 = vor.u32 1.1754944e-38, %v4959
    %v4961 = vsel %vm4958, %v4960, %v4956
    %v4962 = vmul.f32 1.0, %v4961
    %v4963 = vmul.f32 %v4942, %v4796
    %v4964 = vmul.f32 %v4923, %v4943
    %v4965 = vadd.f32 %v4963, %v4964
    %v4966 = vtanh.pop %v4965
    %v4967 = vmul.f32 %v4962, %v4966
    %v4968 = vld [vmem:[%s8] sm:$0xff]
    %v4969 = vld [vmem:[%s8 + $0x8] sm:$0xff]
    %v4970 = vld [vmem:[%s8 + $0x10] sm:$0xff]
    %v4971 = vld [vmem:[%s8 + $0x18] sm:$0xff]
    %v4972 = vld [vmem:[%s8 + $0x20] sm:$0xff]
    %v4973 = vld [vmem:[%s8 + $0x28] sm:$0xff]
    %v4974 = vld [vmem:[%s8 + $0x30] sm:$0xff]
    %v4975 = vld [vmem:[%s8 + $0x38] sm:$0xff]
    %v4976 = vld [vmem:[%s8 + $0x40] sm:$0xff]
    %v4977 = vld [vmem:[%s8 + $0x48] sm:$0xff]
    %v4978 = vld [vmem:[%s8 + $0x50] sm:$0xff]
    %v4979 = vld [vmem:[%s8 + $0x58] sm:$0xff]
    %v4980 = vld [vmem:[%s8 + $0x60] sm:$0xff]
    %v4981 = vld [vmem:[%s8 + $0x68] sm:$0xff]
    %v4982 = vld [vmem:[%s8 + $0x70] sm:$0xff]
    %v4983 = vld [vmem:[%s8 + $0x78] sm:$0xff]
    %v4984 = vld [vmem:[#allocation3] sm:$0x1]
    %v4986 = vperm.slane %v4984, 0
    %4988 = vmatpush.msra.mxu0 %v4983
    %4989 = vmatpush.msra.mxu0 %v4982
    %4990 = vmatpush.msra.mxu0 %v4981
    %4991 = vmatpush.msra.mxu0 %v4980
    %4992 = vmatpush.msra.mxu0 %v4979
    %4993 = vmatpush.msra.mxu0 %v4978
    %4994 = vmatpush.msra.mxu0 %v4977
    %4995 = vmatpush.msra.mxu0 %v4976
    %4996 = vmatpush.msra.mxu0 %v4975
    %4997 = vmatpush.msra.mxu0 %v4974
    %4998 = vmatpush.msra.mxu0 %v4973
    %4999 = vmatpush.msra.mxu0 %v4972
    %5000 = vmatpush.msra.mxu0 %v4971
    %5001 = vmatpush.msra.mxu0 %v4970
    %5002 = vmatpush.msra.mxu0 %v4969
    %5003 = vmatpush.msra.mxu0 %v4968
    %5004 = vmatmul.f32.gmra.mxu0 %v4967
    %v5005 = vpop.f32.mrf.mxu0
    %v5006 = vadd.f32 %v4986, %v5005
    %5007 = vdwg.mxu0
    %vm5008 = vcmask 7168
    %5009 = vst.msk [vmem:[%s10] sm:$0xff] %vm5008, %v5006
    // Predicated region
    $region54: #{lstm_model_forward.1} parent=1 // pred_check
      _
    $region55: #{lstm_model_forward.1} parent=1 // pred_check_branch
      %5011 = sbr.rel (0) target = $region57
    $region56: #{lstm_model_forward.1} parent=1 // pred_region
      _
    $region57: #{lstm_model_forward.1} parent=1 // pred_fallthru
      _
    // Predicated region
    $region58: #{lstm_model_forward.1} parent=1 // pred_check
      _
    $region59: #{lstm_model_forward.1} parent=1 // pred_check_branch
      %5013 = sbr.rel (0) target = $region61
    $region60: #{lstm_model_forward.1} parent=1 // pred_region
      _
    $region61: #{lstm_model_forward.1} parent=1 // pred_fallthru
      _
    %5014 = vsyncpa [#allocation5], 1
    %5015 = vsyncpa [#allocation7], 1

</llo_original>
